<compile_context>
chip_gen: v7x
topology: tpu7x:2x2x1
jax: 0.10.0
libtpu: 0.0.40
codegen_flags: <defaults>
</compile_context>

<pallas_src>
import functools

import jax
import jax.numpy as jnp
from jax.experimental import pallas as pl
from jax.experimental.pallas import tpu as pltpu

_LANE = 128          # lane width: pad feature dims to multiples of this
_N_ALIGN = 256       # pad node count to a multiple of this (tile granularity)


def _round_up(v, m):
    return ((v + m - 1) // m) * m


def _pad2d(a, rows, cols):
    return jnp.pad(a, ((0, rows - a.shape[0]), (0, cols - a.shape[1])))


@functools.lru_cache(maxsize=None)
def _vmem_limit_bytes():
    """~3/4 of the chip's VMEM: ~96 MiB on v5e/v6e (128 MiB), 48 MiB on v7x."""
    try:
        cap = int(pltpu.get_tpu_info().vmem_capacity_bytes)
    except Exception:
        cap = 64 * 1024 * 1024          # conservative (v7x-sized) fallback
    return min((cap * 3) // 4, 100 * 1024 * 1024)


def _plan_tiles(n_pad):
    """Row / reduction tile sizes.

    Row tile tm: as large as possible (amortizes the ~0.35us per-grid-step
    overhead and halves x_neigh re-streaming each doubling) but halved until
    there are >= 2 row tiles so the "parallel" axis shards across v7x's two
    TensorCores (v5e/v6e are single-TC, so this is harmless there).
    Reduction tile tk: large K chunks -> big, efficient DMAs for the int8 A.
    """
    tm = 512
    while tm > 128 and (n_pad % tm != 0 or n_pad // tm < 2):
        tm //= 2
    tm = min(tm, n_pad)
    tk = 1024
    while tk > 128 and n_pad % tk != 0:
        tk //= 2
    tk = min(tk, n_pad)
    return tm, tk


# ----------------------------------------------------------------------------
# Pallas kernels
# ----------------------------------------------------------------------------
def _sage_layer_kernel(*refs, apply_relu, pre_projected):
    """One SAGEConv layer, tiled over (row tiles, K reduction tiles).

    pre_projected=False: refs = (A, Xn, Xr, inv_deg, Wl, Wr, b, out, acc, root)
        acc accumulates A_mask @ X (in F_in space); Wl applied at finalize.
    pre_projected=True : refs = (A, Xn, Xr, inv_deg, Wr, b, out, acc, root)
        Xn is already X @ Wl; acc accumulates directly in F_out space.
    """
    if pre_projected:
        (a_ref, xn_ref, xr_ref, inv_deg_ref, wr_ref, b_ref,
         o_ref, acc_ref, root_ref) = refs
        wl_ref = None
    else:
        (a_ref, xn_ref, xr_ref, inv_deg_ref, wl_ref, wr_ref, b_ref,
         o_ref, acc_ref, root_ref) = refs

    k = pl.program_id(1)

    @pl.when(k == 0)
    def _():
        acc_ref[...] = jnp.zeros_like(acc_ref)
        # Root branch hoisted out of the finalize epilogue so it overlaps with
        # the K-loop DMAs / MXU work (its operands are K-invariant).
        root_ref[...] = b_ref[...] + jnp.dot(
            xr_ref[...], wr_ref[...], preferred_element_type=jnp.float32)

    # Neighbor-count partial sum: int8 mask -> bf16 cast on the VPU (free
    # filler while HBM-bound), MXU dot, f32 accumulate.  The 1/deg mean scale
    # is deferred to the finalize (pure f32 row scale of A_mask @ X).
    acc_ref[...] += jnp.dot(a_ref[...].astype(jnp.bfloat16), xn_ref[...],
                            preferred_element_type=jnp.float32)

    @pl.when(k == pl.num_programs(1) - 1)
    def _():
        neigh = acc_ref[...] * inv_deg_ref[...]          # exact f32 mean scale
        if not pre_projected:
            neigh = jnp.dot(neigh.astype(jnp.bfloat16), wl_ref[...],
                            preferred_element_type=jnp.float32)
        out = neigh + root_ref[...]
        # F.normalize(out, p=2, dim=-1): rsqrt goes to the EUP slot instead of
        # occupying VALU with a divide.  Equivalent to out / max(||out||, 1e-12).
        sq = jnp.sum(out * out, axis=-1, keepdims=True)
        out = out * jax.lax.rsqrt(jnp.maximum(sq, 1e-24))
        if apply_relu:
            out = jnp.maximum(out, 0.0)
        o_ref[...] = out.astype(o_ref.dtype)


def _project_kernel(x_ref, w_ref, o_ref):
    # Row-tiled X @ W (used for the A @ (X @ Wl) reordering when F_in >= F_out).
    o_ref[...] = jnp.dot(x_ref[...], w_ref[...],
                         preferred_element_type=jnp.float32).astype(o_ref.dtype)


# ----------------------------------------------------------------------------
# Pallas wrappers
# ----------------------------------------------------------------------------
def project_features(x, w, *, tm):
    """x: (N_pad, F_in_pad) bf16, w: (F_in_pad, F_out_pad) bf16 -> bf16."""
    n_pad, f_in_pad = x.shape
    f_out_pad = w.shape[1]
    return pl.pallas_call(
        _project_kernel,
        out_shape=jax.ShapeDtypeStruct((n_pad, f_out_pad), jnp.bfloat16),
        grid=(n_pad // tm,),
        in_specs=[
            pl.BlockSpec((tm, f_in_pad), lambda i: (i, 0)),
            pl.BlockSpec((f_in_pad, f_out_pad), lambda i: (0, 0)),
        ],
        out_specs=pl.BlockSpec((tm, f_out_pad), lambda i: (i, 0)),
        compiler_params=pltpu.CompilerParams(
            dimension_semantics=("parallel",),
            vmem_limit_bytes=_vmem_limit_bytes(),
        ),
    )(x, w)


def sage_conv_layer(adj_mask, inv_deg, x_neigh, x_root, w_l, w_r, b, *,
                    apply_relu, pre_projected, out_dtype, tm, tk):
    """One SAGEConv(normalize=True, aggr='mean') layer, tiled.

    adj_mask : (N_pad, N_pad) int8  edge-count mask (A[i, j] = #edges j -> i)
    inv_deg  : (N_pad, 1)     f32   1 / max(in-degree, 1)
    x_neigh  : (N_pad, F)     bf16  neighbor-branch input (X, or X @ Wl)
    x_root   : (N_pad, F_in)  bf16  root-branch input X
    w_l      : (F_in, F_out)  bf16  (only when not pre_projected)
    w_r      : (F_in, F_out)  bf16
    b        : (1, F_out)     f32
    """
    n_pad = adj_mask.shape[0]
    f_neigh = x_neigh.shape[1]
    f_root = x_root.shape[1]
    f_out_pad = w_r.shape[1]

    kernel = functools.partial(_sage_layer_kernel,
                               apply_relu=apply_relu,
                               pre_projected=pre_projected)

    in_specs = [
        pl.BlockSpec((tm, tk), lambda i, k: (i, k)),            # A mask (int8)
        pl.BlockSpec((tk, f_neigh), lambda i, k: (k, 0)),       # neighbor feats
        pl.BlockSpec((tm, f_root), lambda i, k: (i, 0)),        # root feats (K-invariant)
        pl.BlockSpec((tm, 1), lambda i, k: (i, 0)),             # 1/deg (K-invariant)
    ]
    args = [adj_mask, x_neigh, x_root, inv_deg]
    if not pre_projected:
        in_specs.append(pl.BlockSpec((f_root, f_out_pad), lambda i, k: (0, 0)))  # W_l
        args.append(w_l)
    in_specs.append(pl.BlockSpec((f_root, f_out_pad), lambda i, k: (0, 0)))      # W_r
    in_specs.append(pl.BlockSpec((1, f_out_pad), lambda i, k: (0, 0)))           # bias
    args += [w_r, b]

    acc_cols = f_out_pad if pre_projected else f_neigh

    return pl.pallas_call(
        kernel,
        out_shape=jax.ShapeDtypeStruct((n_pad, f_out_pad), out_dtype),
        grid_spec=pltpu.PrefetchScalarGridSpec(
            num_scalar_prefetch=0,
            grid=(n_pad // tm, n_pad // tk),
            in_specs=in_specs,
            out_specs=pl.BlockSpec((tm, f_out_pad), lambda i, k: (i, 0)),
            scratch_shapes=[
                pltpu.VMEM((tm, acc_cols), jnp.float32),   # A_mask @ X accumulator
                pltpu.VMEM((tm, f_out_pad), jnp.float32),  # hoisted root branch
            ]),
        compiler_params=pltpu.CompilerParams(
            dimension_semantics=("parallel", "arbitrary"),
            vmem_limit_bytes=_vmem_limit_bytes(),
        ),
    )(*args)


# ----------------------------------------------------------------------------
# Graph preprocessing (built ONCE per graph, outside the per-call path)
# ----------------------------------------------------------------------------
def build_mean_aggregation(edge_index, padded_nodes):
    """Compact mean-aggregation operator: int8 edge-count mask + f32 1/deg.

    A[i, j] = #edges j -> i (PyG src->dst convention).  The 1/deg mean scale
    is kept separately in f32 and applied inside the kernel at finalize, so
    the mean weights are never rounded to bf16.
    """
    src = edge_index[0]
    dst = edge_index[1]
    counts = jnp.zeros((padded_nodes, padded_nodes), jnp.int32)
    counts = counts.at[dst, src].add(1)
    # TODO(synk): clip at 127 for the int8 mask; switch to int16 if a node
    #             pair can have >127 parallel edges.
    mask = jnp.clip(counts, 0, 127).astype(jnp.int8)
    deg = jnp.sum(counts, axis=1, keepdims=True).astype(jnp.float32)
    inv_deg = 1.0 / jnp.maximum(deg, 1.0)
    return mask, inv_deg


# ----------------------------------------------------------------------------
# GNNEncoder: parameters + forward
# ----------------------------------------------------------------------------
def init_gnn_encoder_params(key, in_features, neurons, layers):
    """Deterministic Glorot-uniform init matching PyG Linear shapes."""
    params = []
    f_in = in_features
    for _ in range(layers):
        key, k_l, k_r = jax.random.split(key, 3)
        limit = jnp.sqrt(6.0 / (f_in + neurons))
        w_l = jax.random.uniform(k_l, (f_in, neurons), jnp.float32, -limit, limit)
        w_r = jax.random.uniform(k_r, (f_in, neurons), jnp.float32, -limit, limit)
        b = jnp.zeros((1, neurons), jnp.float32)      # lin_l bias; lin_r has none
        params.append((w_l, w_r, b))
        f_in = neurons
    return params


def gnn_encoder_forward(params, x, adj_mask, inv_deg):
    """Forward pass.  adj_mask / inv_deg come from build_mean_aggregation."""
    n, f_in = x.shape
    n_pad = adj_mask.shape[0]
    tm, tk = _plan_tiles(n_pad)

    f_in_pad = _round_up(f_in, _LANE)
    h = _pad2d(x, n_pad, f_in_pad).astype(jnp.bfloat16)

    num_layers = len(params)
    for i, (w_l, w_r, b) in enumerate(params):
        fi, fo = w_l.shape
        fi_pad = _round_up(fi, _LANE)
        fo_pad = _round_up(fo, _LANE)
        assert fi_pad == h.shape[1]

        wl = _pad2d(w_l, fi_pad, fo_pad).astype(jnp.bfloat16)
        wr = _pad2d(w_r, fi_pad, fo_pad).astype(jnp.bfloat16)
        bp = _pad2d(b, 1, fo_pad).astype(jnp.float32)

        is_last = i == num_layers - 1
        # A @ (X @ Wl) instead of (A @ X) @ Wl whenever it does not add FLOPs
        # (fi_pad >= fo_pad): the accumulator shrinks (or stays equal), the
        # finalize loses its matmul, and the root branch hides under the K loop.
        pre_projected = fi_pad >= fo_pad
        x_neigh = project_features(h, wl, tm=tm) if pre_projected else h

        h = sage_conv_layer(
            adj_mask, inv_deg, x_neigh, h, wl, wr, bp,
            apply_relu=not is_last,
            pre_projected=pre_projected,
            out_dtype=jnp.float32 if is_last else jnp.bfloat16,
            tm=tm, tk=tk,
        )

    f_out = params[-1][0].shape[1]
    return h[:n, :f_out]


# ----------------------------------------------------------------------------
# References (plain jnp) for sanity checking
# ----------------------------------------------------------------------------
def gnn_encoder_reference_f32(params, x, edge_index):
    """Original-module semantics in pure f32."""
    n = x.shape[0]
    adj = jnp.zeros((n, n), jnp.float32).at[edge_index[1], edge_index[0]].add(1.0)
    adj = adj / jnp.clip(jnp.sum(adj, axis=1, keepdims=True), 1.0, None)
    num_layers = len(params)
    h = x
    for i, (w_l, w_r, b) in enumerate(params):
        out = (adj @ h) @ w_l + b + h @ w_r
        norm = jnp.sqrt(jnp.sum(out * out, axis=-1, keepdims=True))
        out = out / jnp.maximum(norm, 1e-12)
        if i != num_layers - 1:
            out = jnp.maximum(out, 0.0)
        h = out
    return h


def gnn_encoder_reference_matched(params, x, edge_index):
    """Same math, mirroring the kernel's bf16 rounding points and reordering."""
    n = x.shape[0]
    counts = jnp.zeros((n, n), jnp.float32).at[edge_index[1], edge_index[0]].add(1.0)
    inv_deg = 1.0 / jnp.maximum(jnp.sum(counts, axis=1, keepdims=True), 1.0)
    a = counts.astype(jnp.bfloat16)        # small integer counts: exact in bf16
    dot = lambda p, q: jnp.dot(p, q, preferred_element_type=jnp.float32)
    num_layers = len(params)
    h = x.astype(jnp.bfloat16)
    for i, (w_l, w_r, b) in enumerate(params):
        fi, fo = w_l.shape
        wl = w_l.astype(jnp.bfloat16)
        wr = w_r.astype(jnp.bfloat16)
        root = b + dot(h, wr)
        if _round_up(fi, _LANE) >= _round_up(fo, _LANE):
            xn = dot(h, wl).astype(jnp.bfloat16)
            neigh = dot(a, xn) * inv_deg
        else:
            neigh = (dot(a, h) * inv_deg).astype(jnp.bfloat16)
            neigh = dot(neigh, wl)
        out = neigh + root
        sq = jnp.sum(out * out, axis=-1, keepdims=True)
        out = out * jax.lax.rsqrt(jnp.maximum(sq, 1e-24))
        is_last = i == num_layers - 1
        if not is_last:
            out = jnp.maximum(out, 0.0)
        h = out if is_last else out.astype(jnp.bfloat16)
    return h


if __name__ == "__main__":
    key = jax.random.PRNGKey(0)

    configs = [
        # pre-projected path in every layer (fi_pad >= fo_pad): A @ (X @ Wl)
        dict(num_nodes=16, in_features=8, neurons=32, layers=2, num_edges=48),
        # first layer takes the (A @ X) @ Wl path (fi_pad < fo_pad), second
        # layer is pre-projected
        dict(num_nodes=24, in_features=8, neurons=200, layers=2, num_edges=64),
    ]

    forward = jax.jit(gnn_encoder_forward)

    for cfg in configs:
        key, k_x, k_e, k_p = jax.random.split(key, 4)
        x = jax.random.normal(k_x, (cfg["num_nodes"], cfg["in_features"]), jnp.float32)
        edge_index = jax.random.randint(
            k_e, (2, cfg["num_edges"]), 0, cfg["num_nodes"], jnp.int32)
        params = init_gnn_encoder_params(
            k_p, cfg["in_features"], cfg["neurons"], cfg["layers"])

        # Graph operator built once per graph (edge_index is typically static),
        # outside the per-call forward path.
        n_pad = _round_up(cfg["num_nodes"], _N_ALIGN)
        adj_mask, inv_deg = build_mean_aggregation(edge_index, n_pad)

        out = jax.block_until_ready(forward(params, x, adj_mask, inv_deg))
        assert out.shape == (cfg["num_nodes"], cfg["neurons"])
        assert out.dtype == jnp.float32

        # Tight check vs a precision-matched jnp reference (same bf16 casts).
        ref_m = gnn_encoder_reference_matched(params, x, edge_index)
        assert jnp.allclose(out, ref_m, atol=1e-3, rtol=1e-3), \
            "mismatch vs precision-matched reference"

        # Loose check vs the original full-f32 semantics (bf16 tolerance).
        ref_f = gnn_encoder_reference_f32(params, x, edge_index)
        assert jnp.allclose(out, ref_f, atol=5e-2, rtol=5e-2), \
            "mismatch vs f32 reference"

    print("KERNEL_OK")
</pallas_src>

<mosaic_0001>
module attributes {stable_mosaic.version = 11 : i64} {
  func.func @_project_kernel(%arg0: i32, %arg1: memref<128x128xbf16, #tpu.memory_space<vmem>>, %arg2: memref<128x128xbf16, #tpu.memory_space<vmem>>, %arg3: memref<128x128xbf16, #tpu.memory_space<vmem>>) attributes {dimension_semantics = [#tpu.dimension_semantics<parallel>], iteration_bounds = array<i64: 2>, scalar_prefetch = 0 : i64, scratch_operands = 0 : i64, tpu.core_type = #tpu.core_type<tc>, window_params = [{transform_indices = @transform_0, window_bounds = array<i64: 128, 128>}, {pipeline_mode = #tpu.pipeline_mode<synchronous>, transform_indices = @transform_1, window_bounds = array<i64: 128, 128>}, {transform_indices = @transform_2, window_bounds = array<i64: 128, 128>}]} {
    %c0 = arith.constant 0 : index
    %c0_0 = arith.constant 0 : index
    %0 = vector.load %arg1[%c0, %c0_0] : memref<128x128xbf16, #tpu.memory_space<vmem>>, vector<128x128xbf16>
    %c0_1 = arith.constant 0 : index
    %c0_2 = arith.constant 0 : index
    %1 = vector.load %arg2[%c0_1, %c0_2] : memref<128x128xbf16, #tpu.memory_space<vmem>>, vector<128x128xbf16>
    %cst = arith.constant dense<0.000000e+00> : vector<128x128xf32>
    %2 = tpu.matmul %0, %1, %cst {dimension_numbers = #tpu.dot_dimension_numbers<[1], [0], [0], [1], [0, 0, 1, 1], [], []>} : vector<128x128xbf16>, vector<128x128xbf16>, vector<128x128xf32> -> vector<128x128xf32>
    %3 = arith.truncf %2 : vector<128x128xf32> to vector<128x128xbf16>
    %c0_3 = arith.constant 0 : index
    %c0_4 = arith.constant 0 : index
    %4 = vector.load %arg3[%c0_3, %c0_4] : memref<128x128xbf16, #tpu.memory_space<vmem>>, vector<128x128xbf16>
    tpu.vector_store %arg3[%c0_3, %c0_4], %3 {strides = array<i32>} : memref<128x128xbf16, #tpu.memory_space<vmem>>, vector<128x128xbf16>,
    return
  }
  func.func @transform_0(%arg0: i32) -> (i32, i32) {
    %c0_i32 = arith.constant 0 : i32
    %c0_i32_0 = arith.constant 0 : i32
    return %arg0, %c0_i32 : i32, i32
  }
  func.func @transform_1(%arg0: i32) -> (i32, i32) {
    %c0_i32 = arith.constant 0 : i32
    %c0_i32_0 = arith.constant 0 : i32
    %c0_i32_1 = arith.constant 0 : i32
    return %c0_i32, %c0_i32_0 : i32, i32
  }
  func.func @transform_2(%arg0: i32) -> (i32, i32) {
    %c0_i32 = arith.constant 0 : i32
    %c0_i32_0 = arith.constant 0 : i32
    return %arg0, %c0_i32 : i32, i32
  }
}

module attributes {stable_mosaic.version = 11 : i64} {
  func.func @_sage_layer_kernel(%arg0: i32, %arg1: i32, %arg2: memref<128x256xi8, #tpu.memory_space<vmem>>, %arg3: memref<256x128xbf16, #tpu.memory_space<vmem>>, %arg4: memref<128x128xbf16, #tpu.memory_space<vmem>>, %arg5: memref<128x1xf32, #tpu.memory_space<vmem>>, %arg6: memref<128x128xbf16, #tpu.memory_space<vmem>>, %arg7: memref<1x128xf32, #tpu.memory_space<vmem>>, %arg8: memref<128x128xbf16, #tpu.memory_space<vmem>>, %arg9: memref<128x128xf32, #tpu.memory_space<vmem>>, %arg10: memref<128x128xf32, #tpu.memory_space<vmem>>) attributes {dimension_semantics = [#tpu.dimension_semantics<parallel>, #tpu.dimension_semantics<arbitrary>], iteration_bounds = array<i64: 2, 1>, scalar_prefetch = 0 : i64, scratch_operands = 2 : i64, tpu.core_type = #tpu.core_type<tc>, window_params = [{transform_indices = @transform_0, window_bounds = array<i64: 128, 256>}, {transform_indices = @transform_1, window_bounds = array<i64: 256, 128>}, {transform_indices = @transform_2, window_bounds = array<i64: 128, 128>}, {transform_indices = @transform_3, window_bounds = array<i64: 128, 1>}, {pipeline_mode = #tpu.pipeline_mode<synchronous>, transform_indices = @transform_4, window_bounds = array<i64: 128, 128>}, {pipeline_mode = #tpu.pipeline_mode<synchronous>, transform_indices = @transform_5, window_bounds = array<i64: 1, 128>}, {transform_indices = @transform_6, window_bounds = array<i64: 128, 128>}]} {
    %c0_i32 = arith.constant 0 : i32
    %0 = arith.cmpi eq, %arg1, %c0_i32 : i32
    %1 = arith.extui %0 : i1 to i32
    %c0_i32_0 = arith.constant 0 : i32
    %2 = arith.cmpi ne, %1, %c0_i32_0 : i32
    scf.if %2 {
      %cst_10 = arith.constant 0.000000e+00 : f32
      %13 = vector.broadcast %cst_10 : f32 to vector<128x128xf32>
      %c0_11 = arith.constant 0 : index
      %c0_12 = arith.constant 0 : index
      %14 = vector.load %arg9[%c0_11, %c0_12] : memref<128x128xf32, #tpu.memory_space<vmem>>, vector<128x128xf32>
      tpu.vector_store %arg9[%c0_11, %c0_12], %13 {strides = array<i32>} : memref<128x128xf32, #tpu.memory_space<vmem>>, vector<128x128xf32>,
      %c0_13 = arith.constant 0 : index
      %c0_14 = arith.constant 0 : index
      %15 = vector.load %arg7[%c0_13, %c0_14] : memref<1x128xf32, #tpu.memory_space<vmem>>, vector<1x128xf32>
      %c0_15 = arith.constant 0 : index
      %c0_16 = arith.constant 0 : index
      %16 = vector.load %arg4[%c0_15, %c0_16] : memref<128x128xbf16, #tpu.memory_space<vmem>>, vector<128x128xbf16>
      %c0_17 = arith.constant 0 : index
      %c0_18 = arith.constant 0 : index
      %17 = vector.load %arg6[%c0_17, %c0_18] : memref<128x128xbf16, #tpu.memory_space<vmem>>, vector<128x128xbf16>
      %cst_19 = arith.constant dense<0.000000e+00> : vector<128x128xf32>
      %18 = tpu.matmul %16, %17, %cst_19 {dimension_numbers = #tpu.dot_dimension_numbers<[1], [0], [0], [1], [0, 0, 1, 1], [], []>} : vector<128x128xbf16>, vector<128x128xbf16>, vector<128x128xf32> -> vector<128x128xf32>
      %19 = vector.broadcast %15 : vector<1x128xf32> to vector<128x128xf32>
      %20 = arith.addf %19, %18 : vector<128x128xf32>
      %c0_20 = arith.constant 0 : index
      %c0_21 = arith.constant 0 : index
      %21 = vector.load %arg10[%c0_20, %c0_21] : memref<128x128xf32, #tpu.memory_space<vmem>>, vector<128x128xf32>
      tpu.vector_store %arg10[%c0_20, %c0_21], %20 {strides = array<i32>} : memref<128x128xf32, #tpu.memory_space<vmem>>, vector<128x128xf32>,
    } else {
    }
    %c0 = arith.constant 0 : index
    %c0_1 = arith.constant 0 : index
    %3 = vector.load %arg9[%c0, %c0_1] : memref<128x128xf32, #tpu.memory_space<vmem>>, vector<128x128xf32>
    %c0_2 = arith.constant 0 : index
    %c0_3 = arith.constant 0 : index
    %4 = vector.load %arg2[%c0_2, %c0_3] : memref<128x256xi8, #tpu.memory_space<vmem>>, vector<128x256xi8>
    %5 = arith.sitofp %4 : vector<128x256xi8> to vector<128x256xbf16>
    %c0_4 = arith.constant 0 : index
    %c0_5 = arith.constant 0 : index
    %6 = vector.load %arg3[%c0_4, %c0_5] : memref<256x128xbf16, #tpu.memory_space<vmem>>, vector<256x128xbf16>
    %cst = arith.constant dense<0.000000e+00> : vector<128x128xf32>
    %7 = tpu.matmul %5, %6, %cst {dimension_numbers = #tpu.dot_dimension_numbers<[1], [0], [0], [1], [0, 0, 1, 1], [], []>} : vector<128x256xbf16>, vector<256x128xbf16>, vector<128x128xf32> -> vector<128x128xf32>
    %8 = arith.addf %3, %7 : vector<128x128xf32>
    %c0_6 = arith.constant 0 : index
    %c0_7 = arith.constant 0 : index
    %9 = vector.load %arg9[%c0_6, %c0_7] : memref<128x128xf32, #tpu.memory_space<vmem>>, vector<128x128xf32>
    tpu.vector_store %arg9[%c0_6, %c0_7], %8 {strides = array<i32>} : memref<128x128xf32, #tpu.memory_space<vmem>>, vector<128x128xf32>,
    %c0_i32_8 = arith.constant 0 : i32
    %10 = arith.cmpi eq, %arg1, %c0_i32_8 : i32
    %11 = arith.extui %10 : i1 to i32
    %c0_i32_9 = arith.constant 0 : i32
    %12 = arith.cmpi ne, %11, %c0_i32_9 : i32
    scf.if %12 {
      %c0_10 = arith.constant 0 : index
      %c0_11 = arith.constant 0 : index
      %13 = vector.load %arg9[%c0_10, %c0_11] : memref<128x128xf32, #tpu.memory_space<vmem>>, vector<128x128xf32>
      %c0_12 = arith.constant 0 : index
      %c0_13 = arith.constant 0 : index
      %14 = vector.load %arg5[%c0_12, %c0_13] : memref<128x1xf32, #tpu.memory_space<vmem>>, vector<128x1xf32>
      %15 = vector.broadcast %14 : vector<128x1xf32> to vector<128x128xf32>
      %16 = arith.mulf %13, %15 : vector<128x128xf32>
      %c0_14 = arith.constant 0 : index
      %c0_15 = arith.constant 0 : index
      %17 = vector.load %arg10[%c0_14, %c0_15] : memref<128x128xf32, #tpu.memory_space<vmem>>, vector<128x128xf32>
      %18 = arith.addf %16, %17 : vector<128x128xf32>
      %19 = arith.mulf %18, %18 : vector<128x128xf32>
      %cst_16 = arith.constant dense<0.000000e+00> : vector<128xf32>
      %20 = vector.multi_reduction <add>, %19, %cst_16 [1] : vector<128x128xf32> to vector<128xf32>
      %21 = vector.shape_cast %20 : vector<128xf32> to vector<128x1xf32>
      %cst_17 = arith.constant 1.000000e-24 : f32
      %22 = vector.broadcast %cst_17 : f32 to vector<128x1xf32>
      %23 = arith.maximumf %21, %22 : vector<128x1xf32>
      %24 = math.rsqrt %23 : vector<128x1xf32>
      %25 = vector.broadcast %24 : vector<128x1xf32> to vector<128x128xf32>
      %26 = arith.mulf %18, %25 : vector<128x128xf32>
      %cst_18 = arith.constant 0.000000e+00 : f32
      %27 = vector.broadcast %cst_18 : f32 to vector<128x128xf32>
      %28 = arith.maximumf %26, %27 : vector<128x128xf32>
      %29 = arith.truncf %28 : vector<128x128xf32> to vector<128x128xbf16>
      %c0_19 = arith.constant 0 : index
      %c0_20 = arith.constant 0 : index
      %30 = vector.load %arg8[%c0_19, %c0_20] : memref<128x128xbf16, #tpu.memory_space<vmem>>, vector<128x128xbf16>
      tpu.vector_store %arg8[%c0_19, %c0_20], %29 {strides = array<i32>} : memref<128x128xbf16, #tpu.memory_space<vmem>>, vector<128x128xbf16>,
    } else {
    }
    return
  }
  func.func @transform_0(%arg0: i32, %arg1: i32) -> (i32, i32) {
    %c0_i32 = arith.constant 0 : i32
    return %arg0, %arg1 : i32, i32
  }
  func.func @transform_1(%arg0: i32, %arg1: i32) -> (i32, i32) {
    %c0_i32 = arith.constant 0 : i32
    %c0_i32_0 = arith.constant 0 : i32
    return %arg1, %c0_i32 : i32, i32
  }
  func.func @transform_2(%arg0: i32, %arg1: i32) -> (i32, i32) {
    %c0_i32 = arith.constant 0 : i32
    %c0_i32_0 = arith.constant 0 : i32
    return %arg0, %c0_i32 : i32, i32
  }
  func.func @transform_3(%arg0: i32, %arg1: i32) -> (i32, i32) {
    %c0_i32 = arith.constant 0 : i32
    %c0_i32_0 = arith.constant 0 : i32
    return %arg0, %c0_i32 : i32, i32
  }
  func.func @transform_4(%arg0: i32, %arg1: i32) -> (i32, i32) {
    %c0_i32 = arith.constant 0 : i32
    %c0_i32_0 = arith.constant 0 : i32
    %c0_i32_1 = arith.constant 0 : i32
    return %c0_i32, %c0_i32_0 : i32, i32
  }
  func.func @transform_5(%arg0: i32, %arg1: i32) -> (i32, i32) {
    %c0_i32 = arith.constant 0 : i32
    %c0_i32_0 = arith.constant 0 : i32
    %c0_i32_1 = arith.constant 0 : i32
    return %c0_i32, %c0_i32_0 : i32, i32
  }
  func.func @transform_6(%arg0: i32, %arg1: i32) -> (i32, i32) {
    %c0_i32 = arith.constant 0 : i32
    %c0_i32_0 = arith.constant 0 : i32
    return %arg0, %c0_i32 : i32, i32
  }
}

module attributes {stable_mosaic.version = 11 : i64} {
  func.func @_sage_layer_kernel(%arg0: i32, %arg1: i32, %arg2: memref<128x256xi8, #tpu.memory_space<vmem>>, %arg3: memref<256x128xbf16, #tpu.memory_space<vmem>>, %arg4: memref<128x128xbf16, #tpu.memory_space<vmem>>, %arg5: memref<128x1xf32, #tpu.memory_space<vmem>>, %arg6: memref<128x128xbf16, #tpu.memory_space<vmem>>, %arg7: memref<1x128xf32, #tpu.memory_space<vmem>>, %arg8: memref<128x128xf32, #tpu.memory_space<vmem>>, %arg9: memref<128x128xf32, #tpu.memory_space<vmem>>, %arg10: memref<128x128xf32, #tpu.memory_space<vmem>>) attributes {dimension_semantics = [#tpu.dimension_semantics<parallel>, #tpu.dimension_semantics<arbitrary>], iteration_bounds = array<i64: 2, 1>, scalar_prefetch = 0 : i64, scratch_operands = 2 : i64, tpu.core_type = #tpu.core_type<tc>, window_params = [{transform_indices = @transform_0, window_bounds = array<i64: 128, 256>}, {transform_indices = @transform_1, window_bounds = array<i64: 256, 128>}, {transform_indices = @transform_2, window_bounds = array<i64: 128, 128>}, {transform_indices = @transform_3, window_bounds = array<i64: 128, 1>}, {pipeline_mode = #tpu.pipeline_mode<synchronous>, transform_indices = @transform_4, window_bounds = array<i64: 128, 128>}, {pipeline_mode = #tpu.pipeline_mode<synchronous>, transform_indices = @transform_5, window_bounds = array<i64: 1, 128>}, {transform_indices = @transform_6, window_bounds = array<i64: 128, 128>}]} {
    %c0_i32 = arith.constant 0 : i32
    %0 = arith.cmpi eq, %arg1, %c0_i32 : i32
    %1 = arith.extui %0 : i1 to i32
    %c0_i32_0 = arith.constant 0 : i32
    %2 = arith.cmpi ne, %1, %c0_i32_0 : i32
    scf.if %2 {
      %cst_10 = arith.constant 0.000000e+00 : f32
      %13 = vector.broadcast %cst_10 : f32 to vector<128x128xf32>
      %c0_11 = arith.constant 0 : index
      %c0_12 = arith.constant 0 : index
      %14 = vector.load %arg9[%c0_11, %c0_12] : memref<128x128xf32, #tpu.memory_space<vmem>>, vector<128x128xf32>
      tpu.vector_store %arg9[%c0_11, %c0_12], %13 {strides = array<i32>} : memref<128x128xf32, #tpu.memory_space<vmem>>, vector<128x128xf32>,
      %c0_13 = arith.constant 0 : index
      %c0_14 = arith.constant 0 : index
      %15 = vector.load %arg7[%c0_13, %c0_14] : memref<1x128xf32, #tpu.memory_space<vmem>>, vector<1x128xf32>
      %c0_15 = arith.constant 0 : index
      %c0_16 = arith.constant 0 : index
      %16 = vector.load %arg4[%c0_15, %c0_16] : memref<128x128xbf16, #tpu.memory_space<vmem>>, vector<128x128xbf16>
      %c0_17 = arith.constant 0 : index
      %c0_18 = arith.constant 0 : index
      %17 = vector.load %arg6[%c0_17, %c0_18] : memref<128x128xbf16, #tpu.memory_space<vmem>>, vector<128x128xbf16>
      %cst_19 = arith.constant dense<0.000000e+00> : vector<128x128xf32>
      %18 = tpu.matmul %16, %17, %cst_19 {dimension_numbers = #tpu.dot_dimension_numbers<[1], [0], [0], [1], [0, 0, 1, 1], [], []>} : vector<128x128xbf16>, vector<128x128xbf16>, vector<128x128xf32> -> vector<128x128xf32>
      %19 = vector.broadcast %15 : vector<1x128xf32> to vector<128x128xf32>
      %20 = arith.addf %19, %18 : vector<128x128xf32>
      %c0_20 = arith.constant 0 : index
      %c0_21 = arith.constant 0 : index
      %21 = vector.load %arg10[%c0_20, %c0_21] : memref<128x128xf32, #tpu.memory_space<vmem>>, vector<128x128xf32>
      tpu.vector_store %arg10[%c0_20, %c0_21], %20 {strides = array<i32>} : memref<128x128xf32, #tpu.memory_space<vmem>>, vector<128x128xf32>,
    } else {
    }
    %c0 = arith.constant 0 : index
    %c0_1 = arith.constant 0 : index
    %3 = vector.load %arg9[%c0, %c0_1] : memref<128x128xf32, #tpu.memory_space<vmem>>, vector<128x128xf32>
    %c0_2 = arith.constant 0 : index
    %c0_3 = arith.constant 0 : index
    %4 = vector.load %arg2[%c0_2, %c0_3] : memref<128x256xi8, #tpu.memory_space<vmem>>, vector<128x256xi8>
    %5 = arith.sitofp %4 : vector<128x256xi8> to vector<128x256xbf16>
    %c0_4 = arith.constant 0 : index
    %c0_5 = arith.constant 0 : index
    %6 = vector.load %arg3[%c0_4, %c0_5] : memref<256x128xbf16, #tpu.memory_space<vmem>>, vector<256x128xbf16>
    %cst = arith.constant dense<0.000000e+00> : vector<128x128xf32>
    %7 = tpu.matmul %5, %6, %cst {dimension_numbers = #tpu.dot_dimension_numbers<[1], [0], [0], [1], [0, 0, 1, 1], [], []>} : vector<128x256xbf16>, vector<256x128xbf16>, vector<128x128xf32> -> vector<128x128xf32>
    %8 = arith.addf %3, %7 : vector<128x128xf32>
    %c0_6 = arith.constant 0 : index
    %c0_7 = arith.constant 0 : index
    %9 = vector.load %arg9[%c0_6, %c0_7] : memref<128x128xf32, #tpu.memory_space<vmem>>, vector<128x128xf32>
    tpu.vector_store %arg9[%c0_6, %c0_7], %8 {strides = array<i32>} : memref<128x128xf32, #tpu.memory_space<vmem>>, vector<128x128xf32>,
    %c0_i32_8 = arith.constant 0 : i32
    %10 = arith.cmpi eq, %arg1, %c0_i32_8 : i32
    %11 = arith.extui %10 : i1 to i32
    %c0_i32_9 = arith.constant 0 : i32
    %12 = arith.cmpi ne, %11, %c0_i32_9 : i32
    scf.if %12 {
      %c0_10 = arith.constant 0 : index
      %c0_11 = arith.constant 0 : index
      %13 = vector.load %arg9[%c0_10, %c0_11] : memref<128x128xf32, #tpu.memory_space<vmem>>, vector<128x128xf32>
      %c0_12 = arith.constant 0 : index
      %c0_13 = arith.constant 0 : index
      %14 = vector.load %arg5[%c0_12, %c0_13] : memref<128x1xf32, #tpu.memory_space<vmem>>, vector<128x1xf32>
      %15 = vector.broadcast %14 : vector<128x1xf32> to vector<128x128xf32>
      %16 = arith.mulf %13, %15 : vector<128x128xf32>
      %c0_14 = arith.constant 0 : index
      %c0_15 = arith.constant 0 : index
      %17 = vector.load %arg10[%c0_14, %c0_15] : memref<128x128xf32, #tpu.memory_space<vmem>>, vector<128x128xf32>
      %18 = arith.addf %16, %17 : vector<128x128xf32>
      %19 = arith.mulf %18, %18 : vector<128x128xf32>
      %cst_16 = arith.constant dense<0.000000e+00> : vector<128xf32>
      %20 = vector.multi_reduction <add>, %19, %cst_16 [1] : vector<128x128xf32> to vector<128xf32>
      %21 = vector.shape_cast %20 : vector<128xf32> to vector<128x1xf32>
      %cst_17 = arith.constant 1.000000e-24 : f32
      %22 = vector.broadcast %cst_17 : f32 to vector<128x1xf32>
      %23 = arith.maximumf %21, %22 : vector<128x1xf32>
      %24 = math.rsqrt %23 : vector<128x1xf32>
      %25 = vector.broadcast %24 : vector<128x1xf32> to vector<128x128xf32>
      %26 = arith.mulf %18, %25 : vector<128x128xf32>
      %c0_18 = arith.constant 0 : index
      %c0_19 = arith.constant 0 : index
      %27 = vector.load %arg8[%c0_18, %c0_19] : memref<128x128xf32, #tpu.memory_space<vmem>>, vector<128x128xf32>
      tpu.vector_store %arg8[%c0_18, %c0_19], %26 {strides = array<i32>} : memref<128x128xf32, #tpu.memory_space<vmem>>, vector<128x128xf32>,
    } else {
    }
    return
  }
  func.func @transform_0(%arg0: i32, %arg1: i32) -> (i32, i32) {
    %c0_i32 = arith.constant 0 : i32
    return %arg0, %arg1 : i32, i32
  }
  func.func @transform_1(%arg0: i32, %arg1: i32) -> (i32, i32) {
    %c0_i32 = arith.constant 0 : i32
    %c0_i32_0 = arith.constant 0 : i32
    return %arg1, %c0_i32 : i32, i32
  }
  func.func @transform_2(%arg0: i32, %arg1: i32) -> (i32, i32) {
    %c0_i32 = arith.constant 0 : i32
    %c0_i32_0 = arith.constant 0 : i32
    return %arg0, %c0_i32 : i32, i32
  }
  func.func @transform_3(%arg0: i32, %arg1: i32) -> (i32, i32) {
    %c0_i32 = arith.constant 0 : i32
    %c0_i32_0 = arith.constant 0 : i32
    return %arg0, %c0_i32 : i32, i32
  }
  func.func @transform_4(%arg0: i32, %arg1: i32) -> (i32, i32) {
    %c0_i32 = arith.constant 0 : i32
    %c0_i32_0 = arith.constant 0 : i32
    %c0_i32_1 = arith.constant 0 : i32
    return %c0_i32, %c0_i32_0 : i32, i32
  }
  func.func @transform_5(%arg0: i32, %arg1: i32) -> (i32, i32) {
    %c0_i32 = arith.constant 0 : i32
    %c0_i32_0 = arith.constant 0 : i32
    %c0_i32_1 = arith.constant 0 : i32
    return %c0_i32, %c0_i32_0 : i32, i32
  }
  func.func @transform_6(%arg0: i32, %arg1: i32) -> (i32, i32) {
    %c0_i32 = arith.constant 0 : i32
    %c0_i32_0 = arith.constant 0 : i32
    return %arg0, %c0_i32 : i32, i32
  }
}

</mosaic_0001>

<llo_original>
// kernel: gnn_encoder_forward.4
$region0: #{gnn_encoder_forward.4}
  #allocation0 [shape = 'u32[]', space=smem, size = 0x4, offset = 0x4, fixed_abs, tag = 'smem constant byte address 0x4 - core index']
  #allocation1 [shape = 'u32[144,128]{1,0:T(1,128)}', space=vmem, size = 0x12000, scoped, tag = 'internal scratch']
  %s0 = inlined_call_operand.vmem [shape: bf16[256,128], index: 0, kind: input, shape index: {}]
  %s1 = inlined_call_operand.vmem [shape: bf16[128,128], index: 1, kind: input, shape index: {}]
  %s2 = inlined_call_operand.vmem [shape: bf16[256,128], index: 2, kind: output, shape index: {}]
  %s3 = sld [smem:[#allocation0]]
  $region41: #{gnn_encoder_forward.4} parent=0
    _
  %s5 = ssub.s32 1, %s3
  %s6 = scalar_select 0, %s5, %s3
  loop: start=0, step=1, limit=4
  $region2: #{gnn_encoder_forward.4} parent=0 // loop_pre_header
    _
  $region3: #{gnn_encoder_forward.4} parent=0 // loop_header
    %s8 = sphi 0, %s12
    %p9 = scmp.ge.s32.totalorder %s8, 4
    %s18 = sphi 0, %s20
    %s21 = sphi 0, %s18
    %s22 = sphi 0, %s21
    %s38 = sphi 0, %s22
    %s42 = sphi 0, %s42
    %s44 = sphi 0, %s42
    %s45 = sphi 0, %s44
    %s59 = sphi 0, %s45
    %s65 = sphi 0, %s67
    %s68 = sphi 0, %s65
    %s69 = sphi 0, %s68
    %s85 = sphi 0, %s69
  $region4: #{gnn_encoder_forward.4} parent=0 // loop_header_branch
    %11 = sbr.rel (%p9) target = $region8
  $region5: #{gnn_encoder_forward.4} parent=0 // loop_body
    %s13 = ssub.s32 %s8, 1
    %s14 = ssub.s32 %s8, 2
    %s15 = sadd.s32 %s8, 1
    %s16 = ssub.s32 %s8, %s15
    %p17 = scmp.eq.s32.totalorder %s16, 0
    %s19 = sadd.s32 %s18, 1
    %s20 = scalar_select %p17, %s18, %s19
    %p23 = pneg %p17
    %p24 = scmp.eq.s32.totalorder %s8, 1
    %p25 = por %p23, %p24
    %p26 = scmp.ne.s32.totalorder %s18, %s21
    %p27 = scmp.eq.s32.totalorder %s8, 0
    %p28 = por %p26, %p27
    %p29 = scmp.ne.s32.totalorder %s18, %s21
    %p30 = scmp.eq.s32.totalorder %s13, 1
    %p31 = por %p29, %p30
    %p32 = scmp.ne.s32.totalorder %s21, %s22
    %p33 = scmp.eq.s32.totalorder %s13, 0
    %p34 = por %p32, %p33
    %p35 = scmp.ne.s32.totalorder %s21, %s22
    %p36 = scmp.eq.s32.totalorder %s14, 1
    %p37 = por %p35, %p36
    %p39 = scmp.ne.s32.totalorder %s22, %s38
    %p40 = scmp.eq.s32.totalorder %s14, 0
    %p41 = por %p39, %p40
    %s43 = sadd.s32 %s42, 1
    %p46 = scmp.eq.s32.totalorder %s8, 1
    %p47 = scmp.ne.s32.totalorder %s42, %s44
    %p48 = scmp.eq.s32.totalorder %s8, 0
    %p49 = por %p47, %p48
    %p50 = scmp.ne.s32.totalorder %s42, %s44
    %p51 = scmp.eq.s32.totalorder %s13, 1
    %p52 = por %p50, %p51
    %p53 = scmp.ne.s32.totalorder %s44, %s45
    %p54 = scmp.eq.s32.totalorder %s13, 0
    %p55 = por %p53, %p54
    %p56 = scmp.ne.s32.totalorder %s44, %s45
    %p57 = scmp.eq.s32.totalorder %s14, 1
    %p58 = por %p56, %p57
    %p60 = scmp.ne.s32.totalorder %s45, %s59
    %p61 = scmp.eq.s32.totalorder %s14, 0
    %p62 = por %p60, %p61
    %s63 = ssub.s32 %s8, %s15
    %p64 = scmp.eq.s32.totalorder %s63, 0
    %s66 = sadd.s32 %s65, 1
    %s67 = scalar_select %p64, %s65, %s66
    %p70 = pneg %p64
    %p71 = scmp.eq.s32.totalorder %s8, 1
    %p72 = por %p70, %p71
    %p73 = scmp.ne.s32.totalorder %s65, %s68
    %p74 = scmp.eq.s32.totalorder %s8, 0
    %p75 = por %p73, %p74
    %p76 = scmp.ne.s32.totalorder %s65, %s68
    %p77 = scmp.eq.s32.totalorder %s13, 1
    %p78 = por %p76, %p77
    %p79 = scmp.ne.s32.totalorder %s68, %s69
    %p80 = scmp.eq.s32.totalorder %s13, 0
    %p81 = por %p79, %p80
    %p82 = scmp.ne.s32.totalorder %s68, %s69
    %p83 = scmp.eq.s32.totalorder %s14, 1
    %p84 = por %p82, %p83
    %p86 = scmp.ne.s32.totalorder %s69, %s85
    %p87 = scmp.eq.s32.totalorder %s14, 0
    %p88 = por %p86, %p87
    %p89 = scmp.le.s32.totalorder 1, %s8
    %p90 = scmp.lt.s32.totalorder %s8, 3
    %p91 = pnand %p89, %p90
    %p92 = pneg %p91
    // Predicated region
    $region9: #{gnn_encoder_forward.4} parent=5 // pred_check
      _
    $region10: #{gnn_encoder_forward.4} parent=5 // pred_check_branch
      %94 = sbr.rel (%p91) target = $region12
    $region11: #{gnn_encoder_forward.4} parent=5 // pred_region
      %s95 = ssub.s32 %s8, 1
      // Predicated region
      $region13: #{gnn_encoder_forward.4} parent=11 // pred_check
        %p96 = pneg %p55
      $region14: #{gnn_encoder_forward.4} parent=11 // pred_check_branch
        %98 = sbr.rel (%p96) target = $region16
      $region15: #{gnn_encoder_forward.4} parent=11 // pred_region
        _
      $region16: #{gnn_encoder_forward.4} parent=11 // pred_fallthru
        _
    $region12: #{gnn_encoder_forward.4} parent=5 // pred_fallthru
      _
    %p99 = scmp.lt.s32.totalorder %s8, 2
    // Predicated region
    $region17: #{gnn_encoder_forward.4} parent=5 // pred_check
      %p100 = pneg %p99
    $region18: #{gnn_encoder_forward.4} parent=5 // pred_check_branch
      %102 = sbr.rel (%p100) target = $region20
    $region19: #{gnn_encoder_forward.4} parent=5 // pred_region
      // Predicated region
      $region21: #{gnn_encoder_forward.4} parent=19 // pred_check
        %p103 = pneg %p28
      $region22: #{gnn_encoder_forward.4} parent=19 // pred_check_branch
        %105 = sbr.rel (%p103) target = $region24
      $region23: #{gnn_encoder_forward.4} parent=19 // pred_region
        %s106 = smul.u32 16, %s8
        %p107 = scmp.lt.s32.totalorder %s106, 31
        %s108 = scalar_select %p107, %s106, 31
        %s109 = smul.addr %s108, 4
        %s110 = scalar_lea.vmem %s0, %s109
        %s111 = smul.u32 16, %s8
      $region24: #{gnn_encoder_forward.4} parent=19 // pred_fallthru
        _
    $region20: #{gnn_encoder_forward.4} parent=5 // pred_fallthru
      _
    %p112 = scmp.le.s32.totalorder 1, %s8
    %p113 = scmp.lt.s32.totalorder %s8, 3
    %p114 = pnand %p112, %p113
    %p115 = pneg %p114
    // Predicated region
    $region25: #{gnn_encoder_forward.4} parent=5 // pred_check
      _
    $region26: #{gnn_encoder_forward.4} parent=5 // pred_check_branch
      %117 = sbr.rel (%p114) target = $region28
    $region27: #{gnn_encoder_forward.4} parent=5 // pred_region
      %s118 = ssub.s32 %s8, 1
      %s119 = smul.u32 16, %s13
      %p120 = scmp.lt.s32.totalorder %s119, 31
      %s121 = scalar_select %p120, %s119, 31
      %s122 = smul.addr %s121, 4
      %s123 = scalar_lea.vmem %s0, %s122
      %p124 = pneg %p34
      %p125 = pneg %p31
      %p126 = pneg %p55
      %p127 = pneg %p52
      %p128 = pneg %p81
      %p129 = pneg %p78
      %s130 = smul.u32 16, %s13
      %p131 = scmp.lt.s32.totalorder %s130, 31
      %s132 = scalar_select %p131, %s130, 31
      %s133 = smul.addr %s132, 4
      %s134 = scalar_lea.vmem %s2, %s133
      %s135 = smul.u32 16, %s13
      %p136 = scmp.lt.s32.totalorder %s135, 31
      %s137 = scalar_select %p136, %s135, 31
      %s138 = smul.addr %s137, 4
      %s139 = scalar_lea.vmem %s0, %s138
      %s140 = smul.u32 16, %s13
      %s141 = smul.u32 16, %s13
      %p142 = scmp.lt.s32.totalorder %s141, 31
      %s143 = scalar_select %p142, %s141, 31
      %s144 = smul.addr %s143, 4
      %s145 = scalar_lea.vmem %s2, %s144
      %s146 = smul.u32 16, %s13
      %v148 = vld [vmem:[%s139] sm:$0xf]
      %v149 = vld [vmem:[%s139 + $0x4] sm:$0xf]
      %v150 = vld [vmem:[%s139 + $0x8] sm:$0xf]
      %v151 = vld [vmem:[%s139 + $0xc] sm:$0xf]
      %v152 = vld [vmem:[%s139 + $0x10] sm:$0xf]
      %v153 = vld [vmem:[%s139 + $0x14] sm:$0xf]
      %v154 = vld [vmem:[%s139 + $0x18] sm:$0xf]
      %v155 = vld [vmem:[%s139 + $0x1c] sm:$0xf]
      %v156 = vld [vmem:[%s139 + $0x20] sm:$0xf]
      %v157 = vld [vmem:[%s139 + $0x24] sm:$0xf]
      %v158 = vld [vmem:[%s139 + $0x28] sm:$0xf]
      %v159 = vld [vmem:[%s139 + $0x2c] sm:$0xf]
      %v160 = vld [vmem:[%s139 + $0x30] sm:$0xf]
      %v161 = vld [vmem:[%s139 + $0x34] sm:$0xf]
      %v162 = vld [vmem:[%s139 + $0x38] sm:$0xf]
      %v163 = vld [vmem:[%s139 + $0x3c] sm:$0xf]
      %v164 = vld [vmem:[%s1] sm:$0xf]
      %v165 = vld [vmem:[%s1 + $0x4] sm:$0xf]
      %v166 = vld [vmem:[%s1 + $0x8] sm:$0xf]
      %v167 = vld [vmem:[%s1 + $0xc] sm:$0xf]
      %v168 = vld [vmem:[%s1 + $0x10] sm:$0xf]
      %v169 = vld [vmem:[%s1 + $0x14] sm:$0xf]
      %v170 = vld [vmem:[%s1 + $0x18] sm:$0xf]
      %v171 = vld [vmem:[%s1 + $0x1c] sm:$0xf]
      %v172 = vld [vmem:[%s1 + $0x20] sm:$0xf]
      %v173 = vld [vmem:[%s1 + $0x24] sm:$0xf]
      %v174 = vld [vmem:[%s1 + $0x28] sm:$0xf]
      %v175 = vld [vmem:[%s1 + $0x2c] sm:$0xf]
      %v176 = vld [vmem:[%s1 + $0x30] sm:$0xf]
      %v177 = vld [vmem:[%s1 + $0x34] sm:$0xf]
      %v178 = vld [vmem:[%s1 + $0x38] sm:$0xf]
      %v179 = vld [vmem:[%s1 + $0x3c] sm:$0xf]
      %v196 = vunpack.c.l.b16 %v148
      %v197 = vunpack.c.l.b16 %v149
      %v198 = vunpack.c.l.b16 %v150
      %v199 = vunpack.c.l.b16 %v151
      %v200 = vunpack.c.l.b16 %v152
      %v201 = vunpack.c.l.b16 %v153
      %v202 = vunpack.c.l.b16 %v154
      %v203 = vunpack.c.l.b16 %v155
      %v204 = vunpack.c.l.b16 %v156
      %v205 = vunpack.c.l.b16 %v157
      %v206 = vunpack.c.l.b16 %v158
      %v207 = vunpack.c.l.b16 %v159
      %v208 = vunpack.c.l.b16 %v160
      %v209 = vunpack.c.l.b16 %v161
      %v210 = vunpack.c.l.b16 %v162
      %v211 = vunpack.c.l.b16 %v163
      %v212 = vpack.c.b16 %v197, %v196
      %v213 = vpack.c.b16 %v199, %v198
      %v214 = vpack.c.b16 %v201, %v200
      %v215 = vpack.c.b16 %v203, %v202
      %v216 = vpack.c.b16 %v205, %v204
      %v217 = vpack.c.b16 %v207, %v206
      %v218 = vpack.c.b16 %v209, %v208
      %v219 = vpack.c.b16 %v211, %v210
      %v244 = vunpack.c.l.b16 %v164
      %v245 = vunpack.c.l.b16 %v165
      %v246 = vunpack.c.l.b16 %v166
      %v247 = vunpack.c.l.b16 %v167
      %v248 = vunpack.c.l.b16 %v168
      %v249 = vunpack.c.l.b16 %v169
      %v250 = vunpack.c.l.b16 %v170
      %v251 = vunpack.c.l.b16 %v171
      %v252 = vunpack.c.l.b16 %v172
      %v253 = vunpack.c.l.b16 %v173
      %v254 = vunpack.c.l.b16 %v174
      %v255 = vunpack.c.l.b16 %v175
      %v256 = vunpack.c.l.b16 %v176
      %v257 = vunpack.c.l.b16 %v177
      %v258 = vunpack.c.l.b16 %v178
      %v259 = vunpack.c.l.b16 %v179
      %v260 = vpack.c.b16 %v245, %v244
      %v261 = vpack.c.b16 %v247, %v246
      %v262 = vpack.c.b16 %v249, %v248
      %v263 = vpack.c.b16 %v251, %v250
      %v264 = vpack.c.b16 %v253, %v252
      %v265 = vpack.c.b16 %v255, %v254
      %v266 = vpack.c.b16 %v257, %v256
      %v267 = vpack.c.b16 %v259, %v258
      %276 = vmatprep.subr.bf16.mxu0 0
      %277 = vmatpush1.bf16.msra.mxu0 %v260
      %278 = vmatprep.subr.bf16.mxu0 0
      %279 = vmatpush1.bf16.msra.mxu0 %v261
      %280 = vmatprep.subr.bf16.mxu0 0
      %281 = vmatpush1.bf16.msra.mxu0 %v262
      %282 = vmatprep.subr.bf16.mxu0 0
      %283 = vmatpush1.bf16.msra.mxu0 %v263
      %284 = vmatprep.subr.bf16.mxu0 0
      %285 = vmatpush1.bf16.msra.mxu0 %v264
      %286 = vmatprep.subr.bf16.mxu0 0
      %287 = vmatpush1.bf16.msra.mxu0 %v265
      %288 = vmatprep.subr.bf16.mxu0 0
      %289 = vmatpush1.bf16.msra.mxu0 %v266
      %290 = vmatprep.subr.bf16.mxu0 0
      %291 = vmatpush1.bf16.msra.mxu0 %v267
      %292 = vmatprep.subr.bf16.mxu0 0
      %293 = vmatpush1.bf16.msra.mxu0 0
      %294 = vmatprep.subr.bf16.mxu0 0
      %295 = vmatpush1.bf16.msra.mxu0 0
      %296 = vmatprep.subr.bf16.mxu0 0
      %297 = vmatpush1.bf16.msra.mxu0 0
      %298 = vmatprep.subr.bf16.mxu0 0
      %299 = vmatpush1.bf16.msra.mxu0 0
      %300 = vmatprep.subr.bf16.mxu0 0
      %301 = vmatpush1.bf16.msra.mxu0 0
      %302 = vmatprep.subr.bf16.mxu0 0
      %303 = vmatpush1.bf16.msra.mxu0 0
      %304 = vmatprep.subr.bf16.mxu0 0
      %305 = vmatpush1.bf16.msra.mxu0 0
      %306 = vmatprep.subr.bf16.mxu0 0
      %307 = vmatpush1.bf16.msra.mxu0 0
      %308 = vmatprep.mubr.bf16.mxu0 0
      %309 = vmatmul.mubr.bf16.gmra.mrb[0].mxu0 %v212
      %v310 = vpop.f32.mrb[0].mxu0
      %v311 = vadd.f32 0.0, %v310
      %v312 = vpop.f32.mrb[0].mxu0
      %v313 = vpop.f32.mrb[0].mxu0
      %v314 = vadd.f32 0.0, %v313
      %v315 = vpop.f32.mrb[0].mxu0
      %316 = vmatprep.mubr.bf16.mxu0 0
      %317 = vmatmul.mubr.bf16.gmra.mrb[0].mxu0 %v213
      %v318 = vpop.f32.mrb[0].mxu0
      %v319 = vadd.f32 0.0, %v318
      %v320 = vpop.f32.mrb[0].mxu0
      %v321 = vpop.f32.mrb[0].mxu0
      %v322 = vadd.f32 0.0, %v321
      %v323 = vpop.f32.mrb[0].mxu0
      %324 = vmatprep.mubr.bf16.mxu0 0
      %325 = vmatmul.mubr.bf16.gmra.mrb[0].mxu0 %v214
      %v326 = vpop.f32.mrb[0].mxu0
      %v327 = vadd.f32 0.0, %v326
      %v328 = vpop.f32.mrb[0].mxu0
      %v329 = vpop.f32.mrb[0].mxu0
      %v330 = vadd.f32 0.0, %v329
      %v331 = vpop.f32.mrb[0].mxu0
      %332 = vmatprep.mubr.bf16.mxu0 0
      %333 = vmatmul.mubr.bf16.gmra.mrb[0].mxu0 %v215
      %v334 = vpop.f32.mrb[0].mxu0
      %v335 = vadd.f32 0.0, %v334
      %v336 = vpop.f32.mrb[0].mxu0
      %v337 = vpop.f32.mrb[0].mxu0
      %v338 = vadd.f32 0.0, %v337
      %v339 = vpop.f32.mrb[0].mxu0
      %340 = vmatprep.mubr.bf16.mxu0 0
      %341 = vmatmul.mubr.bf16.gmra.mrb[0].mxu0 %v216
      %v342 = vpop.f32.mrb[0].mxu0
      %v343 = vadd.f32 0.0, %v342
      %v344 = vpop.f32.mrb[0].mxu0
      %v345 = vpop.f32.mrb[0].mxu0
      %v346 = vadd.f32 0.0, %v345
      %v347 = vpop.f32.mrb[0].mxu0
      %348 = vmatprep.mubr.bf16.mxu0 0
      %349 = vmatmul.mubr.bf16.gmra.mrb[0].mxu0 %v217
      %v350 = vpop.f32.mrb[0].mxu0
      %v351 = vadd.f32 0.0, %v350
      %v352 = vpop.f32.mrb[0].mxu0
      %v353 = vpop.f32.mrb[0].mxu0
      %v354 = vadd.f32 0.0, %v353
      %v355 = vpop.f32.mrb[0].mxu0
      %356 = vmatprep.mubr.bf16.mxu0 0
      %357 = vmatmul.mubr.bf16.gmra.mrb[0].mxu0 %v218
      %v358 = vpop.f32.mrb[0].mxu0
      %v359 = vadd.f32 0.0, %v358
      %v360 = vpop.f32.mrb[0].mxu0
      %v361 = vpop.f32.mrb[0].mxu0
      %v362 = vadd.f32 0.0, %v361
      %v363 = vpop.f32.mrb[0].mxu0
      %364 = vmatprep.mubr.bf16.mxu0 0
      %365 = vmatmul.mubr.bf16.gmra.mrb[0].mxu0 %v219
      %v366 = vpop.f32.mrb[0].mxu0
      %v367 = vadd.f32 0.0, %v366
      %v368 = vpop.f32.mrb[0].mxu0
      %v369 = vpop.f32.mrb[0].mxu0
      %v370 = vadd.f32 0.0, %v369
      %v371 = vpop.f32.mrb[0].mxu0
      %372 = vdwg.mxu0
      %v373 = vpack.c.bf16 %v314, %v311
      %v374 = vpack.c.bf16 %v322, %v319
      %v375 = vpack.c.bf16 %v330, %v327
      %v376 = vpack.c.bf16 %v338, %v335
      %v377 = vpack.c.bf16 %v346, %v343
      %v378 = vpack.c.bf16 %v354, %v351
      %v379 = vpack.c.bf16 %v362, %v359
      %v380 = vpack.c.bf16 %v370, %v367
      %v389 = vunpack.c.l.b16 %v373
      %v390 = vunpack.c.h.b16 %v373
      %v391 = vunpack.c.l.b16 %v374
      %v392 = vunpack.c.h.b16 %v374
      %v393 = vunpack.c.l.b16 %v375
      %v394 = vunpack.c.h.b16 %v375
      %v395 = vunpack.c.l.b16 %v376
      %v396 = vunpack.c.h.b16 %v376
      %v397 = vunpack.c.l.b16 %v377
      %v398 = vunpack.c.h.b16 %v377
      %v399 = vunpack.c.l.b16 %v378
      %v400 = vunpack.c.h.b16 %v378
      %v401 = vunpack.c.l.b16 %v379
      %v402 = vunpack.c.h.b16 %v379
      %v403 = vunpack.c.l.b16 %v380
      %v404 = vunpack.c.h.b16 %v380
      %v405 = vpack.c.b16 %v389, %v389
      %v406 = vpack.c.b16 %v390, %v390
      %v407 = vpack.c.b16 %v391, %v391
      %v408 = vpack.c.b16 %v392, %v392
      %v409 = vpack.c.b16 %v393, %v393
      %v410 = vpack.c.b16 %v394, %v394
      %v411 = vpack.c.b16 %v395, %v395
      %v412 = vpack.c.b16 %v396, %v396
      %v413 = vpack.c.b16 %v397, %v397
      %v414 = vpack.c.b16 %v398, %v398
      %v415 = vpack.c.b16 %v399, %v399
      %v416 = vpack.c.b16 %v400, %v400
      %v417 = vpack.c.b16 %v401, %v401
      %v418 = vpack.c.b16 %v402, %v402
      %v419 = vpack.c.b16 %v403, %v403
      %v420 = vpack.c.b16 %v404, %v404
      %437 = vst [vmem:[%s145] sm:$0xf] %v405
      %438 = vst [vmem:[%s145 + $0x4] sm:$0xf] %v406
      %439 = vst [vmem:[%s145 + $0x8] sm:$0xf] %v407
      %440 = vst [vmem:[%s145 + $0xc] sm:$0xf] %v408
      %441 = vst [vmem:[%s145 + $0x10] sm:$0xf] %v409
      %442 = vst [vmem:[%s145 + $0x14] sm:$0xf] %v410
      %443 = vst [vmem:[%s145 + $0x18] sm:$0xf] %v411
      %444 = vst [vmem:[%s145 + $0x1c] sm:$0xf] %v412
      %445 = vst [vmem:[%s145 + $0x20] sm:$0xf] %v413
      %446 = vst [vmem:[%s145 + $0x24] sm:$0xf] %v414
      %447 = vst [vmem:[%s145 + $0x28] sm:$0xf] %v415
      %448 = vst [vmem:[%s145 + $0x2c] sm:$0xf] %v416
      %449 = vst [vmem:[%s145 + $0x30] sm:$0xf] %v417
      %450 = vst [vmem:[%s145 + $0x34] sm:$0xf] %v418
      %451 = vst [vmem:[%s145 + $0x38] sm:$0xf] %v419
      %452 = vst [vmem:[%s145 + $0x3c] sm:$0xf] %v420
      %s453 = smul.u32 16, %s13
      %p454 = scmp.lt.s32.totalorder %s453, 31
      %s455 = scalar_select %p454, %s453, 31
      %s456 = smul.addr %s455, 4
      %s457 = scalar_lea.vmem %s2, %s456
      // Predicated region
      $region29: #{gnn_encoder_forward.4} parent=27 // pred_check
        %p458 = pneg %p78
      $region30: #{gnn_encoder_forward.4} parent=27 // pred_check_branch
        %460 = sbr.rel (%p458) target = $region32
      $region31: #{gnn_encoder_forward.4} parent=27 // pred_region
        %s461 = smul.u32 16, %s13
      $region32: #{gnn_encoder_forward.4} parent=27 // pred_fallthru
        _
    $region28: #{gnn_encoder_forward.4} parent=5 // pred_fallthru
      _
    %p462 = scmp.le.s32.totalorder 2, %s8
    // Predicated region
    $region33: #{gnn_encoder_forward.4} parent=5 // pred_check
      %p463 = pneg %p462
    $region34: #{gnn_encoder_forward.4} parent=5 // pred_check_branch
      %465 = sbr.rel (%p463) target = $region36
    $region35: #{gnn_encoder_forward.4} parent=5 // pred_region
      %s466 = ssub.s32 %s8, 2
      // Predicated region
      $region37: #{gnn_encoder_forward.4} parent=35 // pred_check
        %p467 = pneg %p84
      $region38: #{gnn_encoder_forward.4} parent=35 // pred_check_branch
        %469 = sbr.rel (%p467) target = $region40
      $region39: #{gnn_encoder_forward.4} parent=35 // pred_region
        %s470 = smul.u32 16, %s14
        %p471 = scmp.lt.s32.totalorder %s470, 31
        %s472 = scalar_select %p471, %s470, 31
        %s473 = smul.addr %s472, 4
        %s474 = scalar_lea.vmem %s2, %s473
      $region40: #{gnn_encoder_forward.4} parent=35 // pred_fallthru
        _
    $region36: #{gnn_encoder_forward.4} parent=5 // pred_fallthru
      _
  $region6: #{gnn_encoder_forward.4} parent=0 // loop_footer
    %s12 = sadd.s32 1, %s8
  $region7: #{gnn_encoder_forward.4} parent=0 // loop_footer_branch
    %7 = sbr.rel target = $region3
  $region8: #{gnn_encoder_forward.4} parent=0 // loop_exit
    _

// kernel: gnn_encoder_forward.5
$region0: #{gnn_encoder_forward.5}
  #allocation0 [shape = 'u32[]', space=smem, size = 0x4, offset = 0x4, fixed_abs, tag = 'smem constant byte address 0x4 - core index']
  #allocation1 [shape = 'u32[144,128]{1,0:T(1,128)}', space=vmem, size = 0x12000, scoped, tag = 'internal scratch']
  #allocation2 [shape = 'f32[128,128]{1,0:T(8,128)}', space=vmem, size = 0x10000, scoped, tag = 'scratch operand']
  #allocation3 [shape = 'f32[128,128]{1,0:T(8,128)}', space=vmem, size = 0x10000, scoped, tag = 'scratch operand']
  %s0 = inlined_call_operand.vmem [shape: s8[256,256], index: 0, kind: input, shape index: {}]
  %s1 = inlined_call_operand.vmem [shape: bf16[256,128], index: 1, kind: input, shape index: {}]
  %s2 = inlined_call_operand.vmem [shape: bf16[256,128], index: 2, kind: input, shape index: {}]
  %s3 = inlined_call_operand.vmem [shape: f32[256,1], index: 3, kind: input, shape index: {}]
  %s4 = inlined_call_operand.vmem [shape: bf16[128,128], index: 4, kind: input, shape index: {}]
  %s5 = inlined_call_operand.vmem [shape: f32[1,128], index: 5, kind: input, shape index: {}]
  %s6 = inlined_call_operand.vmem [shape: bf16[256,128], index: 6, kind: output, shape index: {}]
  %s7 = sld [smem:[#allocation0]]
  $region65: #{gnn_encoder_forward.5} parent=0
    _
  %s9 = ssub.s32 1, %s7
  %s10 = scalar_select 0, %s9, %s7
  loop: start=0, step=1, limit=4
  $region2: #{gnn_encoder_forward.5} parent=0 // loop_pre_header
    _
  $region3: #{gnn_encoder_forward.5} parent=0 // loop_header
    %s12 = sphi 0, %s16
    %p13 = scmp.ge.s32.totalorder %s12, 4
    %s19 = sphi 0, %s31
    %s20 = sphi 0, %s27
    %s21 = sphi 0, %s19
    %s22 = sphi 0, %s20
    %s23 = sphi 0, %s21
    %s24 = sphi 0, %s22
    %s36 = sphi 0, %s38
    %s39 = sphi 0, %s36
    %s40 = sphi 0, %s39
    %s56 = sphi 0, %s40
    %s62 = sphi 0, %s64
    %s65 = sphi 0, %s62
    %s66 = sphi 0, %s65
    %s82 = sphi 0, %s66
    %s88 = sphi 0, %s90
    %s91 = sphi 0, %s88
    %s92 = sphi 0, %s91
    %s108 = sphi 0, %s92
    %s114 = sphi 0, %s116
    %s117 = sphi 0, %s114
    %s118 = sphi 0, %s117
    %s134 = sphi 0, %s118
    %s138 = sphi 0, %s138
    %s140 = sphi 0, %s138
    %s141 = sphi 0, %s140
    %s155 = sphi 0, %s141
    %s159 = sphi 0, %s159
    %s161 = sphi 0, %s159
    %s162 = sphi 0, %s161
    %s176 = sphi 0, %s162
    %s182 = sphi 0, %s184
    %s185 = sphi 0, %s182
    %s186 = sphi 0, %s185
    %s202 = sphi 0, %s186
  $region4: #{gnn_encoder_forward.5} parent=0 // loop_header_branch
    %15 = sbr.rel (%p13) target = $region8
  $region5: #{gnn_encoder_forward.5} parent=0 // loop_body
    %s17 = ssub.s32 %s12, 1
    %s18 = ssub.s32 %s12, 2
    %s25 = sadd.s32 1, %s20
    %p26 = scmp.ge.s32.totalorder %s25, 1
    %s27 = scalar_select %p26, 0, %s25
    %s28 = sadd.s32 1, %s19
    %s29 = scalar_select %p26, %s28, %s19
    %p30 = scmp.ge.s32.totalorder %s29, 2
    %s31 = scalar_select %p30, 0, %s29
    %s32 = ssub.s32 %s19, %s31
    %s33 = ssub.s32 %s20, %s27
    %s34 = sor.u32 %s32, %s33
    %p35 = scmp.eq.s32.totalorder %s34, 0
    %s37 = sadd.s32 %s36, 1
    %s38 = scalar_select %p35, %s36, %s37
    %p41 = pneg %p35
    %p42 = scmp.eq.s32.totalorder %s12, 1
    %p43 = por %p41, %p42
    %p44 = scmp.ne.s32.totalorder %s36, %s39
    %p45 = scmp.eq.s32.totalorder %s12, 0
    %p46 = por %p44, %p45
    %p47 = scmp.ne.s32.totalorder %s36, %s39
    %p48 = scmp.eq.s32.totalorder %s17, 1
    %p49 = por %p47, %p48
    %p50 = scmp.ne.s32.totalorder %s39, %s40
    %p51 = scmp.eq.s32.totalorder %s17, 0
    %p52 = por %p50, %p51
    %p53 = scmp.ne.s32.totalorder %s39, %s40
    %p54 = scmp.eq.s32.totalorder %s18, 1
    %p55 = por %p53, %p54
    %p57 = scmp.ne.s32.totalorder %s40, %s56
    %p58 = scmp.eq.s32.totalorder %s18, 0
    %p59 = por %p57, %p58
    %s60 = ssub.s32 %s20, %s27
    %p61 = scmp.eq.s32.totalorder %s60, 0
    %s63 = sadd.s32 %s62, 1
    %s64 = scalar_select %p61, %s62, %s63
    %p67 = pneg %p61
    %p68 = scmp.eq.s32.totalorder %s12, 1
    %p69 = por %p67, %p68
    %p70 = scmp.ne.s32.totalorder %s62, %s65
    %p71 = scmp.eq.s32.totalorder %s12, 0
    %p72 = por %p70, %p71
    %p73 = scmp.ne.s32.totalorder %s62, %s65
    %p74 = scmp.eq.s32.totalorder %s17, 1
    %p75 = por %p73, %p74
    %p76 = scmp.ne.s32.totalorder %s65, %s66
    %p77 = scmp.eq.s32.totalorder %s17, 0
    %p78 = por %p76, %p77
    %p79 = scmp.ne.s32.totalorder %s65, %s66
    %p80 = scmp.eq.s32.totalorder %s18, 1
    %p81 = por %p79, %p80
    %p83 = scmp.ne.s32.totalorder %s66, %s82
    %p84 = scmp.eq.s32.totalorder %s18, 0
    %p85 = por %p83, %p84
    %s86 = ssub.s32 %s19, %s31
    %p87 = scmp.eq.s32.totalorder %s86, 0
    %s89 = sadd.s32 %s88, 1
    %s90 = scalar_select %p87, %s88, %s89
    %p93 = pneg %p87
    %p94 = scmp.eq.s32.totalorder %s12, 1
    %p95 = por %p93, %p94
    %p96 = scmp.ne.s32.totalorder %s88, %s91
    %p97 = scmp.eq.s32.totalorder %s12, 0
    %p98 = por %p96, %p97
    %p99 = scmp.ne.s32.totalorder %s88, %s91
    %p100 = scmp.eq.s32.totalorder %s17, 1
    %p101 = por %p99, %p100
    %p102 = scmp.ne.s32.totalorder %s91, %s92
    %p103 = scmp.eq.s32.totalorder %s17, 0
    %p104 = por %p102, %p103
    %p105 = scmp.ne.s32.totalorder %s91, %s92
    %p106 = scmp.eq.s32.totalorder %s18, 1
    %p107 = por %p105, %p106
    %p109 = scmp.ne.s32.totalorder %s92, %s108
    %p110 = scmp.eq.s32.totalorder %s18, 0
    %p111 = por %p109, %p110
    %s112 = ssub.s32 %s19, %s31
    %p113 = scmp.eq.s32.totalorder %s112, 0
    %s115 = sadd.s32 %s114, 1
    %s116 = scalar_select %p113, %s114, %s115
    %p119 = pneg %p113
    %p120 = scmp.eq.s32.totalorder %s12, 1
    %p121 = por %p119, %p120
    %p122 = scmp.ne.s32.totalorder %s114, %s117
    %p123 = scmp.eq.s32.totalorder %s12, 0
    %p124 = por %p122, %p123
    %p125 = scmp.ne.s32.totalorder %s114, %s117
    %p126 = scmp.eq.s32.totalorder %s17, 1
    %p127 = por %p125, %p126
    %p128 = scmp.ne.s32.totalorder %s117, %s118
    %p129 = scmp.eq.s32.totalorder %s17, 0
    %p130 = por %p128, %p129
    %p131 = scmp.ne.s32.totalorder %s117, %s118
    %p132 = scmp.eq.s32.totalorder %s18, 1
    %p133 = por %p131, %p132
    %p135 = scmp.ne.s32.totalorder %s118, %s134
    %p136 = scmp.eq.s32.totalorder %s18, 0
    %p137 = por %p135, %p136
    %s139 = sadd.s32 %s138, 1
    %p142 = scmp.eq.s32.totalorder %s12, 1
    %p143 = scmp.ne.s32.totalorder %s138, %s140
    %p144 = scmp.eq.s32.totalorder %s12, 0
    %p145 = por %p143, %p144
    %p146 = scmp.ne.s32.totalorder %s138, %s140
    %p147 = scmp.eq.s32.totalorder %s17, 1
    %p148 = por %p146, %p147
    %p149 = scmp.ne.s32.totalorder %s140, %s141
    %p150 = scmp.eq.s32.totalorder %s17, 0
    %p151 = por %p149, %p150
    %p152 = scmp.ne.s32.totalorder %s140, %s141
    %p153 = scmp.eq.s32.totalorder %s18, 1
    %p154 = por %p152, %p153
    %p156 = scmp.ne.s32.totalorder %s141, %s155
    %p157 = scmp.eq.s32.totalorder %s18, 0
    %p158 = por %p156, %p157
    %s160 = sadd.s32 %s159, 1
    %p163 = scmp.eq.s32.totalorder %s12, 1
    %p164 = scmp.ne.s32.totalorder %s159, %s161
    %p165 = scmp.eq.s32.totalorder %s12, 0
    %p166 = por %p164, %p165
    %p167 = scmp.ne.s32.totalorder %s159, %s161
    %p168 = scmp.eq.s32.totalorder %s17, 1
    %p169 = por %p167, %p168
    %p170 = scmp.ne.s32.totalorder %s161, %s162
    %p171 = scmp.eq.s32.totalorder %s17, 0
    %p172 = por %p170, %p171
    %p173 = scmp.ne.s32.totalorder %s161, %s162
    %p174 = scmp.eq.s32.totalorder %s18, 1
    %p175 = por %p173, %p174
    %p177 = scmp.ne.s32.totalorder %s162, %s176
    %p178 = scmp.eq.s32.totalorder %s18, 0
    %p179 = por %p177, %p178
    %s180 = ssub.s32 %s19, %s31
    %p181 = scmp.eq.s32.totalorder %s180, 0
    %s183 = sadd.s32 %s182, 1
    %s184 = scalar_select %p181, %s182, %s183
    %p187 = pneg %p181
    %p188 = scmp.eq.s32.totalorder %s12, 1
    %p189 = por %p187, %p188
    %p190 = scmp.ne.s32.totalorder %s182, %s185
    %p191 = scmp.eq.s32.totalorder %s12, 0
    %p192 = por %p190, %p191
    %p193 = scmp.ne.s32.totalorder %s182, %s185
    %p194 = scmp.eq.s32.totalorder %s17, 1
    %p195 = por %p193, %p194
    %p196 = scmp.ne.s32.totalorder %s185, %s186
    %p197 = scmp.eq.s32.totalorder %s17, 0
    %p198 = por %p196, %p197
    %p199 = scmp.ne.s32.totalorder %s185, %s186
    %p200 = scmp.eq.s32.totalorder %s18, 1
    %p201 = por %p199, %p200
    %p203 = scmp.ne.s32.totalorder %s186, %s202
    %p204 = scmp.eq.s32.totalorder %s18, 0
    %p205 = por %p203, %p204
    %p206 = scmp.le.s32.totalorder 1, %s12
    %p207 = scmp.lt.s32.totalorder %s12, 3
    %p208 = pnand %p206, %p207
    %p209 = pneg %p208
    // Predicated region
    $region9: #{gnn_encoder_forward.5} parent=5 // pred_check
      _
    $region10: #{gnn_encoder_forward.5} parent=5 // pred_check_branch
      %211 = sbr.rel (%p208) target = $region12
    $region11: #{gnn_encoder_forward.5} parent=5 // pred_region
      %s212 = ssub.s32 %s12, 1
      // Predicated region
      $region13: #{gnn_encoder_forward.5} parent=11 // pred_check
        %p213 = pneg %p78
      $region14: #{gnn_encoder_forward.5} parent=11 // pred_check_branch
        %215 = sbr.rel (%p213) target = $region16
      $region15: #{gnn_encoder_forward.5} parent=11 // pred_region
        %s216 = smul.u32 32, %s22
        %p217 = scmp.lt.s32.totalorder %s216, 31
        %s218 = scalar_select %p217, %s216, 31
        %s219 = smul.addr %s218, 4
        %s220 = scalar_lea.vmem %s1, %s219
        %s221 = smul.u32 32, %s22
      $region16: #{gnn_encoder_forward.5} parent=11 // pred_fallthru
        _
      // Predicated region
      $region17: #{gnn_encoder_forward.5} parent=11 // pred_check
        %p222 = pneg %p151
      $region18: #{gnn_encoder_forward.5} parent=11 // pred_check_branch
        %224 = sbr.rel (%p222) target = $region20
      $region19: #{gnn_encoder_forward.5} parent=11 // pred_region
        _
      $region20: #{gnn_encoder_forward.5} parent=11 // pred_fallthru
        _
      // Predicated region
      $region21: #{gnn_encoder_forward.5} parent=11 // pred_check
        %p225 = pneg %p172
      $region22: #{gnn_encoder_forward.5} parent=11 // pred_check_branch
        %227 = sbr.rel (%p225) target = $region24
      $region23: #{gnn_encoder_forward.5} parent=11 // pred_region
        _
      $region24: #{gnn_encoder_forward.5} parent=11 // pred_fallthru
        _
    $region12: #{gnn_encoder_forward.5} parent=5 // pred_fallthru
      _
    %p228 = scmp.lt.s32.totalorder %s12, 2
    // Predicated region
    $region25: #{gnn_encoder_forward.5} parent=5 // pred_check
      %p229 = pneg %p228
    $region26: #{gnn_encoder_forward.5} parent=5 // pred_check_branch
      %231 = sbr.rel (%p229) target = $region28
    $region27: #{gnn_encoder_forward.5} parent=5 // pred_region
      // Predicated region
      $region29: #{gnn_encoder_forward.5} parent=27 // pred_check
        %p232 = pneg %p46
      $region30: #{gnn_encoder_forward.5} parent=27 // pred_check_branch
        %234 = sbr.rel (%p232) target = $region32
      $region31: #{gnn_encoder_forward.5} parent=27 // pred_region
        %s235 = smul.u32 4, %s19
        %s236 = smul.u32 2, %s20
        %p237 = scmp.lt.s32.totalorder %s235, 7
        %s238 = scalar_select %p237, %s235, 7
        %p239 = scmp.lt.s32.totalorder %s236, 1
        %s240 = scalar_select %p239, %s236, 1
        %s241 = smul.addr %s238, 2
        %s242 = sadd.s32 %s240, %s241
        %s243 = smul.addr %s242, 8
        %s244 = scalar_lea.vmem %s0, %s243
        %s245 = smul.u32 4, %s19
        %s246 = smul.u32 2, %s20
      $region32: #{gnn_encoder_forward.5} parent=27 // pred_fallthru
        _
      // Predicated region
      $region33: #{gnn_encoder_forward.5} parent=27 // pred_check
        %p247 = pneg %p98
      $region34: #{gnn_encoder_forward.5} parent=27 // pred_check_branch
        %249 = sbr.rel (%p247) target = $region36
      $region35: #{gnn_encoder_forward.5} parent=27 // pred_region
        %s250 = smul.u32 16, %s19
        %p251 = scmp.lt.s32.totalorder %s250, 31
        %s252 = scalar_select %p251, %s250, 31
        %s253 = smul.addr %s252, 4
        %s254 = scalar_lea.vmem %s2, %s253
        %s255 = smul.u32 16, %s19
      $region36: #{gnn_encoder_forward.5} parent=27 // pred_fallthru
        _
      // Predicated region
      $region37: #{gnn_encoder_forward.5} parent=27 // pred_check
        %p256 = pneg %p124
      $region38: #{gnn_encoder_forward.5} parent=27 // pred_check_branch
        %258 = sbr.rel (%p256) target = $region40
      $region39: #{gnn_encoder_forward.5} parent=27 // pred_region
        %s259 = smul.u32 16, %s19
        %p260 = scmp.lt.s32.totalorder %s259, 31
        %s261 = scalar_select %p260, %s259, 31
        %s262 = smul.addr %s261, 8
        %s263 = scalar_lea.vmem %s3, %s262
        %s264 = smul.u32 16, %s19
      $region40: #{gnn_encoder_forward.5} parent=27 // pred_fallthru
        _
    $region28: #{gnn_encoder_forward.5} parent=5 // pred_fallthru
      _
    %p265 = scmp.le.s32.totalorder 1, %s12
    %p266 = scmp.lt.s32.totalorder %s12, 3
    %p267 = pnand %p265, %p266
    %p268 = pneg %p267
    // Predicated region
    $region41: #{gnn_encoder_forward.5} parent=5 // pred_check
      _
    $region42: #{gnn_encoder_forward.5} parent=5 // pred_check_branch
      %270 = sbr.rel (%p267) target = $region44
    $region43: #{gnn_encoder_forward.5} parent=5 // pred_region
      %s271 = ssub.s32 %s12, 1
      %s272 = smul.u32 4, %s21
      %s273 = smul.u32 2, %s22
      %p274 = scmp.lt.s32.totalorder %s272, 7
      %s275 = scalar_select %p274, %s272, 7
      %p276 = scmp.lt.s32.totalorder %s273, 1
      %s277 = scalar_select %p276, %s273, 1
      %s278 = smul.addr %s275, 2
      %s279 = sadd.s32 %s277, %s278
      %s280 = smul.addr %s279, 8
      %s281 = scalar_lea.vmem %s0, %s280
      %p282 = pneg %p52
      %p283 = pneg %p49
      %s284 = smul.u32 32, %s22
      %p285 = scmp.lt.s32.totalorder %s284, 31
      %s286 = scalar_select %p285, %s284, 31
      %s287 = smul.addr %s286, 4
      %s288 = scalar_lea.vmem %s1, %s287
      %p289 = pneg %p78
      %p290 = pneg %p75
      %s291 = smul.u32 16, %s21
      %p292 = scmp.lt.s32.totalorder %s291, 31
      %s293 = scalar_select %p292, %s291, 31
      %s294 = smul.addr %s293, 4
      %s295 = scalar_lea.vmem %s2, %s294
      %p296 = pneg %p104
      %p297 = pneg %p101
      %s298 = smul.u32 16, %s21
      %p299 = scmp.lt.s32.totalorder %s298, 31
      %s300 = scalar_select %p299, %s298, 31
      %s301 = smul.addr %s300, 8
      %s302 = scalar_lea.vmem %s3, %s301
      %p303 = pneg %p130
      %p304 = pneg %p127
      %p305 = pneg %p151
      %p306 = pneg %p148
      %p307 = pneg %p172
      %p308 = pneg %p169
      %p309 = pneg %p198
      %p310 = pneg %p195
      %s311 = smul.u32 16, %s21
      %p312 = scmp.lt.s32.totalorder %s311, 31
      %s313 = scalar_select %p312, %s311, 31
      %s314 = smul.addr %s313, 4
      %s315 = scalar_lea.vmem %s6, %s314
      %s316 = smul.u32 4, %s21
      %s317 = smul.u32 2, %s22
      %p318 = scmp.lt.s32.totalorder %s316, 7
      %s319 = scalar_select %p318, %s316, 7
      %p320 = scmp.lt.s32.totalorder %s317, 1
      %s321 = scalar_select %p320, %s317, 1
      %s322 = smul.addr %s319, 2
      %s323 = sadd.s32 %s321, %s322
      %s324 = smul.addr %s323, 8
      %s325 = scalar_lea.vmem %s0, %s324
      %s326 = smul.u32 4, %s21
      %s327 = smul.u32 2, %s22
      %s328 = smul.u32 32, %s22
      %p329 = scmp.lt.s32.totalorder %s328, 31
      %s330 = scalar_select %p329, %s328, 31
      %s331 = smul.addr %s330, 4
      %s332 = scalar_lea.vmem %s1, %s331
      %s333 = smul.u32 32, %s22
      %s334 = smul.u32 16, %s21
      %p335 = scmp.lt.s32.totalorder %s334, 31
      %s336 = scalar_select %p335, %s334, 31
      %s337 = smul.addr %s336, 4
      %s338 = scalar_lea.vmem %s2, %s337
      %s339 = smul.u32 16, %s21
      %s340 = smul.u32 16, %s21
      %p341 = scmp.lt.s32.totalorder %s340, 31
      %s342 = scalar_select %p341, %s340, 31
      %s343 = smul.addr %s342, 8
      %s344 = scalar_lea.vmem %s3, %s343
      %s345 = smul.u32 16, %s21
      %s346 = smul.u32 16, %s21
      %p347 = scmp.lt.s32.totalorder %s346, 31
      %s348 = scalar_select %p347, %s346, 31
      %s349 = smul.addr %s348, 4
      %s350 = scalar_lea.vmem %s6, %s349
      %s351 = smul.u32 16, %s21
      %p353 = scmp.eq.s32.totalorder %s22, 0
      // Predicated region
      $region45: #{gnn_encoder_forward.5} parent=43 // pred_check
        %p354 = pneg %p353
      $region46: #{gnn_encoder_forward.5} parent=43 // pred_check_branch
        %356 = sbr.rel (%p354) target = $region48
      $region47: #{gnn_encoder_forward.5} parent=43 // pred_region
        %357 = vst [vmem:[#allocation2] sm:$0xff] 0.0
        %358 = vst [vmem:[#allocation2 + $0x8] sm:$0xff] 0.0
        %359 = vst [vmem:[#allocation2 + $0x10] sm:$0xff] 0.0
        %360 = vst [vmem:[#allocation2 + $0x18] sm:$0xff] 0.0
        %361 = vst [vmem:[#allocation2 + $0x20] sm:$0xff] 0.0
        %362 = vst [vmem:[#allocation2 + $0x28] sm:$0xff] 0.0
        %363 = vst [vmem:[#allocation2 + $0x30] sm:$0xff] 0.0
        %364 = vst [vmem:[#allocation2 + $0x38] sm:$0xff] 0.0
        %365 = vst [vmem:[#allocation2 + $0x40] sm:$0xff] 0.0
        %366 = vst [vmem:[#allocation2 + $0x48] sm:$0xff] 0.0
        %367 = vst [vmem:[#allocation2 + $0x50] sm:$0xff] 0.0
        %368 = vst [vmem:[#allocation2 + $0x58] sm:$0xff] 0.0
        %369 = vst [vmem:[#allocation2 + $0x60] sm:$0xff] 0.0
        %370 = vst [vmem:[#allocation2 + $0x68] sm:$0xff] 0.0
        %371 = vst [vmem:[#allocation2 + $0x70] sm:$0xff] 0.0
        %372 = vst [vmem:[#allocation2 + $0x78] sm:$0xff] 0.0
        %v373 = vld [vmem:[%s5] sm:$0x1]
        %v374 = vld [vmem:[%s338] sm:$0xf]
        %v375 = vld [vmem:[%s338 + $0x4] sm:$0xf]
        %v376 = vld [vmem:[%s338 + $0x8] sm:$0xf]
        %v377 = vld [vmem:[%s338 + $0xc] sm:$0xf]
        %v378 = vld [vmem:[%s338 + $0x10] sm:$0xf]
        %v379 = vld [vmem:[%s338 + $0x14] sm:$0xf]
        %v380 = vld [vmem:[%s338 + $0x18] sm:$0xf]
        %v381 = vld [vmem:[%s338 + $0x1c] sm:$0xf]
        %v382 = vld [vmem:[%s338 + $0x20] sm:$0xf]
        %v383 = vld [vmem:[%s338 + $0x24] sm:$0xf]
        %v384 = vld [vmem:[%s338 + $0x28] sm:$0xf]
        %v385 = vld [vmem:[%s338 + $0x2c] sm:$0xf]
        %v386 = vld [vmem:[%s338 + $0x30] sm:$0xf]
        %v387 = vld [vmem:[%s338 + $0x34] sm:$0xf]
        %v388 = vld [vmem:[%s338 + $0x38] sm:$0xf]
        %v389 = vld [vmem:[%s338 + $0x3c] sm:$0xf]
        %v390 = vld [vmem:[%s4] sm:$0xf]
        %v391 = vld [vmem:[%s4 + $0x4] sm:$0xf]
        %v392 = vld [vmem:[%s4 + $0x8] sm:$0xf]
        %v393 = vld [vmem:[%s4 + $0xc] sm:$0xf]
        %v394 = vld [vmem:[%s4 + $0x10] sm:$0xf]
        %v395 = vld [vmem:[%s4 + $0x14] sm:$0xf]
        %v396 = vld [vmem:[%s4 + $0x18] sm:$0xf]
        %v397 = vld [vmem:[%s4 + $0x1c] sm:$0xf]
        %v398 = vld [vmem:[%s4 + $0x20] sm:$0xf]
        %v399 = vld [vmem:[%s4 + $0x24] sm:$0xf]
        %v400 = vld [vmem:[%s4 + $0x28] sm:$0xf]
        %v401 = vld [vmem:[%s4 + $0x2c] sm:$0xf]
        %v402 = vld [vmem:[%s4 + $0x30] sm:$0xf]
        %v403 = vld [vmem:[%s4 + $0x34] sm:$0xf]
        %v404 = vld [vmem:[%s4 + $0x38] sm:$0xf]
        %v405 = vld [vmem:[%s4 + $0x3c] sm:$0xf]
        %v422 = vunpack.c.l.b16 %v374
        %v423 = vunpack.c.l.b16 %v375
        %v424 = vunpack.c.l.b16 %v376
        %v425 = vunpack.c.l.b16 %v377
        %v426 = vunpack.c.l.b16 %v378
        %v427 = vunpack.c.l.b16 %v379
        %v428 = vunpack.c.l.b16 %v380
        %v429 = vunpack.c.l.b16 %v381
        %v430 = vunpack.c.l.b16 %v382
        %v431 = vunpack.c.l.b16 %v383
        %v432 = vunpack.c.l.b16 %v384
        %v433 = vunpack.c.l.b16 %v385
        %v434 = vunpack.c.l.b16 %v386
        %v435 = vunpack.c.l.b16 %v387
        %v436 = vunpack.c.l.b16 %v388
        %v437 = vunpack.c.l.b16 %v389
        %v438 = vpack.c.b16 %v423, %v422
        %v439 = vpack.c.b16 %v425, %v424
        %v440 = vpack.c.b16 %v427, %v426
        %v441 = vpack.c.b16 %v429, %v428
        %v442 = vpack.c.b16 %v431, %v430
        %v443 = vpack.c.b16 %v433, %v432
        %v444 = vpack.c.b16 %v435, %v434
        %v445 = vpack.c.b16 %v437, %v436
        %v470 = vunpack.c.l.b16 %v390
        %v471 = vunpack.c.l.b16 %v391
        %v472 = vunpack.c.l.b16 %v392
        %v473 = vunpack.c.l.b16 %v393
        %v474 = vunpack.c.l.b16 %v394
        %v475 = vunpack.c.l.b16 %v395
        %v476 = vunpack.c.l.b16 %v396
        %v477 = vunpack.c.l.b16 %v397
        %v478 = vunpack.c.l.b16 %v398
        %v479 = vunpack.c.l.b16 %v399
        %v480 = vunpack.c.l.b16 %v400
        %v481 = vunpack.c.l.b16 %v401
        %v482 = vunpack.c.l.b16 %v402
        %v483 = vunpack.c.l.b16 %v403
        %v484 = vunpack.c.l.b16 %v404
        %v485 = vunpack.c.l.b16 %v405
        %v486 = vpack.c.b16 %v471, %v470
        %v487 = vpack.c.b16 %v473, %v472
        %v488 = vpack.c.b16 %v475, %v474
        %v489 = vpack.c.b16 %v477, %v476
        %v490 = vpack.c.b16 %v479, %v478
        %v491 = vpack.c.b16 %v481, %v480
        %v492 = vpack.c.b16 %v483, %v482
        %v493 = vpack.c.b16 %v485, %v484
        %502 = vmatprep.subr.bf16.mxu0 0
        %503 = vmatpush1.bf16.msra.mxu0 %v486
        %504 = vmatprep.subr.bf16.mxu0 0
        %505 = vmatpush1.bf16.msra.mxu0 %v487
        %506 = vmatprep.subr.bf16.mxu0 0
        %507 = vmatpush1.bf16.msra.mxu0 %v488
        %508 = vmatprep.subr.bf16.mxu0 0
        %509 = vmatpush1.bf16.msra.mxu0 %v489
        %510 = vmatprep.subr.bf16.mxu0 0
        %511 = vmatpush1.bf16.msra.mxu0 %v490
        %512 = vmatprep.subr.bf16.mxu0 0
        %513 = vmatpush1.bf16.msra.mxu0 %v491
        %514 = vmatprep.subr.bf16.mxu0 0
        %515 = vmatpush1.bf16.msra.mxu0 %v492
        %516 = vmatprep.subr.bf16.mxu0 0
        %517 = vmatpush1.bf16.msra.mxu0 %v493
        %518 = vmatprep.subr.bf16.mxu0 0
        %519 = vmatpush1.bf16.msra.mxu0 0
        %520 = vmatprep.subr.bf16.mxu0 0
        %521 = vmatpush1.bf16.msra.mxu0 0
        %522 = vmatprep.subr.bf16.mxu0 0
        %523 = vmatpush1.bf16.msra.mxu0 0
        %524 = vmatprep.subr.bf16.mxu0 0
        %525 = vmatpush1.bf16.msra.mxu0 0
        %526 = vmatprep.subr.bf16.mxu0 0
        %527 = vmatpush1.bf16.msra.mxu0 0
        %528 = vmatprep.subr.bf16.mxu0 0
        %529 = vmatpush1.bf16.msra.mxu0 0
        %530 = vmatprep.subr.bf16.mxu0 0
        %531 = vmatpush1.bf16.msra.mxu0 0
        %532 = vmatprep.subr.bf16.mxu0 0
        %533 = vmatpush1.bf16.msra.mxu0 0
        %534 = vmatprep.mubr.bf16.mxu0 0
        %535 = vmatmul.mubr.bf16.gmra.mrb[0].mxu0 %v438
        %v536 = vpop.f32.mrb[0].mxu0
        %v537 = vadd.f32 0.0, %v536
        %v538 = vpop.f32.mrb[0].mxu0
        %v539 = vpop.f32.mrb[0].mxu0
        %v540 = vadd.f32 0.0, %v539
        %v541 = vpop.f32.mrb[0].mxu0
        %542 = vmatprep.mubr.bf16.mxu0 0
        %543 = vmatmul.mubr.bf16.gmra.mrb[0].mxu0 %v439
        %v544 = vpop.f32.mrb[0].mxu0
        %v545 = vadd.f32 0.0, %v544
        %v546 = vpop.f32.mrb[0].mxu0
        %v547 = vpop.f32.mrb[0].mxu0
        %v548 = vadd.f32 0.0, %v547
        %v549 = vpop.f32.mrb[0].mxu0
        %550 = vmatprep.mubr.bf16.mxu0 0
        %551 = vmatmul.mubr.bf16.gmra.mrb[0].mxu0 %v440
        %v552 = vpop.f32.mrb[0].mxu0
        %v553 = vadd.f32 0.0, %v552
        %v554 = vpop.f32.mrb[0].mxu0
        %v555 = vpop.f32.mrb[0].mxu0
        %v556 = vadd.f32 0.0, %v555
        %v557 = vpop.f32.mrb[0].mxu0
        %558 = vmatprep.mubr.bf16.mxu0 0
        %559 = vmatmul.mubr.bf16.gmra.mrb[0].mxu0 %v441
        %v560 = vpop.f32.mrb[0].mxu0
        %v561 = vadd.f32 0.0, %v560
        %v562 = vpop.f32.mrb[0].mxu0
        %v563 = vpop.f32.mrb[0].mxu0
        %v564 = vadd.f32 0.0, %v563
        %v565 = vpop.f32.mrb[0].mxu0
        %566 = vmatprep.mubr.bf16.mxu0 0
        %567 = vmatmul.mubr.bf16.gmra.mrb[0].mxu0 %v442
        %v568 = vpop.f32.mrb[0].mxu0
        %v569 = vadd.f32 0.0, %v568
        %v570 = vpop.f32.mrb[0].mxu0
        %v571 = vpop.f32.mrb[0].mxu0
        %v572 = vadd.f32 0.0, %v571
        %v573 = vpop.f32.mrb[0].mxu0
        %574 = vmatprep.mubr.bf16.mxu0 0
        %575 = vmatmul.mubr.bf16.gmra.mrb[0].mxu0 %v443
        %v576 = vpop.f32.mrb[0].mxu0
        %v577 = vadd.f32 0.0, %v576
        %v578 = vpop.f32.mrb[0].mxu0
        %v579 = vpop.f32.mrb[0].mxu0
        %v580 = vadd.f32 0.0, %v579
        %v581 = vpop.f32.mrb[0].mxu0
        %582 = vmatprep.mubr.bf16.mxu0 0
        %583 = vmatmul.mubr.bf16.gmra.mrb[0].mxu0 %v444
        %v584 = vpop.f32.mrb[0].mxu0
        %v585 = vadd.f32 0.0, %v584
        %v586 = vpop.f32.mrb[0].mxu0
        %v587 = vpop.f32.mrb[0].mxu0
        %v588 = vadd.f32 0.0, %v587
        %v589 = vpop.f32.mrb[0].mxu0
        %590 = vmatprep.mubr.bf16.mxu0 0
        %591 = vmatmul.mubr.bf16.gmra.mrb[0].mxu0 %v445
        %v592 = vpop.f32.mrb[0].mxu0
        %v593 = vadd.f32 0.0, %v592
        %v594 = vpop.f32.mrb[0].mxu0
        %v595 = vpop.f32.mrb[0].mxu0
        %v596 = vadd.f32 0.0, %v595
        %v597 = vpop.f32.mrb[0].mxu0
        %598 = vdwg.mxu0
        %v600 = vlaneseq
        %v601 = vshrl.u32 %v600, 7
        %v602 = vsub.s32 0, %v601
        %v603 = vrot.slane %v373, %v602
        %v605 = vadd.f32 %v603, %v537
        %v606 = vadd.f32 %v603, %v540
        %v607 = vadd.f32 %v603, %v545
        %v608 = vadd.f32 %v603, %v548
        %v609 = vadd.f32 %v603, %v553
        %v610 = vadd.f32 %v603, %v556
        %v611 = vadd.f32 %v603, %v561
        %v612 = vadd.f32 %v603, %v564
        %v613 = vadd.f32 %v603, %v569
        %v614 = vadd.f32 %v603, %v572
        %v615 = vadd.f32 %v603, %v577
        %v616 = vadd.f32 %v603, %v580
        %v617 = vadd.f32 %v603, %v585
        %v618 = vadd.f32 %v603, %v588
        %v619 = vadd.f32 %v603, %v593
        %v620 = vadd.f32 %v603, %v596
        %621 = vst [vmem:[#allocation3] sm:$0xff] %v605
        %622 = vst [vmem:[#allocation3 + $0x8] sm:$0xff] %v606
        %623 = vst [vmem:[#allocation3 + $0x10] sm:$0xff] %v607
        %624 = vst [vmem:[#allocation3 + $0x18] sm:$0xff] %v608
        %625 = vst [vmem:[#allocation3 + $0x20] sm:$0xff] %v609
        %626 = vst [vmem:[#allocation3 + $0x28] sm:$0xff] %v610
        %627 = vst [vmem:[#allocation3 + $0x30] sm:$0xff] %v611
        %628 = vst [vmem:[#allocation3 + $0x38] sm:$0xff] %v612
        %629 = vst [vmem:[#allocation3 + $0x40] sm:$0xff] %v613
        %630 = vst [vmem:[#allocation3 + $0x48] sm:$0xff] %v614
        %631 = vst [vmem:[#allocation3 + $0x50] sm:$0xff] %v615
        %632 = vst [vmem:[#allocation3 + $0x58] sm:$0xff] %v616
        %633 = vst [vmem:[#allocation3 + $0x60] sm:$0xff] %v617
        %634 = vst [vmem:[#allocation3 + $0x68] sm:$0xff] %v618
        %635 = vst [vmem:[#allocation3 + $0x70] sm:$0xff] %v619
        %636 = vst [vmem:[#allocation3 + $0x78] sm:$0xff] %v620
      $region48: #{gnn_encoder_forward.5} parent=43 // pred_fallthru
        _
      %v637 = vld [vmem:[#allocation2] sm:$0xff]
      %v638 = vld [vmem:[#allocation2 + $0x8] sm:$0xff]
      %v639 = vld [vmem:[#allocation2 + $0x10] sm:$0xff]
      %v640 = vld [vmem:[#allocation2 + $0x18] sm:$0xff]
      %v641 = vld [vmem:[#allocation2 + $0x20] sm:$0xff]
      %v642 = vld [vmem:[#allocation2 + $0x28] sm:$0xff]
      %v643 = vld [vmem:[#allocation2 + $0x30] sm:$0xff]
      %v644 = vld [vmem:[#allocation2 + $0x38] sm:$0xff]
      %v645 = vld [vmem:[#allocation2 + $0x40] sm:$0xff]
      %v646 = vld [vmem:[#allocation2 + $0x48] sm:$0xff]
      %v647 = vld [vmem:[#allocation2 + $0x50] sm:$0xff]
      %v648 = vld [vmem:[#allocation2 + $0x58] sm:$0xff]
      %v649 = vld [vmem:[#allocation2 + $0x60] sm:$0xff]
      %v650 = vld [vmem:[#allocation2 + $0x68] sm:$0xff]
      %v651 = vld [vmem:[#allocation2 + $0x70] sm:$0xff]
      %v652 = vld [vmem:[#allocation2 + $0x78] sm:$0xff]
      %v653 = vld [vmem:[%s325] sm:$0xff]
      %v654 = vld [vmem:[%s325 + $0x8] sm:$0xff]
      %v655 = vld [vmem:[%s325 + $0x10] sm:$0xff]
      %v656 = vld [vmem:[%s325 + $0x18] sm:$0xff]
      %v657 = vld [vmem:[%s325 + $0x20] sm:$0xff]
      %v658 = vld [vmem:[%s325 + $0x28] sm:$0xff]
      %v659 = vld [vmem:[%s325 + $0x30] sm:$0xff]
      %v660 = vld [vmem:[%s325 + $0x38] sm:$0xff]
      %v661 = vunpack.c.l.s8.bf16 %v653
      %v662 = vunpack.c.l.s8.bf16 %v654
      %v663 = vunpack.c.h.s8.bf16 %v653
      %v664 = vunpack.c.h.s8.bf16 %v654
      %v665 = vunpack.c.l.s8.bf16 %v655
      %v666 = vunpack.c.l.s8.bf16 %v656
      %v667 = vunpack.c.h.s8.bf16 %v655
      %v668 = vunpack.c.h.s8.bf16 %v656
      %v669 = vunpack.c.l.s8.bf16 %v657
      %v670 = vunpack.c.l.s8.bf16 %v658
      %v671 = vunpack.c.h.s8.bf16 %v657
      %v672 = vunpack.c.h.s8.bf16 %v658
      %v673 = vunpack.c.l.s8.bf16 %v659
      %v674 = vunpack.c.l.s8.bf16 %v660
      %v675 = vunpack.c.h.s8.bf16 %v659
      %v676 = vunpack.c.h.s8.bf16 %v660
      %v677 = vld [vmem:[%s332] sm:$0xf]
      %v678 = vld [vmem:[%s332 + $0x4] sm:$0xf]
      %v679 = vld [vmem:[%s332 + $0x8] sm:$0xf]
      %v680 = vld [vmem:[%s332 + $0xc] sm:$0xf]
      %v681 = vld [vmem:[%s332 + $0x10] sm:$0xf]
      %v682 = vld [vmem:[%s332 + $0x14] sm:$0xf]
      %v683 = vld [vmem:[%s332 + $0x18] sm:$0xf]
      %v684 = vld [vmem:[%s332 + $0x1c] sm:$0xf]
      %v685 = vld [vmem:[%s332 + $0x20] sm:$0xf]
      %v686 = vld [vmem:[%s332 + $0x24] sm:$0xf]
      %v687 = vld [vmem:[%s332 + $0x28] sm:$0xf]
      %v688 = vld [vmem:[%s332 + $0x2c] sm:$0xf]
      %v689 = vld [vmem:[%s332 + $0x30] sm:$0xf]
      %v690 = vld [vmem:[%s332 + $0x34] sm:$0xf]
      %v691 = vld [vmem:[%s332 + $0x38] sm:$0xf]
      %v692 = vld [vmem:[%s332 + $0x3c] sm:$0xf]
      %v693 = vld [vmem:[%s332 + $0x40] sm:$0xf]
      %v694 = vld [vmem:[%s332 + $0x44] sm:$0xf]
      %v695 = vld [vmem:[%s332 + $0x48] sm:$0xf]
      %v696 = vld [vmem:[%s332 + $0x4c] sm:$0xf]
      %v697 = vld [vmem:[%s332 + $0x50] sm:$0xf]
      %v698 = vld [vmem:[%s332 + $0x54] sm:$0xf]
      %v699 = vld [vmem:[%s332 + $0x58] sm:$0xf]
      %v700 = vld [vmem:[%s332 + $0x5c] sm:$0xf]
      %v701 = vld [vmem:[%s332 + $0x60] sm:$0xf]
      %v702 = vld [vmem:[%s332 + $0x64] sm:$0xf]
      %v703 = vld [vmem:[%s332 + $0x68] sm:$0xf]
      %v704 = vld [vmem:[%s332 + $0x6c] sm:$0xf]
      %v705 = vld [vmem:[%s332 + $0x70] sm:$0xf]
      %v706 = vld [vmem:[%s332 + $0x74] sm:$0xf]
      %v707 = vld [vmem:[%s332 + $0x78] sm:$0xf]
      %v708 = vld [vmem:[%s332 + $0x7c] sm:$0xf]
      %v741 = vunpack.c.l.b16 %v677
      %v742 = vunpack.c.l.b16 %v678
      %v743 = vunpack.c.l.b16 %v679
      %v744 = vunpack.c.l.b16 %v680
      %v745 = vunpack.c.l.b16 %v681
      %v746 = vunpack.c.l.b16 %v682
      %v747 = vunpack.c.l.b16 %v683
      %v748 = vunpack.c.l.b16 %v684
      %v749 = vunpack.c.l.b16 %v685
      %v750 = vunpack.c.l.b16 %v686
      %v751 = vunpack.c.l.b16 %v687
      %v752 = vunpack.c.l.b16 %v688
      %v753 = vunpack.c.l.b16 %v689
      %v754 = vunpack.c.l.b16 %v690
      %v755 = vunpack.c.l.b16 %v691
      %v756 = vunpack.c.l.b16 %v692
      %v757 = vunpack.c.l.b16 %v693
      %v758 = vunpack.c.l.b16 %v694
      %v759 = vunpack.c.l.b16 %v695
      %v760 = vunpack.c.l.b16 %v696
      %v761 = vunpack.c.l.b16 %v697
      %v762 = vunpack.c.l.b16 %v698
      %v763 = vunpack.c.l.b16 %v699
      %v764 = vunpack.c.l.b16 %v700
      %v765 = vunpack.c.l.b16 %v701
      %v766 = vunpack.c.l.b16 %v702
      %v767 = vunpack.c.l.b16 %v703
      %v768 = vunpack.c.l.b16 %v704
      %v769 = vunpack.c.l.b16 %v705
      %v770 = vunpack.c.l.b16 %v706
      %v771 = vunpack.c.l.b16 %v707
      %v772 = vunpack.c.l.b16 %v708
      %v773 = vpack.c.b16 %v742, %v741
      %v774 = vpack.c.b16 %v744, %v743
      %v775 = vpack.c.b16 %v746, %v745
      %v776 = vpack.c.b16 %v748, %v747
      %v777 = vpack.c.b16 %v750, %v749
      %v778 = vpack.c.b16 %v752, %v751
      %v779 = vpack.c.b16 %v754, %v753
      %v780 = vpack.c.b16 %v756, %v755
      %v781 = vpack.c.b16 %v758, %v757
      %v782 = vpack.c.b16 %v760, %v759
      %v783 = vpack.c.b16 %v762, %v761
      %v784 = vpack.c.b16 %v764, %v763
      %v785 = vpack.c.b16 %v766, %v765
      %v786 = vpack.c.b16 %v768, %v767
      %v787 = vpack.c.b16 %v770, %v769
      %v788 = vpack.c.b16 %v772, %v771
      %805 = vmatprep.subr.bf16.mxu0 0
      %806 = vmatpush1.bf16.msra.mxu0 %v773
      %807 = vmatprep.subr.bf16.mxu0 0
      %808 = vmatpush1.bf16.msra.mxu0 %v774
      %809 = vmatprep.subr.bf16.mxu0 0
      %810 = vmatpush1.bf16.msra.mxu0 %v775
      %811 = vmatprep.subr.bf16.mxu0 0
      %812 = vmatpush1.bf16.msra.mxu0 %v776
      %813 = vmatprep.subr.bf16.mxu0 0
      %814 = vmatpush1.bf16.msra.mxu0 %v777
      %815 = vmatprep.subr.bf16.mxu0 0
      %816 = vmatpush1.bf16.msra.mxu0 %v778
      %817 = vmatprep.subr.bf16.mxu0 0
      %818 = vmatpush1.bf16.msra.mxu0 %v779
      %819 = vmatprep.subr.bf16.mxu0 0
      %820 = vmatpush1.bf16.msra.mxu0 %v780
      %821 = vmatprep.subr.bf16.mxu0 0
      %822 = vmatpush1.bf16.msra.mxu0 %v781
      %823 = vmatprep.subr.bf16.mxu0 0
      %824 = vmatpush1.bf16.msra.mxu0 %v782
      %825 = vmatprep.subr.bf16.mxu0 0
      %826 = vmatpush1.bf16.msra.mxu0 %v783
      %827 = vmatprep.subr.bf16.mxu0 0
      %828 = vmatpush1.bf16.msra.mxu0 %v784
      %829 = vmatprep.subr.bf16.mxu0 0
      %830 = vmatpush1.bf16.msra.mxu0 %v785
      %831 = vmatprep.subr.bf16.mxu0 0
      %832 = vmatpush1.bf16.msra.mxu0 %v786
      %833 = vmatprep.subr.bf16.mxu0 0
      %834 = vmatpush1.bf16.msra.mxu0 %v787
      %835 = vmatprep.subr.bf16.mxu0 0
      %836 = vmatpush1.bf16.msra.mxu0 %v788
      %837 = vmatprep.mubr.bf16.mxu0 %v662
      %838 = vmatmul.mubr.bf16.gmra.mrb[0].mxu0 %v661
      %v839 = vpop.f32.mrb[0].mxu0
      %v840 = vadd.f32 0.0, %v839
      %v841 = vpop.f32.mrb[0].mxu0
      %v842 = vpop.f32.mrb[0].mxu0
      %v843 = vadd.f32 0.0, %v842
      %v844 = vpop.f32.mrb[0].mxu0
      %845 = vmatprep.mubr.bf16.mxu0 %v664
      %846 = vmatmul.mubr.bf16.gmra.mrb[0].mxu0 %v663
      %v847 = vpop.f32.mrb[0].mxu0
      %v848 = vadd.f32 0.0, %v847
      %v849 = vpop.f32.mrb[0].mxu0
      %v850 = vpop.f32.mrb[0].mxu0
      %v851 = vadd.f32 0.0, %v850
      %v852 = vpop.f32.mrb[0].mxu0
      %853 = vmatprep.mubr.bf16.mxu0 %v666
      %854 = vmatmul.mubr.bf16.gmra.mrb[0].mxu0 %v665
      %v855 = vpop.f32.mrb[0].mxu0
      %v856 = vadd.f32 0.0, %v855
      %v857 = vpop.f32.mrb[0].mxu0
      %v858 = vpop.f32.mrb[0].mxu0
      %v859 = vadd.f32 0.0, %v858
      %v860 = vpop.f32.mrb[0].mxu0
      %861 = vmatprep.mubr.bf16.mxu0 %v668
      %862 = vmatmul.mubr.bf16.gmra.mrb[0].mxu0 %v667
      %v863 = vpop.f32.mrb[0].mxu0
      %v864 = vadd.f32 0.0, %v863
      %v865 = vpop.f32.mrb[0].mxu0
      %v866 = vpop.f32.mrb[0].mxu0
      %v867 = vadd.f32 0.0, %v866
      %v868 = vpop.f32.mrb[0].mxu0
      %869 = vmatprep.mubr.bf16.mxu0 %v670
      %870 = vmatmul.mubr.bf16.gmra.mrb[0].mxu0 %v669
      %v871 = vpop.f32.mrb[0].mxu0
      %v872 = vadd.f32 0.0, %v871
      %v873 = vpop.f32.mrb[0].mxu0
      %v874 = vpop.f32.mrb[0].mxu0
      %v875 = vadd.f32 0.0, %v874
      %v876 = vpop.f32.mrb[0].mxu0
      %877 = vmatprep.mubr.bf16.mxu0 %v672
      %878 = vmatmul.mubr.bf16.gmra.mrb[0].mxu0 %v671
      %v879 = vpop.f32.mrb[0].mxu0
      %v880 = vadd.f32 0.0, %v879
      %v881 = vpop.f32.mrb[0].mxu0
      %v882 = vpop.f32.mrb[0].mxu0
      %v883 = vadd.f32 0.0, %v882
      %v884 = vpop.f32.mrb[0].mxu0
      %885 = vmatprep.mubr.bf16.mxu0 %v674
      %886 = vmatmul.mubr.bf16.gmra.mrb[0].mxu0 %v673
      %v887 = vpop.f32.mrb[0].mxu0
      %v888 = vadd.f32 0.0, %v887
      %v889 = vpop.f32.mrb[0].mxu0
      %v890 = vpop.f32.mrb[0].mxu0
      %v891 = vadd.f32 0.0, %v890
      %v892 = vpop.f32.mrb[0].mxu0
      %893 = vmatprep.mubr.bf16.mxu0 %v676
      %894 = vmatmul.mubr.bf16.gmra.mrb[0].mxu0 %v675
      %v895 = vpop.f32.mrb[0].mxu0
      %v896 = vadd.f32 0.0, %v895
      %v897 = vpop.f32.mrb[0].mxu0
      %v898 = vpop.f32.mrb[0].mxu0
      %v899 = vadd.f32 0.0, %v898
      %v900 = vpop.f32.mrb[0].mxu0
      %901 = vdwg.mxu0
      %v902 = vadd.f32 %v637, %v840
      %v903 = vadd.f32 %v638, %v843
      %v904 = vadd.f32 %v639, %v848
      %v905 = vadd.f32 %v640, %v851
      %v906 = vadd.f32 %v641, %v856
      %v907 = vadd.f32 %v642, %v859
      %v908 = vadd.f32 %v643, %v864
      %v909 = vadd.f32 %v644, %v867
      %v910 = vadd.f32 %v645, %v872
      %v911 = vadd.f32 %v646, %v875
      %v912 = vadd.f32 %v647, %v880
      %v913 = vadd.f32 %v648, %v883
      %v914 = vadd.f32 %v649, %v888
      %v915 = vadd.f32 %v650, %v891
      %v916 = vadd.f32 %v651, %v896
      %v917 = vadd.f32 %v652, %v899
      %918 = vst [vmem:[#allocation2] sm:$0xff] %v902
      %919 = vst [vmem:[#allocation2 + $0x8] sm:$0xff] %v903
      %920 = vst [vmem:[#allocation2 + $0x10] sm:$0xff] %v904
      %921 = vst [vmem:[#allocation2 + $0x18] sm:$0xff] %v905
      %922 = vst [vmem:[#allocation2 + $0x20] sm:$0xff] %v906
      %923 = vst [vmem:[#allocation2 + $0x28] sm:$0xff] %v907
      %924 = vst [vmem:[#allocation2 + $0x30] sm:$0xff] %v908
      %925 = vst [vmem:[#allocation2 + $0x38] sm:$0xff] %v909
      %926 = vst [vmem:[#allocation2 + $0x40] sm:$0xff] %v910
      %927 = vst [vmem:[#allocation2 + $0x48] sm:$0xff] %v911
      %928 = vst [vmem:[#allocation2 + $0x50] sm:$0xff] %v912
      %929 = vst [vmem:[#allocation2 + $0x58] sm:$0xff] %v913
      %930 = vst [vmem:[#allocation2 + $0x60] sm:$0xff] %v914
      %931 = vst [vmem:[#allocation2 + $0x68] sm:$0xff] %v915
      %932 = vst [vmem:[#allocation2 + $0x70] sm:$0xff] %v916
      %933 = vst [vmem:[#allocation2 + $0x78] sm:$0xff] %v917
      // Predicated region
      $region49: #{gnn_encoder_forward.5} parent=43 // pred_check
        %p934 = pneg %p353
      $region50: #{gnn_encoder_forward.5} parent=43 // pred_check_branch
        %936 = sbr.rel (%p934) target = $region52
      $region51: #{gnn_encoder_forward.5} parent=43 // pred_region
        %v937 = vld [vmem:[#allocation2] sm:$0xff]
        %v938 = vld [vmem:[#allocation2 + $0x8] sm:$0xff]
        %v939 = vld [vmem:[#allocation2 + $0x10] sm:$0xff]
        %v940 = vld [vmem:[#allocation2 + $0x18] sm:$0xff]
        %v941 = vld [vmem:[#allocation2 + $0x20] sm:$0xff]
        %v942 = vld [vmem:[#allocation2 + $0x28] sm:$0xff]
        %v943 = vld [vmem:[#allocation2 + $0x30] sm:$0xff]
        %v944 = vld [vmem:[#allocation2 + $0x38] sm:$0xff]
        %v945 = vld [vmem:[#allocation2 + $0x40] sm:$0xff]
        %v946 = vld [vmem:[#allocation2 + $0x48] sm:$0xff]
        %v947 = vld [vmem:[#allocation2 + $0x50] sm:$0xff]
        %v948 = vld [vmem:[#allocation2 + $0x58] sm:$0xff]
        %v949 = vld [vmem:[#allocation2 + $0x60] sm:$0xff]
        %v950 = vld [vmem:[#allocation2 + $0x68] sm:$0xff]
        %v951 = vld [vmem:[#allocation2 + $0x70] sm:$0xff]
        %v952 = vld [vmem:[#allocation2 + $0x78] sm:$0xff]
        %v953 = vld [vmem:[%s344] sm:$0xff]
        %v954 = vld [vmem:[%s344 + $0x8] sm:$0xff]
        %v955 = vld [vmem:[%s344 + $0x10] sm:$0xff]
        %v956 = vld [vmem:[%s344 + $0x18] sm:$0xff]
        %v957 = vld [vmem:[%s344 + $0x20] sm:$0xff]
        %v958 = vld [vmem:[%s344 + $0x28] sm:$0xff]
        %v959 = vld [vmem:[%s344 + $0x30] sm:$0xff]
        %v960 = vld [vmem:[%s344 + $0x38] sm:$0xff]
        %v961 = vld [vmem:[%s344 + $0x40] sm:$0xff]
        %v962 = vld [vmem:[%s344 + $0x48] sm:$0xff]
        %v963 = vld [vmem:[%s344 + $0x50] sm:$0xff]
        %v964 = vld [vmem:[%s344 + $0x58] sm:$0xff]
        %v965 = vld [vmem:[%s344 + $0x60] sm:$0xff]
        %v966 = vld [vmem:[%s344 + $0x68] sm:$0xff]
        %v967 = vld [vmem:[%s344 + $0x70] sm:$0xff]
        %v968 = vld [vmem:[%s344 + $0x78] sm:$0xff]
        %970 = vset.pattern.permute.xlu0 0
        %971 = vperm.xlu0 %970, %v953
        %v972 = vpop.permute.xlu0 %971
        %975 = vset.pattern.permute.xlu0 0
        %976 = vperm.xlu0 %975, %v954
        %v977 = vpop.permute.xlu0 %976
        %980 = vset.pattern.permute.xlu0 0
        %981 = vperm.xlu0 %980, %v955
        %v982 = vpop.permute.xlu0 %981
        %985 = vset.pattern.permute.xlu0 0
        %986 = vperm.xlu0 %985, %v956
        %v987 = vpop.permute.xlu0 %986
        %990 = vset.pattern.permute.xlu0 0
        %991 = vperm.xlu0 %990, %v957
        %v992 = vpop.permute.xlu0 %991
        %995 = vset.pattern.permute.xlu0 0
        %996 = vperm.xlu0 %995, %v958
        %v997 = vpop.permute.xlu0 %996
        %1000 = vset.pattern.permute.xlu0 0
        %1001 = vperm.xlu0 %1000, %v959
        %v1002 = vpop.permute.xlu0 %1001
        %1005 = vset.pattern.permute.xlu0 0
        %1006 = vperm.xlu0 %1005, %v960
        %v1007 = vpop.permute.xlu0 %1006
        %1010 = vset.pattern.permute.xlu0 0
        %1011 = vperm.xlu0 %1010, %v961
        %v1012 = vpop.permute.xlu0 %1011
        %1015 = vset.pattern.permute.xlu0 0
        %1016 = vperm.xlu0 %1015, %v962
        %v1017 = vpop.permute.xlu0 %1016
        %1020 = vset.pattern.permute.xlu0 0
        %1021 = vperm.xlu0 %1020, %v963
        %v1022 = vpop.permute.xlu0 %1021
        %1025 = vset.pattern.permute.xlu0 0
        %1026 = vperm.xlu0 %1025, %v964
        %v1027 = vpop.permute.xlu0 %1026
        %1030 = vset.pattern.permute.xlu0 0
        %1031 = vperm.xlu0 %1030, %v965
        %v1032 = vpop.permute.xlu0 %1031
        %1035 = vset.pattern.permute.xlu0 0
        %1036 = vperm.xlu0 %1035, %v966
        %v1037 = vpop.permute.xlu0 %1036
        %1040 = vset.pattern.permute.xlu0 0
        %1041 = vperm.xlu0 %1040, %v967
        %v1042 = vpop.permute.xlu0 %1041
        %1045 = vset.pattern.permute.xlu0 0
        %1046 = vperm.xlu0 %1045, %v968
        %v1047 = vpop.permute.xlu0 %1046
        %v1049 = vmul.f32 %v937, %v972
        %v1050 = vmul.f32 %v938, %v977
        %v1051 = vmul.f32 %v939, %v982
        %v1052 = vmul.f32 %v940, %v987
        %v1053 = vmul.f32 %v941, %v992
        %v1054 = vmul.f32 %v942, %v997
        %v1055 = vmul.f32 %v943, %v1002
        %v1056 = vmul.f32 %v944, %v1007
        %v1057 = vmul.f32 %v945, %v1012
        %v1058 = vmul.f32 %v946, %v1017
        %v1059 = vmul.f32 %v947, %v1022
        %v1060 = vmul.f32 %v948, %v1027
        %v1061 = vmul.f32 %v949, %v1032
        %v1062 = vmul.f32 %v950, %v1037
        %v1063 = vmul.f32 %v951, %v1042
        %v1064 = vmul.f32 %v952, %v1047
        %v1065 = vld [vmem:[#allocation3] sm:$0xff]
        %v1066 = vld [vmem:[#allocation3 + $0x8] sm:$0xff]
        %v1067 = vld [vmem:[#allocation3 + $0x10] sm:$0xff]
        %v1068 = vld [vmem:[#allocation3 + $0x18] sm:$0xff]
        %v1069 = vld [vmem:[#allocation3 + $0x20] sm:$0xff]
        %v1070 = vld [vmem:[#allocation3 + $0x28] sm:$0xff]
        %v1071 = vld [vmem:[#allocation3 + $0x30] sm:$0xff]
        %v1072 = vld [vmem:[#allocation3 + $0x38] sm:$0xff]
        %v1073 = vld [vmem:[#allocation3 + $0x40] sm:$0xff]
        %v1074 = vld [vmem:[#allocation3 + $0x48] sm:$0xff]
        %v1075 = vld [vmem:[#allocation3 + $0x50] sm:$0xff]
        %v1076 = vld [vmem:[#allocation3 + $0x58] sm:$0xff]
        %v1077 = vld [vmem:[#allocation3 + $0x60] sm:$0xff]
        %v1078 = vld [vmem:[#allocation3 + $0x68] sm:$0xff]
        %v1079 = vld [vmem:[#allocation3 + $0x70] sm:$0xff]
        %v1080 = vld [vmem:[#allocation3 + $0x78] sm:$0xff]
        %v1081 = vadd.f32 %v1049, %v1065
        %v1082 = vadd.f32 %v1050, %v1066
        %v1083 = vadd.f32 %v1051, %v1067
        %v1084 = vadd.f32 %v1052, %v1068
        %v1085 = vadd.f32 %v1053, %v1069
        %v1086 = vadd.f32 %v1054, %v1070
        %v1087 = vadd.f32 %v1055, %v1071
        %v1088 = vadd.f32 %v1056, %v1072
        %v1089 = vadd.f32 %v1057, %v1073
        %v1090 = vadd.f32 %v1058, %v1074
        %v1091 = vadd.f32 %v1059, %v1075
        %v1092 = vadd.f32 %v1060, %v1076
        %v1093 = vadd.f32 %v1061, %v1077
        %v1094 = vadd.f32 %v1062, %v1078
        %v1095 = vadd.f32 %v1063, %v1079
        %v1096 = vadd.f32 %v1064, %v1080
        %v1097 = vmul.f32 %v1081, %v1081
        %v1098 = vmul.f32 %v1082, %v1082
        %v1099 = vmul.f32 %v1083, %v1083
        %v1100 = vmul.f32 %v1084, %v1084
        %v1101 = vmul.f32 %v1085, %v1085
        %v1102 = vmul.f32 %v1086, %v1086
        %v1103 = vmul.f32 %v1087, %v1087
        %v1104 = vmul.f32 %v1088, %v1088
        %v1105 = vmul.f32 %v1089, %v1089
        %v1106 = vmul.f32 %v1090, %v1090
        %v1107 = vmul.f32 %v1091, %v1091
        %v1108 = vmul.f32 %v1092, %v1092
        %v1109 = vmul.f32 %v1093, %v1093
        %v1110 = vmul.f32 %v1094, %v1094
        %v1111 = vmul.f32 %v1095, %v1095
        %v1112 = vmul.f32 %v1096, %v1096
        %1113 = vadd.xlane.f32.xlu0 %v1097
        %v1114 = vpop.xlane.xlu0 %1113
        %1115 = vadd.xlane.f32.xlu0 %v1098
        %v1116 = vpop.xlane.xlu0 %1115
        %1117 = vadd.xlane.f32.xlu0 %v1099
        %v1118 = vpop.xlane.xlu0 %1117
        %1119 = vadd.xlane.f32.xlu0 %v1100
        %v1120 = vpop.xlane.xlu0 %1119
        %1121 = vadd.xlane.f32.xlu0 %v1101
        %v1122 = vpop.xlane.xlu0 %1121
        %1123 = vadd.xlane.f32.xlu0 %v1102
        %v1124 = vpop.xlane.xlu0 %1123
        %1125 = vadd.xlane.f32.xlu0 %v1103
        %v1126 = vpop.xlane.xlu0 %1125
        %1127 = vadd.xlane.f32.xlu0 %v1104
        %v1128 = vpop.xlane.xlu0 %1127
        %1129 = vadd.xlane.f32.xlu0 %v1105
        %v1130 = vpop.xlane.xlu0 %1129
        %1131 = vadd.xlane.f32.xlu0 %v1106
        %v1132 = vpop.xlane.xlu0 %1131
        %1133 = vadd.xlane.f32.xlu0 %v1107
        %v1134 = vpop.xlane.xlu0 %1133
        %1135 = vadd.xlane.f32.xlu0 %v1108
        %v1136 = vpop.xlane.xlu0 %1135
        %1137 = vadd.xlane.f32.xlu0 %v1109
        %v1138 = vpop.xlane.xlu0 %1137
        %1139 = vadd.xlane.f32.xlu0 %v1110
        %v1140 = vpop.xlane.xlu0 %1139
        %1141 = vadd.xlane.f32.xlu0 %v1111
        %v1142 = vpop.xlane.xlu0 %1141
        %1143 = vadd.xlane.f32.xlu0 %v1112
        %v1144 = vpop.xlane.xlu0 %1143
        %v1145 = vmax.f32 %v1114, 1e-24
        %v1146 = vmax.f32 %v1116, 1e-24
        %v1147 = vmax.f32 %v1118, 1e-24
        %v1148 = vmax.f32 %v1120, 1e-24
        %v1149 = vmax.f32 %v1122, 1e-24
        %v1150 = vmax.f32 %v1124, 1e-24
        %v1151 = vmax.f32 %v1126, 1e-24
        %v1152 = vmax.f32 %v1128, 1e-24
        %v1153 = vmax.f32 %v1130, 1e-24
        %v1154 = vmax.f32 %v1132, 1e-24
        %v1155 = vmax.f32 %v1134, 1e-24
        %v1156 = vmax.f32 %v1136, 1e-24
        %v1157 = vmax.f32 %v1138, 1e-24
        %v1158 = vmax.f32 %v1140, 1e-24
        %v1159 = vmax.f32 %v1142, 1e-24
        %v1160 = vmax.f32 %v1144, 1e-24
        %v1161 = vrsqrt.pop %v1145
        %v1162 = vrsqrt.pop %v1146
        %v1163 = vrsqrt.pop %v1147
        %v1164 = vrsqrt.pop %v1148
        %v1165 = vrsqrt.pop %v1149
        %v1166 = vrsqrt.pop %v1150
        %v1167 = vrsqrt.pop %v1151
        %v1168 = vrsqrt.pop %v1152
        %v1169 = vrsqrt.pop %v1153
        %v1170 = vrsqrt.pop %v1154
        %v1171 = vrsqrt.pop %v1155
        %v1172 = vrsqrt.pop %v1156
        %v1173 = vrsqrt.pop %v1157
        %v1174 = vrsqrt.pop %v1158
        %v1175 = vrsqrt.pop %v1159
        %v1176 = vrsqrt.pop %v1160
        %v1177 = vmul.f32 %v1081, %v1161
        %v1178 = vmul.f32 %v1082, %v1162
        %v1179 = vmul.f32 %v1083, %v1163
        %v1180 = vmul.f32 %v1084, %v1164
        %v1181 = vmul.f32 %v1085, %v1165
        %v1182 = vmul.f32 %v1086, %v1166
        %v1183 = vmul.f32 %v1087, %v1167
        %v1184 = vmul.f32 %v1088, %v1168
        %v1185 = vmul.f32 %v1089, %v1169
        %v1186 = vmul.f32 %v1090, %v1170
        %v1187 = vmul.f32 %v1091, %v1171
        %v1188 = vmul.f32 %v1092, %v1172
        %v1189 = vmul.f32 %v1093, %v1173
        %v1190 = vmul.f32 %v1094, %v1174
        %v1191 = vmul.f32 %v1095, %v1175
        %v1192 = vmul.f32 %v1096, %v1176
        %v1193 = vmax.f32 %v1177, 0.0
        %v1194 = vmax.f32 %v1178, 0.0
        %v1195 = vmax.f32 %v1179, 0.0
        %v1196 = vmax.f32 %v1180, 0.0
        %v1197 = vmax.f32 %v1181, 0.0
        %v1198 = vmax.f32 %v1182, 0.0
        %v1199 = vmax.f32 %v1183, 0.0
        %v1200 = vmax.f32 %v1184, 0.0
        %v1201 = vmax.f32 %v1185, 0.0
        %v1202 = vmax.f32 %v1186, 0.0
        %v1203 = vmax.f32 %v1187, 0.0
        %v1204 = vmax.f32 %v1188, 0.0
        %v1205 = vmax.f32 %v1189, 0.0
        %v1206 = vmax.f32 %v1190, 0.0
        %v1207 = vmax.f32 %v1191, 0.0
        %v1208 = vmax.f32 %v1192, 0.0
        %v1209 = vpack.c.bf16 %v1194, %v1193
        %v1210 = vpack.c.bf16 %v1196, %v1195
        %v1211 = vpack.c.bf16 %v1198, %v1197
        %v1212 = vpack.c.bf16 %v1200, %v1199
        %v1213 = vpack.c.bf16 %v1202, %v1201
        %v1214 = vpack.c.bf16 %v1204, %v1203
        %v1215 = vpack.c.bf16 %v1206, %v1205
        %v1216 = vpack.c.bf16 %v1208, %v1207
        %v1225 = vunpack.c.l.b16 %v1209
        %v1226 = vunpack.c.h.b16 %v1209
        %v1227 = vunpack.c.l.b16 %v1210
        %v1228 = vunpack.c.h.b16 %v1210
        %v1229 = vunpack.c.l.b16 %v1211
        %v1230 = vunpack.c.h.b16 %v1211
        %v1231 = vunpack.c.l.b16 %v1212
        %v1232 = vunpack.c.h.b16 %v1212
        %v1233 = vunpack.c.l.b16 %v1213
        %v1234 = vunpack.c.h.b16 %v1213
        %v1235 = vunpack.c.l.b16 %v1214
        %v1236 = vunpack.c.h.b16 %v1214
        %v1237 = vunpack.c.l.b16 %v1215
        %v1238 = vunpack.c.h.b16 %v1215
        %v1239 = vunpack.c.l.b16 %v1216
        %v1240 = vunpack.c.h.b16 %v1216
        %v1241 = vpack.c.b16 %v1225, %v1225
        %v1242 = vpack.c.b16 %v1226, %v1226
        %v1243 = vpack.c.b16 %v1227, %v1227
        %v1244 = vpack.c.b16 %v1228, %v1228
        %v1245 = vpack.c.b16 %v1229, %v1229
        %v1246 = vpack.c.b16 %v1230, %v1230
        %v1247 = vpack.c.b16 %v1231, %v1231
        %v1248 = vpack.c.b16 %v1232, %v1232
        %v1249 = vpack.c.b16 %v1233, %v1233
        %v1250 = vpack.c.b16 %v1234, %v1234
        %v1251 = vpack.c.b16 %v1235, %v1235
        %v1252 = vpack.c.b16 %v1236, %v1236
        %v1253 = vpack.c.b16 %v1237, %v1237
        %v1254 = vpack.c.b16 %v1238, %v1238
        %v1255 = vpack.c.b16 %v1239, %v1239
        %v1256 = vpack.c.b16 %v1240, %v1240
        %1273 = vst [vmem:[%s350] sm:$0xf] %v1241
        %1274 = vst [vmem:[%s350 + $0x4] sm:$0xf] %v1242
        %1275 = vst [vmem:[%s350 + $0x8] sm:$0xf] %v1243
        %1276 = vst [vmem:[%s350 + $0xc] sm:$0xf] %v1244
        %1277 = vst [vmem:[%s350 + $0x10] sm:$0xf] %v1245
        %1278 = vst [vmem:[%s350 + $0x14] sm:$0xf] %v1246
        %1279 = vst [vmem:[%s350 + $0x18] sm:$0xf] %v1247
        %1280 = vst [vmem:[%s350 + $0x1c] sm:$0xf] %v1248
        %1281 = vst [vmem:[%s350 + $0x20] sm:$0xf] %v1249
        %1282 = vst [vmem:[%s350 + $0x24] sm:$0xf] %v1250
        %1283 = vst [vmem:[%s350 + $0x28] sm:$0xf] %v1251
        %1284 = vst [vmem:[%s350 + $0x2c] sm:$0xf] %v1252
        %1285 = vst [vmem:[%s350 + $0x30] sm:$0xf] %v1253
        %1286 = vst [vmem:[%s350 + $0x34] sm:$0xf] %v1254
        %1287 = vst [vmem:[%s350 + $0x38] sm:$0xf] %v1255
        %1288 = vst [vmem:[%s350 + $0x3c] sm:$0xf] %v1256
      $region52: #{gnn_encoder_forward.5} parent=43 // pred_fallthru
        _
      %s1289 = smul.u32 16, %s21
      %p1290 = scmp.lt.s32.totalorder %s1289, 31
      %s1291 = scalar_select %p1290, %s1289, 31
      %s1292 = smul.addr %s1291, 4
      %s1293 = scalar_lea.vmem %s6, %s1292
      // Predicated region
      $region53: #{gnn_encoder_forward.5} parent=43 // pred_check
        %p1294 = pneg %p195
      $region54: #{gnn_encoder_forward.5} parent=43 // pred_check_branch
        %1296 = sbr.rel (%p1294) target = $region56
      $region55: #{gnn_encoder_forward.5} parent=43 // pred_region
        %s1297 = smul.u32 16, %s21
      $region56: #{gnn_encoder_forward.5} parent=43 // pred_fallthru
        _
    $region44: #{gnn_encoder_forward.5} parent=5 // pred_fallthru
      _
    %p1298 = scmp.le.s32.totalorder 2, %s12
    // Predicated region
    $region57: #{gnn_encoder_forward.5} parent=5 // pred_check
      %p1299 = pneg %p1298
    $region58: #{gnn_encoder_forward.5} parent=5 // pred_check_branch
      %1301 = sbr.rel (%p1299) target = $region60
    $region59: #{gnn_encoder_forward.5} parent=5 // pred_region
      %s1302 = ssub.s32 %s12, 2
      // Predicated region
      $region61: #{gnn_encoder_forward.5} parent=59 // pred_check
        %p1303 = pneg %p201
      $region62: #{gnn_encoder_forward.5} parent=59 // pred_check_branch
        %1305 = sbr.rel (%p1303) target = $region64
      $region63: #{gnn_encoder_forward.5} parent=59 // pred_region
        %s1306 = smul.u32 16, %s23
        %p1307 = scmp.lt.s32.totalorder %s1306, 31
        %s1308 = scalar_select %p1307, %s1306, 31
        %s1309 = smul.addr %s1308, 4
        %s1310 = scalar_lea.vmem %s6, %s1309
      $region64: #{gnn_encoder_forward.5} parent=59 // pred_fallthru
        _
    $region60: #{gnn_encoder_forward.5} parent=5 // pred_fallthru
      _
  $region6: #{gnn_encoder_forward.5} parent=0 // loop_footer
    %s16 = sadd.s32 1, %s12
  $region7: #{gnn_encoder_forward.5} parent=0 // loop_footer_branch
    %11 = sbr.rel target = $region3
  $region8: #{gnn_encoder_forward.5} parent=0 // loop_exit
    _

// kernel: gnn_encoder_forward.7
$region0: #{gnn_encoder_forward.7}
  #allocation0 [shape = 'u32[]', space=smem, size = 0x4, offset = 0x4, fixed_abs, tag = 'smem constant byte address 0x4 - core index']
  #allocation1 [shape = 'u32[144,128]{1,0:T(1,128)}', space=vmem, size = 0x12000, scoped, tag = 'internal scratch']
  #allocation2 [shape = 'f32[128,128]{1,0:T(8,128)}', space=vmem, size = 0x10000, scoped, tag = 'scratch operand']
  #allocation3 [shape = 'f32[128,128]{1,0:T(8,128)}', space=vmem, size = 0x10000, scoped, tag = 'scratch operand']
  %s0 = inlined_call_operand.vmem [shape: s8[256,256], index: 0, kind: input, shape index: {}]
  %s1 = inlined_call_operand.vmem [shape: bf16[256,128], index: 1, kind: input, shape index: {}]
  %s2 = inlined_call_operand.vmem [shape: bf16[256,128], index: 2, kind: input, shape index: {}]
  %s3 = inlined_call_operand.vmem [shape: f32[256,1], index: 3, kind: input, shape index: {}]
  %s4 = inlined_call_operand.vmem [shape: bf16[128,128], index: 4, kind: input, shape index: {}]
  %s5 = inlined_call_operand.vmem [shape: f32[1,128], index: 5, kind: input, shape index: {}]
  %s6 = inlined_call_operand.vmem [shape: f32[256,128], index: 6, kind: output, shape index: {}]
  %s7 = sld [smem:[#allocation0]]
  $region65: #{gnn_encoder_forward.7} parent=0
    _
  %s9 = ssub.s32 1, %s7
  %s10 = scalar_select 0, %s9, %s7
  loop: start=0, step=1, limit=4
  $region2: #{gnn_encoder_forward.7} parent=0 // loop_pre_header
    _
  $region3: #{gnn_encoder_forward.7} parent=0 // loop_header
    %s12 = sphi 0, %s16
    %p13 = scmp.ge.s32.totalorder %s12, 4
    %s19 = sphi 0, %s31
    %s20 = sphi 0, %s27
    %s21 = sphi 0, %s19
    %s22 = sphi 0, %s20
    %s23 = sphi 0, %s21
    %s24 = sphi 0, %s22
    %s36 = sphi 0, %s38
    %s39 = sphi 0, %s36
    %s40 = sphi 0, %s39
    %s56 = sphi 0, %s40
    %s62 = sphi 0, %s64
    %s65 = sphi 0, %s62
    %s66 = sphi 0, %s65
    %s82 = sphi 0, %s66
    %s88 = sphi 0, %s90
    %s91 = sphi 0, %s88
    %s92 = sphi 0, %s91
    %s108 = sphi 0, %s92
    %s114 = sphi 0, %s116
    %s117 = sphi 0, %s114
    %s118 = sphi 0, %s117
    %s134 = sphi 0, %s118
    %s138 = sphi 0, %s138
    %s140 = sphi 0, %s138
    %s141 = sphi 0, %s140
    %s155 = sphi 0, %s141
    %s159 = sphi 0, %s159
    %s161 = sphi 0, %s159
    %s162 = sphi 0, %s161
    %s176 = sphi 0, %s162
    %s182 = sphi 0, %s184
    %s185 = sphi 0, %s182
    %s186 = sphi 0, %s185
    %s202 = sphi 0, %s186
  $region4: #{gnn_encoder_forward.7} parent=0 // loop_header_branch
    %15 = sbr.rel (%p13) target = $region8
  $region5: #{gnn_encoder_forward.7} parent=0 // loop_body
    %s17 = ssub.s32 %s12, 1
    %s18 = ssub.s32 %s12, 2
    %s25 = sadd.s32 1, %s20
    %p26 = scmp.ge.s32.totalorder %s25, 1
    %s27 = scalar_select %p26, 0, %s25
    %s28 = sadd.s32 1, %s19
    %s29 = scalar_select %p26, %s28, %s19
    %p30 = scmp.ge.s32.totalorder %s29, 2
    %s31 = scalar_select %p30, 0, %s29
    %s32 = ssub.s32 %s19, %s31
    %s33 = ssub.s32 %s20, %s27
    %s34 = sor.u32 %s32, %s33
    %p35 = scmp.eq.s32.totalorder %s34, 0
    %s37 = sadd.s32 %s36, 1
    %s38 = scalar_select %p35, %s36, %s37
    %p41 = pneg %p35
    %p42 = scmp.eq.s32.totalorder %s12, 1
    %p43 = por %p41, %p42
    %p44 = scmp.ne.s32.totalorder %s36, %s39
    %p45 = scmp.eq.s32.totalorder %s12, 0
    %p46 = por %p44, %p45
    %p47 = scmp.ne.s32.totalorder %s36, %s39
    %p48 = scmp.eq.s32.totalorder %s17, 1
    %p49 = por %p47, %p48
    %p50 = scmp.ne.s32.totalorder %s39, %s40
    %p51 = scmp.eq.s32.totalorder %s17, 0
    %p52 = por %p50, %p51
    %p53 = scmp.ne.s32.totalorder %s39, %s40
    %p54 = scmp.eq.s32.totalorder %s18, 1
    %p55 = por %p53, %p54
    %p57 = scmp.ne.s32.totalorder %s40, %s56
    %p58 = scmp.eq.s32.totalorder %s18, 0
    %p59 = por %p57, %p58
    %s60 = ssub.s32 %s20, %s27
    %p61 = scmp.eq.s32.totalorder %s60, 0
    %s63 = sadd.s32 %s62, 1
    %s64 = scalar_select %p61, %s62, %s63
    %p67 = pneg %p61
    %p68 = scmp.eq.s32.totalorder %s12, 1
    %p69 = por %p67, %p68
    %p70 = scmp.ne.s32.totalorder %s62, %s65
    %p71 = scmp.eq.s32.totalorder %s12, 0
    %p72 = por %p70, %p71
    %p73 = scmp.ne.s32.totalorder %s62, %s65
    %p74 = scmp.eq.s32.totalorder %s17, 1
    %p75 = por %p73, %p74
    %p76 = scmp.ne.s32.totalorder %s65, %s66
    %p77 = scmp.eq.s32.totalorder %s17, 0
    %p78 = por %p76, %p77
    %p79 = scmp.ne.s32.totalorder %s65, %s66
    %p80 = scmp.eq.s32.totalorder %s18, 1
    %p81 = por %p79, %p80
    %p83 = scmp.ne.s32.totalorder %s66, %s82
    %p84 = scmp.eq.s32.totalorder %s18, 0
    %p85 = por %p83, %p84
    %s86 = ssub.s32 %s19, %s31
    %p87 = scmp.eq.s32.totalorder %s86, 0
    %s89 = sadd.s32 %s88, 1
    %s90 = scalar_select %p87, %s88, %s89
    %p93 = pneg %p87
    %p94 = scmp.eq.s32.totalorder %s12, 1
    %p95 = por %p93, %p94
    %p96 = scmp.ne.s32.totalorder %s88, %s91
    %p97 = scmp.eq.s32.totalorder %s12, 0
    %p98 = por %p96, %p97
    %p99 = scmp.ne.s32.totalorder %s88, %s91
    %p100 = scmp.eq.s32.totalorder %s17, 1
    %p101 = por %p99, %p100
    %p102 = scmp.ne.s32.totalorder %s91, %s92
    %p103 = scmp.eq.s32.totalorder %s17, 0
    %p104 = por %p102, %p103
    %p105 = scmp.ne.s32.totalorder %s91, %s92
    %p106 = scmp.eq.s32.totalorder %s18, 1
    %p107 = por %p105, %p106
    %p109 = scmp.ne.s32.totalorder %s92, %s108
    %p110 = scmp.eq.s32.totalorder %s18, 0
    %p111 = por %p109, %p110
    %s112 = ssub.s32 %s19, %s31
    %p113 = scmp.eq.s32.totalorder %s112, 0
    %s115 = sadd.s32 %s114, 1
    %s116 = scalar_select %p113, %s114, %s115
    %p119 = pneg %p113
    %p120 = scmp.eq.s32.totalorder %s12, 1
    %p121 = por %p119, %p120
    %p122 = scmp.ne.s32.totalorder %s114, %s117
    %p123 = scmp.eq.s32.totalorder %s12, 0
    %p124 = por %p122, %p123
    %p125 = scmp.ne.s32.totalorder %s114, %s117
    %p126 = scmp.eq.s32.totalorder %s17, 1
    %p127 = por %p125, %p126
    %p128 = scmp.ne.s32.totalorder %s117, %s118
    %p129 = scmp.eq.s32.totalorder %s17, 0
    %p130 = por %p128, %p129
    %p131 = scmp.ne.s32.totalorder %s117, %s118
    %p132 = scmp.eq.s32.totalorder %s18, 1
    %p133 = por %p131, %p132
    %p135 = scmp.ne.s32.totalorder %s118, %s134
    %p136 = scmp.eq.s32.totalorder %s18, 0
    %p137 = por %p135, %p136
    %s139 = sadd.s32 %s138, 1
    %p142 = scmp.eq.s32.totalorder %s12, 1
    %p143 = scmp.ne.s32.totalorder %s138, %s140
    %p144 = scmp.eq.s32.totalorder %s12, 0
    %p145 = por %p143, %p144
    %p146 = scmp.ne.s32.totalorder %s138, %s140
    %p147 = scmp.eq.s32.totalorder %s17, 1
    %p148 = por %p146, %p147
    %p149 = scmp.ne.s32.totalorder %s140, %s141
    %p150 = scmp.eq.s32.totalorder %s17, 0
    %p151 = por %p149, %p150
    %p152 = scmp.ne.s32.totalorder %s140, %s141
    %p153 = scmp.eq.s32.totalorder %s18, 1
    %p154 = por %p152, %p153
    %p156 = scmp.ne.s32.totalorder %s141, %s155
    %p157 = scmp.eq.s32.totalorder %s18, 0
    %p158 = por %p156, %p157
    %s160 = sadd.s32 %s159, 1
    %p163 = scmp.eq.s32.totalorder %s12, 1
    %p164 = scmp.ne.s32.totalorder %s159, %s161
    %p165 = scmp.eq.s32.totalorder %s12, 0
    %p166 = por %p164, %p165
    %p167 = scmp.ne.s32.totalorder %s159, %s161
    %p168 = scmp.eq.s32.totalorder %s17, 1
    %p169 = por %p167, %p168
    %p170 = scmp.ne.s32.totalorder %s161, %s162
    %p171 = scmp.eq.s32.totalorder %s17, 0
    %p172 = por %p170, %p171
    %p173 = scmp.ne.s32.totalorder %s161, %s162
    %p174 = scmp.eq.s32.totalorder %s18, 1
    %p175 = por %p173, %p174
    %p177 = scmp.ne.s32.totalorder %s162, %s176
    %p178 = scmp.eq.s32.totalorder %s18, 0
    %p179 = por %p177, %p178
    %s180 = ssub.s32 %s19, %s31
    %p181 = scmp.eq.s32.totalorder %s180, 0
    %s183 = sadd.s32 %s182, 1
    %s184 = scalar_select %p181, %s182, %s183
    %p187 = pneg %p181
    %p188 = scmp.eq.s32.totalorder %s12, 1
    %p189 = por %p187, %p188
    %p190 = scmp.ne.s32.totalorder %s182, %s185
    %p191 = scmp.eq.s32.totalorder %s12, 0
    %p192 = por %p190, %p191
    %p193 = scmp.ne.s32.totalorder %s182, %s185
    %p194 = scmp.eq.s32.totalorder %s17, 1
    %p195 = por %p193, %p194
    %p196 = scmp.ne.s32.totalorder %s185, %s186
    %p197 = scmp.eq.s32.totalorder %s17, 0
    %p198 = por %p196, %p197
    %p199 = scmp.ne.s32.totalorder %s185, %s186
    %p200 = scmp.eq.s32.totalorder %s18, 1
    %p201 = por %p199, %p200
    %p203 = scmp.ne.s32.totalorder %s186, %s202
    %p204 = scmp.eq.s32.totalorder %s18, 0
    %p205 = por %p203, %p204
    %p206 = scmp.le.s32.totalorder 1, %s12
    %p207 = scmp.lt.s32.totalorder %s12, 3
    %p208 = pnand %p206, %p207
    %p209 = pneg %p208
    // Predicated region
    $region9: #{gnn_encoder_forward.7} parent=5 // pred_check
      _
    $region10: #{gnn_encoder_forward.7} parent=5 // pred_check_branch
      %211 = sbr.rel (%p208) target = $region12
    $region11: #{gnn_encoder_forward.7} parent=5 // pred_region
      %s212 = ssub.s32 %s12, 1
      // Predicated region
      $region13: #{gnn_encoder_forward.7} parent=11 // pred_check
        %p213 = pneg %p78
      $region14: #{gnn_encoder_forward.7} parent=11 // pred_check_branch
        %215 = sbr.rel (%p213) target = $region16
      $region15: #{gnn_encoder_forward.7} parent=11 // pred_region
        %s216 = smul.u32 32, %s22
        %p217 = scmp.lt.s32.totalorder %s216, 31
        %s218 = scalar_select %p217, %s216, 31
        %s219 = smul.addr %s218, 4
        %s220 = scalar_lea.vmem %s1, %s219
        %s221 = smul.u32 32, %s22
      $region16: #{gnn_encoder_forward.7} parent=11 // pred_fallthru
        _
      // Predicated region
      $region17: #{gnn_encoder_forward.7} parent=11 // pred_check
        %p222 = pneg %p151
      $region18: #{gnn_encoder_forward.7} parent=11 // pred_check_branch
        %224 = sbr.rel (%p222) target = $region20
      $region19: #{gnn_encoder_forward.7} parent=11 // pred_region
        _
      $region20: #{gnn_encoder_forward.7} parent=11 // pred_fallthru
        _
      // Predicated region
      $region21: #{gnn_encoder_forward.7} parent=11 // pred_check
        %p225 = pneg %p172
      $region22: #{gnn_encoder_forward.7} parent=11 // pred_check_branch
        %227 = sbr.rel (%p225) target = $region24
      $region23: #{gnn_encoder_forward.7} parent=11 // pred_region
        _
      $region24: #{gnn_encoder_forward.7} parent=11 // pred_fallthru
        _
    $region12: #{gnn_encoder_forward.7} parent=5 // pred_fallthru
      _
    %p228 = scmp.lt.s32.totalorder %s12, 2
    // Predicated region
    $region25: #{gnn_encoder_forward.7} parent=5 // pred_check
      %p229 = pneg %p228
    $region26: #{gnn_encoder_forward.7} parent=5 // pred_check_branch
      %231 = sbr.rel (%p229) target = $region28
    $region27: #{gnn_encoder_forward.7} parent=5 // pred_region
      // Predicated region
      $region29: #{gnn_encoder_forward.7} parent=27 // pred_check
        %p232 = pneg %p46
      $region30: #{gnn_encoder_forward.7} parent=27 // pred_check_branch
        %234 = sbr.rel (%p232) target = $region32
      $region31: #{gnn_encoder_forward.7} parent=27 // pred_region
        %s235 = smul.u32 4, %s19
        %s236 = smul.u32 2, %s20
        %p237 = scmp.lt.s32.totalorder %s235, 7
        %s238 = scalar_select %p237, %s235, 7
        %p239 = scmp.lt.s32.totalorder %s236, 1
        %s240 = scalar_select %p239, %s236, 1
        %s241 = smul.addr %s238, 2
        %s242 = sadd.s32 %s240, %s241
        %s243 = smul.addr %s242, 8
        %s244 = scalar_lea.vmem %s0, %s243
        %s245 = smul.u32 4, %s19
        %s246 = smul.u32 2, %s20
      $region32: #{gnn_encoder_forward.7} parent=27 // pred_fallthru
        _
      // Predicated region
      $region33: #{gnn_encoder_forward.7} parent=27 // pred_check
        %p247 = pneg %p98
      $region34: #{gnn_encoder_forward.7} parent=27 // pred_check_branch
        %249 = sbr.rel (%p247) target = $region36
      $region35: #{gnn_encoder_forward.7} parent=27 // pred_region
        %s250 = smul.u32 16, %s19
        %p251 = scmp.lt.s32.totalorder %s250, 31
        %s252 = scalar_select %p251, %s250, 31
        %s253 = smul.addr %s252, 4
        %s254 = scalar_lea.vmem %s2, %s253
        %s255 = smul.u32 16, %s19
      $region36: #{gnn_encoder_forward.7} parent=27 // pred_fallthru
        _
      // Predicated region
      $region37: #{gnn_encoder_forward.7} parent=27 // pred_check
        %p256 = pneg %p124
      $region38: #{gnn_encoder_forward.7} parent=27 // pred_check_branch
        %258 = sbr.rel (%p256) target = $region40
      $region39: #{gnn_encoder_forward.7} parent=27 // pred_region
        %s259 = smul.u32 16, %s19
        %p260 = scmp.lt.s32.totalorder %s259, 31
        %s261 = scalar_select %p260, %s259, 31
        %s262 = smul.addr %s261, 8
        %s263 = scalar_lea.vmem %s3, %s262
        %s264 = smul.u32 16, %s19
      $region40: #{gnn_encoder_forward.7} parent=27 // pred_fallthru
        _
    $region28: #{gnn_encoder_forward.7} parent=5 // pred_fallthru
      _
    %p265 = scmp.le.s32.totalorder 1, %s12
    %p266 = scmp.lt.s32.totalorder %s12, 3
    %p267 = pnand %p265, %p266
    %p268 = pneg %p267
    // Predicated region
    $region41: #{gnn_encoder_forward.7} parent=5 // pred_check
      _
    $region42: #{gnn_encoder_forward.7} parent=5 // pred_check_branch
      %270 = sbr.rel (%p267) target = $region44
    $region43: #{gnn_encoder_forward.7} parent=5 // pred_region
      %s271 = ssub.s32 %s12, 1
      %s272 = smul.u32 4, %s21
      %s273 = smul.u32 2, %s22
      %p274 = scmp.lt.s32.totalorder %s272, 7
      %s275 = scalar_select %p274, %s272, 7
      %p276 = scmp.lt.s32.totalorder %s273, 1
      %s277 = scalar_select %p276, %s273, 1
      %s278 = smul.addr %s275, 2
      %s279 = sadd.s32 %s277, %s278
      %s280 = smul.addr %s279, 8
      %s281 = scalar_lea.vmem %s0, %s280
      %p282 = pneg %p52
      %p283 = pneg %p49
      %s284 = smul.u32 32, %s22
      %p285 = scmp.lt.s32.totalorder %s284, 31
      %s286 = scalar_select %p285, %s284, 31
      %s287 = smul.addr %s286, 4
      %s288 = scalar_lea.vmem %s1, %s287
      %p289 = pneg %p78
      %p290 = pneg %p75
      %s291 = smul.u32 16, %s21
      %p292 = scmp.lt.s32.totalorder %s291, 31
      %s293 = scalar_select %p292, %s291, 31
      %s294 = smul.addr %s293, 4
      %s295 = scalar_lea.vmem %s2, %s294
      %p296 = pneg %p104
      %p297 = pneg %p101
      %s298 = smul.u32 16, %s21
      %p299 = scmp.lt.s32.totalorder %s298, 31
      %s300 = scalar_select %p299, %s298, 31
      %s301 = smul.addr %s300, 8
      %s302 = scalar_lea.vmem %s3, %s301
      %p303 = pneg %p130
      %p304 = pneg %p127
      %p305 = pneg %p151
      %p306 = pneg %p148
      %p307 = pneg %p172
      %p308 = pneg %p169
      %p309 = pneg %p198
      %p310 = pneg %p195
      %s311 = smul.u32 16, %s21
      %p312 = scmp.lt.s32.totalorder %s311, 31
      %s313 = scalar_select %p312, %s311, 31
      %s314 = smul.addr %s313, 8
      %s315 = scalar_lea.vmem %s6, %s314
      %s316 = smul.u32 4, %s21
      %s317 = smul.u32 2, %s22
      %p318 = scmp.lt.s32.totalorder %s316, 7
      %s319 = scalar_select %p318, %s316, 7
      %p320 = scmp.lt.s32.totalorder %s317, 1
      %s321 = scalar_select %p320, %s317, 1
      %s322 = smul.addr %s319, 2
      %s323 = sadd.s32 %s321, %s322
      %s324 = smul.addr %s323, 8
      %s325 = scalar_lea.vmem %s0, %s324
      %s326 = smul.u32 4, %s21
      %s327 = smul.u32 2, %s22
      %s328 = smul.u32 32, %s22
      %p329 = scmp.lt.s32.totalorder %s328, 31
      %s330 = scalar_select %p329, %s328, 31
      %s331 = smul.addr %s330, 4
      %s332 = scalar_lea.vmem %s1, %s331
      %s333 = smul.u32 32, %s22
      %s334 = smul.u32 16, %s21
      %p335 = scmp.lt.s32.totalorder %s334, 31
      %s336 = scalar_select %p335, %s334, 31
      %s337 = smul.addr %s336, 4
      %s338 = scalar_lea.vmem %s2, %s337
      %s339 = smul.u32 16, %s21
      %s340 = smul.u32 16, %s21
      %p341 = scmp.lt.s32.totalorder %s340, 31
      %s342 = scalar_select %p341, %s340, 31
      %s343 = smul.addr %s342, 8
      %s344 = scalar_lea.vmem %s3, %s343
      %s345 = smul.u32 16, %s21
      %s346 = smul.u32 16, %s21
      %p347 = scmp.lt.s32.totalorder %s346, 31
      %s348 = scalar_select %p347, %s346, 31
      %s349 = smul.addr %s348, 8
      %s350 = scalar_lea.vmem %s6, %s349
      %s351 = smul.u32 16, %s21
      %p353 = scmp.eq.s32.totalorder %s22, 0
      // Predicated region
      $region45: #{gnn_encoder_forward.7} parent=43 // pred_check
        %p354 = pneg %p353
      $region46: #{gnn_encoder_forward.7} parent=43 // pred_check_branch
        %356 = sbr.rel (%p354) target = $region48
      $region47: #{gnn_encoder_forward.7} parent=43 // pred_region
        %357 = vst [vmem:[#allocation2] sm:$0xff] 0.0
        %358 = vst [vmem:[#allocation2 + $0x8] sm:$0xff] 0.0
        %359 = vst [vmem:[#allocation2 + $0x10] sm:$0xff] 0.0
        %360 = vst [vmem:[#allocation2 + $0x18] sm:$0xff] 0.0
        %361 = vst [vmem:[#allocation2 + $0x20] sm:$0xff] 0.0
        %362 = vst [vmem:[#allocation2 + $0x28] sm:$0xff] 0.0
        %363 = vst [vmem:[#allocation2 + $0x30] sm:$0xff] 0.0
        %364 = vst [vmem:[#allocation2 + $0x38] sm:$0xff] 0.0
        %365 = vst [vmem:[#allocation2 + $0x40] sm:$0xff] 0.0
        %366 = vst [vmem:[#allocation2 + $0x48] sm:$0xff] 0.0
        %367 = vst [vmem:[#allocation2 + $0x50] sm:$0xff] 0.0
        %368 = vst [vmem:[#allocation2 + $0x58] sm:$0xff] 0.0
        %369 = vst [vmem:[#allocation2 + $0x60] sm:$0xff] 0.0
        %370 = vst [vmem:[#allocation2 + $0x68] sm:$0xff] 0.0
        %371 = vst [vmem:[#allocation2 + $0x70] sm:$0xff] 0.0
        %372 = vst [vmem:[#allocation2 + $0x78] sm:$0xff] 0.0
        %v373 = vld [vmem:[%s5] sm:$0x1]
        %v374 = vld [vmem:[%s338] sm:$0xf]
        %v375 = vld [vmem:[%s338 + $0x4] sm:$0xf]
        %v376 = vld [vmem:[%s338 + $0x8] sm:$0xf]
        %v377 = vld [vmem:[%s338 + $0xc] sm:$0xf]
        %v378 = vld [vmem:[%s338 + $0x10] sm:$0xf]
        %v379 = vld [vmem:[%s338 + $0x14] sm:$0xf]
        %v380 = vld [vmem:[%s338 + $0x18] sm:$0xf]
        %v381 = vld [vmem:[%s338 + $0x1c] sm:$0xf]
        %v382 = vld [vmem:[%s338 + $0x20] sm:$0xf]
        %v383 = vld [vmem:[%s338 + $0x24] sm:$0xf]
        %v384 = vld [vmem:[%s338 + $0x28] sm:$0xf]
        %v385 = vld [vmem:[%s338 + $0x2c] sm:$0xf]
        %v386 = vld [vmem:[%s338 + $0x30] sm:$0xf]
        %v387 = vld [vmem:[%s338 + $0x34] sm:$0xf]
        %v388 = vld [vmem:[%s338 + $0x38] sm:$0xf]
        %v389 = vld [vmem:[%s338 + $0x3c] sm:$0xf]
        %v390 = vld [vmem:[%s4] sm:$0xf]
        %v391 = vld [vmem:[%s4 + $0x4] sm:$0xf]
        %v392 = vld [vmem:[%s4 + $0x8] sm:$0xf]
        %v393 = vld [vmem:[%s4 + $0xc] sm:$0xf]
        %v394 = vld [vmem:[%s4 + $0x10] sm:$0xf]
        %v395 = vld [vmem:[%s4 + $0x14] sm:$0xf]
        %v396 = vld [vmem:[%s4 + $0x18] sm:$0xf]
        %v397 = vld [vmem:[%s4 + $0x1c] sm:$0xf]
        %v398 = vld [vmem:[%s4 + $0x20] sm:$0xf]
        %v399 = vld [vmem:[%s4 + $0x24] sm:$0xf]
        %v400 = vld [vmem:[%s4 + $0x28] sm:$0xf]
        %v401 = vld [vmem:[%s4 + $0x2c] sm:$0xf]
        %v402 = vld [vmem:[%s4 + $0x30] sm:$0xf]
        %v403 = vld [vmem:[%s4 + $0x34] sm:$0xf]
        %v404 = vld [vmem:[%s4 + $0x38] sm:$0xf]
        %v405 = vld [vmem:[%s4 + $0x3c] sm:$0xf]
        %v422 = vunpack.c.l.b16 %v374
        %v423 = vunpack.c.l.b16 %v375
        %v424 = vunpack.c.l.b16 %v376
        %v425 = vunpack.c.l.b16 %v377
        %v426 = vunpack.c.l.b16 %v378
        %v427 = vunpack.c.l.b16 %v379
        %v428 = vunpack.c.l.b16 %v380
        %v429 = vunpack.c.l.b16 %v381
        %v430 = vunpack.c.l.b16 %v382
        %v431 = vunpack.c.l.b16 %v383
        %v432 = vunpack.c.l.b16 %v384
        %v433 = vunpack.c.l.b16 %v385
        %v434 = vunpack.c.l.b16 %v386
        %v435 = vunpack.c.l.b16 %v387
        %v436 = vunpack.c.l.b16 %v388
        %v437 = vunpack.c.l.b16 %v389
        %v438 = vpack.c.b16 %v423, %v422
        %v439 = vpack.c.b16 %v425, %v424
        %v440 = vpack.c.b16 %v427, %v426
        %v441 = vpack.c.b16 %v429, %v428
        %v442 = vpack.c.b16 %v431, %v430
        %v443 = vpack.c.b16 %v433, %v432
        %v444 = vpack.c.b16 %v435, %v434
        %v445 = vpack.c.b16 %v437, %v436
        %v470 = vunpack.c.l.b16 %v390
        %v471 = vunpack.c.l.b16 %v391
        %v472 = vunpack.c.l.b16 %v392
        %v473 = vunpack.c.l.b16 %v393
        %v474 = vunpack.c.l.b16 %v394
        %v475 = vunpack.c.l.b16 %v395
        %v476 = vunpack.c.l.b16 %v396
        %v477 = vunpack.c.l.b16 %v397
        %v478 = vunpack.c.l.b16 %v398
        %v479 = vunpack.c.l.b16 %v399
        %v480 = vunpack.c.l.b16 %v400
        %v481 = vunpack.c.l.b16 %v401
        %v482 = vunpack.c.l.b16 %v402
        %v483 = vunpack.c.l.b16 %v403
        %v484 = vunpack.c.l.b16 %v404
        %v485 = vunpack.c.l.b16 %v405
        %v486 = vpack.c.b16 %v471, %v470
        %v487 = vpack.c.b16 %v473, %v472
        %v488 = vpack.c.b16 %v475, %v474
        %v489 = vpack.c.b16 %v477, %v476
        %v490 = vpack.c.b16 %v479, %v478
        %v491 = vpack.c.b16 %v481, %v480
        %v492 = vpack.c.b16 %v483, %v482
        %v493 = vpack.c.b16 %v485, %v484
        %502 = vmatprep.subr.bf16.mxu0 0
        %503 = vmatpush1.bf16.msra.mxu0 %v486
        %504 = vmatprep.subr.bf16.mxu0 0
        %505 = vmatpush1.bf16.msra.mxu0 %v487
        %506 = vmatprep.subr.bf16.mxu0 0
        %507 = vmatpush1.bf16.msra.mxu0 %v488
        %508 = vmatprep.subr.bf16.mxu0 0
        %509 = vmatpush1.bf16.msra.mxu0 %v489
        %510 = vmatprep.subr.bf16.mxu0 0
        %511 = vmatpush1.bf16.msra.mxu0 %v490
        %512 = vmatprep.subr.bf16.mxu0 0
        %513 = vmatpush1.bf16.msra.mxu0 %v491
        %514 = vmatprep.subr.bf16.mxu0 0
        %515 = vmatpush1.bf16.msra.mxu0 %v492
        %516 = vmatprep.subr.bf16.mxu0 0
        %517 = vmatpush1.bf16.msra.mxu0 %v493
        %518 = vmatprep.subr.bf16.mxu0 0
        %519 = vmatpush1.bf16.msra.mxu0 0
        %520 = vmatprep.subr.bf16.mxu0 0
        %521 = vmatpush1.bf16.msra.mxu0 0
        %522 = vmatprep.subr.bf16.mxu0 0
        %523 = vmatpush1.bf16.msra.mxu0 0
        %524 = vmatprep.subr.bf16.mxu0 0
        %525 = vmatpush1.bf16.msra.mxu0 0
        %526 = vmatprep.subr.bf16.mxu0 0
        %527 = vmatpush1.bf16.msra.mxu0 0
        %528 = vmatprep.subr.bf16.mxu0 0
        %529 = vmatpush1.bf16.msra.mxu0 0
        %530 = vmatprep.subr.bf16.mxu0 0
        %531 = vmatpush1.bf16.msra.mxu0 0
        %532 = vmatprep.subr.bf16.mxu0 0
        %533 = vmatpush1.bf16.msra.mxu0 0
        %534 = vmatprep.mubr.bf16.mxu0 0
        %535 = vmatmul.mubr.bf16.gmra.mrb[0].mxu0 %v438
        %v536 = vpop.f32.mrb[0].mxu0
        %v537 = vadd.f32 0.0, %v536
        %v538 = vpop.f32.mrb[0].mxu0
        %v539 = vpop.f32.mrb[0].mxu0
        %v540 = vadd.f32 0.0, %v539
        %v541 = vpop.f32.mrb[0].mxu0
        %542 = vmatprep.mubr.bf16.mxu0 0
        %543 = vmatmul.mubr.bf16.gmra.mrb[0].mxu0 %v439
        %v544 = vpop.f32.mrb[0].mxu0
        %v545 = vadd.f32 0.0, %v544
        %v546 = vpop.f32.mrb[0].mxu0
        %v547 = vpop.f32.mrb[0].mxu0
        %v548 = vadd.f32 0.0, %v547
        %v549 = vpop.f32.mrb[0].mxu0
        %550 = vmatprep.mubr.bf16.mxu0 0
        %551 = vmatmul.mubr.bf16.gmra.mrb[0].mxu0 %v440
        %v552 = vpop.f32.mrb[0].mxu0
        %v553 = vadd.f32 0.0, %v552
        %v554 = vpop.f32.mrb[0].mxu0
        %v555 = vpop.f32.mrb[0].mxu0
        %v556 = vadd.f32 0.0, %v555
        %v557 = vpop.f32.mrb[0].mxu0
        %558 = vmatprep.mubr.bf16.mxu0 0
        %559 = vmatmul.mubr.bf16.gmra.mrb[0].mxu0 %v441
        %v560 = vpop.f32.mrb[0].mxu0
        %v561 = vadd.f32 0.0, %v560
        %v562 = vpop.f32.mrb[0].mxu0
        %v563 = vpop.f32.mrb[0].mxu0
        %v564 = vadd.f32 0.0, %v563
        %v565 = vpop.f32.mrb[0].mxu0
        %566 = vmatprep.mubr.bf16.mxu0 0
        %567 = vmatmul.mubr.bf16.gmra.mrb[0].mxu0 %v442
        %v568 = vpop.f32.mrb[0].mxu0
        %v569 = vadd.f32 0.0, %v568
        %v570 = vpop.f32.mrb[0].mxu0
        %v571 = vpop.f32.mrb[0].mxu0
        %v572 = vadd.f32 0.0, %v571
        %v573 = vpop.f32.mrb[0].mxu0
        %574 = vmatprep.mubr.bf16.mxu0 0
        %575 = vmatmul.mubr.bf16.gmra.mrb[0].mxu0 %v443
        %v576 = vpop.f32.mrb[0].mxu0
        %v577 = vadd.f32 0.0, %v576
        %v578 = vpop.f32.mrb[0].mxu0
        %v579 = vpop.f32.mrb[0].mxu0
        %v580 = vadd.f32 0.0, %v579
        %v581 = vpop.f32.mrb[0].mxu0
        %582 = vmatprep.mubr.bf16.mxu0 0
        %583 = vmatmul.mubr.bf16.gmra.mrb[0].mxu0 %v444
        %v584 = vpop.f32.mrb[0].mxu0
        %v585 = vadd.f32 0.0, %v584
        %v586 = vpop.f32.mrb[0].mxu0
        %v587 = vpop.f32.mrb[0].mxu0
        %v588 = vadd.f32 0.0, %v587
        %v589 = vpop.f32.mrb[0].mxu0
        %590 = vmatprep.mubr.bf16.mxu0 0
        %591 = vmatmul.mubr.bf16.gmra.mrb[0].mxu0 %v445
        %v592 = vpop.f32.mrb[0].mxu0
        %v593 = vadd.f32 0.0, %v592
        %v594 = vpop.f32.mrb[0].mxu0
        %v595 = vpop.f32.mrb[0].mxu0
        %v596 = vadd.f32 0.0, %v595
        %v597 = vpop.f32.mrb[0].mxu0
        %598 = vdwg.mxu0
        %v600 = vlaneseq
        %v601 = vshrl.u32 %v600, 7
        %v602 = vsub.s32 0, %v601
        %v603 = vrot.slane %v373, %v602
        %v605 = vadd.f32 %v603, %v537
        %v606 = vadd.f32 %v603, %v540
        %v607 = vadd.f32 %v603, %v545
        %v608 = vadd.f32 %v603, %v548
        %v609 = vadd.f32 %v603, %v553
        %v610 = vadd.f32 %v603, %v556
        %v611 = vadd.f32 %v603, %v561
        %v612 = vadd.f32 %v603, %v564
        %v613 = vadd.f32 %v603, %v569
        %v614 = vadd.f32 %v603, %v572
        %v615 = vadd.f32 %v603, %v577
        %v616 = vadd.f32 %v603, %v580
        %v617 = vadd.f32 %v603, %v585
        %v618 = vadd.f32 %v603, %v588
        %v619 = vadd.f32 %v603, %v593
        %v620 = vadd.f32 %v603, %v596
        %621 = vst [vmem:[#allocation3] sm:$0xff] %v605
        %622 = vst [vmem:[#allocation3 + $0x8] sm:$0xff] %v606
        %623 = vst [vmem:[#allocation3 + $0x10] sm:$0xff] %v607
        %624 = vst [vmem:[#allocation3 + $0x18] sm:$0xff] %v608
        %625 = vst [vmem:[#allocation3 + $0x20] sm:$0xff] %v609
        %626 = vst [vmem:[#allocation3 + $0x28] sm:$0xff] %v610
        %627 = vst [vmem:[#allocation3 + $0x30] sm:$0xff] %v611
        %628 = vst [vmem:[#allocation3 + $0x38] sm:$0xff] %v612
        %629 = vst [vmem:[#allocation3 + $0x40] sm:$0xff] %v613
        %630 = vst [vmem:[#allocation3 + $0x48] sm:$0xff] %v614
        %631 = vst [vmem:[#allocation3 + $0x50] sm:$0xff] %v615
        %632 = vst [vmem:[#allocation3 + $0x58] sm:$0xff] %v616
        %633 = vst [vmem:[#allocation3 + $0x60] sm:$0xff] %v617
        %634 = vst [vmem:[#allocation3 + $0x68] sm:$0xff] %v618
        %635 = vst [vmem:[#allocation3 + $0x70] sm:$0xff] %v619
        %636 = vst [vmem:[#allocation3 + $0x78] sm:$0xff] %v620
      $region48: #{gnn_encoder_forward.7} parent=43 // pred_fallthru
        _
      %v637 = vld [vmem:[#allocation2] sm:$0xff]
      %v638 = vld [vmem:[#allocation2 + $0x8] sm:$0xff]
      %v639 = vld [vmem:[#allocation2 + $0x10] sm:$0xff]
      %v640 = vld [vmem:[#allocation2 + $0x18] sm:$0xff]
      %v641 = vld [vmem:[#allocation2 + $0x20] sm:$0xff]
      %v642 = vld [vmem:[#allocation2 + $0x28] sm:$0xff]
      %v643 = vld [vmem:[#allocation2 + $0x30] sm:$0xff]
      %v644 = vld [vmem:[#allocation2 + $0x38] sm:$0xff]
      %v645 = vld [vmem:[#allocation2 + $0x40] sm:$0xff]
      %v646 = vld [vmem:[#allocation2 + $0x48] sm:$0xff]
      %v647 = vld [vmem:[#allocation2 + $0x50] sm:$0xff]
      %v648 = vld [vmem:[#allocation2 + $0x58] sm:$0xff]
      %v649 = vld [vmem:[#allocation2 + $0x60] sm:$0xff]
      %v650 = vld [vmem:[#allocation2 + $0x68] sm:$0xff]
      %v651 = vld [vmem:[#allocation2 + $0x70] sm:$0xff]
      %v652 = vld [vmem:[#allocation2 + $0x78] sm:$0xff]
      %v653 = vld [vmem:[%s325] sm:$0xff]
      %v654 = vld [vmem:[%s325 + $0x8] sm:$0xff]
      %v655 = vld [vmem:[%s325 + $0x10] sm:$0xff]
      %v656 = vld [vmem:[%s325 + $0x18] sm:$0xff]
      %v657 = vld [vmem:[%s325 + $0x20] sm:$0xff]
      %v658 = vld [vmem:[%s325 + $0x28] sm:$0xff]
      %v659 = vld [vmem:[%s325 + $0x30] sm:$0xff]
      %v660 = vld [vmem:[%s325 + $0x38] sm:$0xff]
      %v661 = vunpack.c.l.s8.bf16 %v653
      %v662 = vunpack.c.l.s8.bf16 %v654
      %v663 = vunpack.c.h.s8.bf16 %v653
      %v664 = vunpack.c.h.s8.bf16 %v654
      %v665 = vunpack.c.l.s8.bf16 %v655
      %v666 = vunpack.c.l.s8.bf16 %v656
      %v667 = vunpack.c.h.s8.bf16 %v655
      %v668 = vunpack.c.h.s8.bf16 %v656
      %v669 = vunpack.c.l.s8.bf16 %v657
      %v670 = vunpack.c.l.s8.bf16 %v658
      %v671 = vunpack.c.h.s8.bf16 %v657
      %v672 = vunpack.c.h.s8.bf16 %v658
      %v673 = vunpack.c.l.s8.bf16 %v659
      %v674 = vunpack.c.l.s8.bf16 %v660
      %v675 = vunpack.c.h.s8.bf16 %v659
      %v676 = vunpack.c.h.s8.bf16 %v660
      %v677 = vld [vmem:[%s332] sm:$0xf]
      %v678 = vld [vmem:[%s332 + $0x4] sm:$0xf]
      %v679 = vld [vmem:[%s332 + $0x8] sm:$0xf]
      %v680 = vld [vmem:[%s332 + $0xc] sm:$0xf]
      %v681 = vld [vmem:[%s332 + $0x10] sm:$0xf]
      %v682 = vld [vmem:[%s332 + $0x14] sm:$0xf]
      %v683 = vld [vmem:[%s332 + $0x18] sm:$0xf]
      %v684 = vld [vmem:[%s332 + $0x1c] sm:$0xf]
      %v685 = vld [vmem:[%s332 + $0x20] sm:$0xf]
      %v686 = vld [vmem:[%s332 + $0x24] sm:$0xf]
      %v687 = vld [vmem:[%s332 + $0x28] sm:$0xf]
      %v688 = vld [vmem:[%s332 + $0x2c] sm:$0xf]
      %v689 = vld [vmem:[%s332 + $0x30] sm:$0xf]
      %v690 = vld [vmem:[%s332 + $0x34] sm:$0xf]
      %v691 = vld [vmem:[%s332 + $0x38] sm:$0xf]
      %v692 = vld [vmem:[%s332 + $0x3c] sm:$0xf]
      %v693 = vld [vmem:[%s332 + $0x40] sm:$0xf]
      %v694 = vld [vmem:[%s332 + $0x44] sm:$0xf]
      %v695 = vld [vmem:[%s332 + $0x48] sm:$0xf]
      %v696 = vld [vmem:[%s332 + $0x4c] sm:$0xf]
      %v697 = vld [vmem:[%s332 + $0x50] sm:$0xf]
      %v698 = vld [vmem:[%s332 + $0x54] sm:$0xf]
      %v699 = vld [vmem:[%s332 + $0x58] sm:$0xf]
      %v700 = vld [vmem:[%s332 + $0x5c] sm:$0xf]
      %v701 = vld [vmem:[%s332 + $0x60] sm:$0xf]
      %v702 = vld [vmem:[%s332 + $0x64] sm:$0xf]
      %v703 = vld [vmem:[%s332 + $0x68] sm:$0xf]
      %v704 = vld [vmem:[%s332 + $0x6c] sm:$0xf]
      %v705 = vld [vmem:[%s332 + $0x70] sm:$0xf]
      %v706 = vld [vmem:[%s332 + $0x74] sm:$0xf]
      %v707 = vld [vmem:[%s332 + $0x78] sm:$0xf]
      %v708 = vld [vmem:[%s332 + $0x7c] sm:$0xf]
      %v741 = vunpack.c.l.b16 %v677
      %v742 = vunpack.c.l.b16 %v678
      %v743 = vunpack.c.l.b16 %v679
      %v744 = vunpack.c.l.b16 %v680
      %v745 = vunpack.c.l.b16 %v681
      %v746 = vunpack.c.l.b16 %v682
      %v747 = vunpack.c.l.b16 %v683
      %v748 = vunpack.c.l.b16 %v684
      %v749 = vunpack.c.l.b16 %v685
      %v750 = vunpack.c.l.b16 %v686
      %v751 = vunpack.c.l.b16 %v687
      %v752 = vunpack.c.l.b16 %v688
      %v753 = vunpack.c.l.b16 %v689
      %v754 = vunpack.c.l.b16 %v690
      %v755 = vunpack.c.l.b16 %v691
      %v756 = vunpack.c.l.b16 %v692
      %v757 = vunpack.c.l.b16 %v693
      %v758 = vunpack.c.l.b16 %v694
      %v759 = vunpack.c.l.b16 %v695
      %v760 = vunpack.c.l.b16 %v696
      %v761 = vunpack.c.l.b16 %v697
      %v762 = vunpack.c.l.b16 %v698
      %v763 = vunpack.c.l.b16 %v699
      %v764 = vunpack.c.l.b16 %v700
      %v765 = vunpack.c.l.b16 %v701
      %v766 = vunpack.c.l.b16 %v702
      %v767 = vunpack.c.l.b16 %v703
      %v768 = vunpack.c.l.b16 %v704
      %v769 = vunpack.c.l.b16 %v705
      %v770 = vunpack.c.l.b16 %v706
      %v771 = vunpack.c.l.b16 %v707
      %v772 = vunpack.c.l.b16 %v708
      %v773 = vpack.c.b16 %v742, %v741
      %v774 = vpack.c.b16 %v744, %v743
      %v775 = vpack.c.b16 %v746, %v745
      %v776 = vpack.c.b16 %v748, %v747
      %v777 = vpack.c.b16 %v750, %v749
      %v778 = vpack.c.b16 %v752, %v751
      %v779 = vpack.c.b16 %v754, %v753
      %v780 = vpack.c.b16 %v756, %v755
      %v781 = vpack.c.b16 %v758, %v757
      %v782 = vpack.c.b16 %v760, %v759
      %v783 = vpack.c.b16 %v762, %v761
      %v784 = vpack.c.b16 %v764, %v763
      %v785 = vpack.c.b16 %v766, %v765
      %v786 = vpack.c.b16 %v768, %v767
      %v787 = vpack.c.b16 %v770, %v769
      %v788 = vpack.c.b16 %v772, %v771
      %805 = vmatprep.subr.bf16.mxu0 0
      %806 = vmatpush1.bf16.msra.mxu0 %v773
      %807 = vmatprep.subr.bf16.mxu0 0
      %808 = vmatpush1.bf16.msra.mxu0 %v774
      %809 = vmatprep.subr.bf16.mxu0 0
      %810 = vmatpush1.bf16.msra.mxu0 %v775
      %811 = vmatprep.subr.bf16.mxu0 0
      %812 = vmatpush1.bf16.msra.mxu0 %v776
      %813 = vmatprep.subr.bf16.mxu0 0
      %814 = vmatpush1.bf16.msra.mxu0 %v777
      %815 = vmatprep.subr.bf16.mxu0 0
      %816 = vmatpush1.bf16.msra.mxu0 %v778
      %817 = vmatprep.subr.bf16.mxu0 0
      %818 = vmatpush1.bf16.msra.mxu0 %v779
      %819 = vmatprep.subr.bf16.mxu0 0
      %820 = vmatpush1.bf16.msra.mxu0 %v780
      %821 = vmatprep.subr.bf16.mxu0 0
      %822 = vmatpush1.bf16.msra.mxu0 %v781
      %823 = vmatprep.subr.bf16.mxu0 0
      %824 = vmatpush1.bf16.msra.mxu0 %v782
      %825 = vmatprep.subr.bf16.mxu0 0
      %826 = vmatpush1.bf16.msra.mxu0 %v783
      %827 = vmatprep.subr.bf16.mxu0 0
      %828 = vmatpush1.bf16.msra.mxu0 %v784
      %829 = vmatprep.subr.bf16.mxu0 0
      %830 = vmatpush1.bf16.msra.mxu0 %v785
      %831 = vmatprep.subr.bf16.mxu0 0
      %832 = vmatpush1.bf16.msra.mxu0 %v786
      %833 = vmatprep.subr.bf16.mxu0 0
      %834 = vmatpush1.bf16.msra.mxu0 %v787
      %835 = vmatprep.subr.bf16.mxu0 0
      %836 = vmatpush1.bf16.msra.mxu0 %v788
      %837 = vmatprep.mubr.bf16.mxu0 %v662
      %838 = vmatmul.mubr.bf16.gmra.mrb[0].mxu0 %v661
      %v839 = vpop.f32.mrb[0].mxu0
      %v840 = vadd.f32 0.0, %v839
      %v841 = vpop.f32.mrb[0].mxu0
      %v842 = vpop.f32.mrb[0].mxu0
      %v843 = vadd.f32 0.0, %v842
      %v844 = vpop.f32.mrb[0].mxu0
      %845 = vmatprep.mubr.bf16.mxu0 %v664
      %846 = vmatmul.mubr.bf16.gmra.mrb[0].mxu0 %v663
      %v847 = vpop.f32.mrb[0].mxu0
      %v848 = vadd.f32 0.0, %v847
      %v849 = vpop.f32.mrb[0].mxu0
      %v850 = vpop.f32.mrb[0].mxu0
      %v851 = vadd.f32 0.0, %v850
      %v852 = vpop.f32.mrb[0].mxu0
      %853 = vmatprep.mubr.bf16.mxu0 %v666
      %854 = vmatmul.mubr.bf16.gmra.mrb[0].mxu0 %v665
      %v855 = vpop.f32.mrb[0].mxu0
      %v856 = vadd.f32 0.0, %v855
      %v857 = vpop.f32.mrb[0].mxu0
      %v858 = vpop.f32.mrb[0].mxu0
      %v859 = vadd.f32 0.0, %v858
      %v860 = vpop.f32.mrb[0].mxu0
      %861 = vmatprep.mubr.bf16.mxu0 %v668
      %862 = vmatmul.mubr.bf16.gmra.mrb[0].mxu0 %v667
      %v863 = vpop.f32.mrb[0].mxu0
      %v864 = vadd.f32 0.0, %v863
      %v865 = vpop.f32.mrb[0].mxu0
      %v866 = vpop.f32.mrb[0].mxu0
      %v867 = vadd.f32 0.0, %v866
      %v868 = vpop.f32.mrb[0].mxu0
      %869 = vmatprep.mubr.bf16.mxu0 %v670
      %870 = vmatmul.mubr.bf16.gmra.mrb[0].mxu0 %v669
      %v871 = vpop.f32.mrb[0].mxu0
      %v872 = vadd.f32 0.0, %v871
      %v873 = vpop.f32.mrb[0].mxu0
      %v874 = vpop.f32.mrb[0].mxu0
      %v875 = vadd.f32 0.0, %v874
      %v876 = vpop.f32.mrb[0].mxu0
      %877 = vmatprep.mubr.bf16.mxu0 %v672
      %878 = vmatmul.mubr.bf16.gmra.mrb[0].mxu0 %v671
      %v879 = vpop.f32.mrb[0].mxu0
      %v880 = vadd.f32 0.0, %v879
      %v881 = vpop.f32.mrb[0].mxu0
      %v882 = vpop.f32.mrb[0].mxu0
      %v883 = vadd.f32 0.0, %v882
      %v884 = vpop.f32.mrb[0].mxu0
      %885 = vmatprep.mubr.bf16.mxu0 %v674
      %886 = vmatmul.mubr.bf16.gmra.mrb[0].mxu0 %v673
      %v887 = vpop.f32.mrb[0].mxu0
      %v888 = vadd.f32 0.0, %v887
      %v889 = vpop.f32.mrb[0].mxu0
      %v890 = vpop.f32.mrb[0].mxu0
      %v891 = vadd.f32 0.0, %v890
      %v892 = vpop.f32.mrb[0].mxu0
      %893 = vmatprep.mubr.bf16.mxu0 %v676
      %894 = vmatmul.mubr.bf16.gmra.mrb[0].mxu0 %v675
      %v895 = vpop.f32.mrb[0].mxu0
      %v896 = vadd.f32 0.0, %v895
      %v897 = vpop.f32.mrb[0].mxu0
      %v898 = vpop.f32.mrb[0].mxu0
      %v899 = vadd.f32 0.0, %v898
      %v900 = vpop.f32.mrb[0].mxu0
      %901 = vdwg.mxu0
      %v902 = vadd.f32 %v637, %v840
      %v903 = vadd.f32 %v638, %v843
      %v904 = vadd.f32 %v639, %v848
      %v905 = vadd.f32 %v640, %v851
      %v906 = vadd.f32 %v641, %v856
      %v907 = vadd.f32 %v642, %v859
      %v908 = vadd.f32 %v643, %v864
      %v909 = vadd.f32 %v644, %v867
      %v910 = vadd.f32 %v645, %v872
      %v911 = vadd.f32 %v646, %v875
      %v912 = vadd.f32 %v647, %v880
      %v913 = vadd.f32 %v648, %v883
      %v914 = vadd.f32 %v649, %v888
      %v915 = vadd.f32 %v650, %v891
      %v916 = vadd.f32 %v651, %v896
      %v917 = vadd.f32 %v652, %v899
      %918 = vst [vmem:[#allocation2] sm:$0xff] %v902
      %919 = vst [vmem:[#allocation2 + $0x8] sm:$0xff] %v903
      %920 = vst [vmem:[#allocation2 + $0x10] sm:$0xff] %v904
      %921 = vst [vmem:[#allocation2 + $0x18] sm:$0xff] %v905
      %922 = vst [vmem:[#allocation2 + $0x20] sm:$0xff] %v906
      %923 = vst [vmem:[#allocation2 + $0x28] sm:$0xff] %v907
      %924 = vst [vmem:[#allocation2 + $0x30] sm:$0xff] %v908
      %925 = vst [vmem:[#allocation2 + $0x38] sm:$0xff] %v909
      %926 = vst [vmem:[#allocation2 + $0x40] sm:$0xff] %v910
      %927 = vst [vmem:[#allocation2 + $0x48] sm:$0xff] %v911
      %928 = vst [vmem:[#allocation2 + $0x50] sm:$0xff] %v912
      %929 = vst [vmem:[#allocation2 + $0x58] sm:$0xff] %v913
      %930 = vst [vmem:[#allocation2 + $0x60] sm:$0xff] %v914
      %931 = vst [vmem:[#allocation2 + $0x68] sm:$0xff] %v915
      %932 = vst [vmem:[#allocation2 + $0x70] sm:$0xff] %v916
      %933 = vst [vmem:[#allocation2 + $0x78] sm:$0xff] %v917
      // Predicated region
      $region49: #{gnn_encoder_forward.7} parent=43 // pred_check
        %p934 = pneg %p353
      $region50: #{gnn_encoder_forward.7} parent=43 // pred_check_branch
        %936 = sbr.rel (%p934) target = $region52
      $region51: #{gnn_encoder_forward.7} parent=43 // pred_region
        %v937 = vld [vmem:[#allocation2] sm:$0xff]
        %v938 = vld [vmem:[#allocation2 + $0x8] sm:$0xff]
        %v939 = vld [vmem:[#allocation2 + $0x10] sm:$0xff]
        %v940 = vld [vmem:[#allocation2 + $0x18] sm:$0xff]
        %v941 = vld [vmem:[#allocation2 + $0x20] sm:$0xff]
        %v942 = vld [vmem:[#allocation2 + $0x28] sm:$0xff]
        %v943 = vld [vmem:[#allocation2 + $0x30] sm:$0xff]
        %v944 = vld [vmem:[#allocation2 + $0x38] sm:$0xff]
        %v945 = vld [vmem:[#allocation2 + $0x40] sm:$0xff]
        %v946 = vld [vmem:[#allocation2 + $0x48] sm:$0xff]
        %v947 = vld [vmem:[#allocation2 + $0x50] sm:$0xff]
        %v948 = vld [vmem:[#allocation2 + $0x58] sm:$0xff]
        %v949 = vld [vmem:[#allocation2 + $0x60] sm:$0xff]
        %v950 = vld [vmem:[#allocation2 + $0x68] sm:$0xff]
        %v951 = vld [vmem:[#allocation2 + $0x70] sm:$0xff]
        %v952 = vld [vmem:[#allocation2 + $0x78] sm:$0xff]
        %v953 = vld [vmem:[%s344] sm:$0xff]
        %v954 = vld [vmem:[%s344 + $0x8] sm:$0xff]
        %v955 = vld [vmem:[%s344 + $0x10] sm:$0xff]
        %v956 = vld [vmem:[%s344 + $0x18] sm:$0xff]
        %v957 = vld [vmem:[%s344 + $0x20] sm:$0xff]
        %v958 = vld [vmem:[%s344 + $0x28] sm:$0xff]
        %v959 = vld [vmem:[%s344 + $0x30] sm:$0xff]
        %v960 = vld [vmem:[%s344 + $0x38] sm:$0xff]
        %v961 = vld [vmem:[%s344 + $0x40] sm:$0xff]
        %v962 = vld [vmem:[%s344 + $0x48] sm:$0xff]
        %v963 = vld [vmem:[%s344 + $0x50] sm:$0xff]
        %v964 = vld [vmem:[%s344 + $0x58] sm:$0xff]
        %v965 = vld [vmem:[%s344 + $0x60] sm:$0xff]
        %v966 = vld [vmem:[%s344 + $0x68] sm:$0xff]
        %v967 = vld [vmem:[%s344 + $0x70] sm:$0xff]
        %v968 = vld [vmem:[%s344 + $0x78] sm:$0xff]
        %970 = vset.pattern.permute.xlu0 0
        %971 = vperm.xlu0 %970, %v953
        %v972 = vpop.permute.xlu0 %971
        %975 = vset.pattern.permute.xlu0 0
        %976 = vperm.xlu0 %975, %v954
        %v977 = vpop.permute.xlu0 %976
        %980 = vset.pattern.permute.xlu0 0
        %981 = vperm.xlu0 %980, %v955
        %v982 = vpop.permute.xlu0 %981
        %985 = vset.pattern.permute.xlu0 0
        %986 = vperm.xlu0 %985, %v956
        %v987 = vpop.permute.xlu0 %986
        %990 = vset.pattern.permute.xlu0 0
        %991 = vperm.xlu0 %990, %v957
        %v992 = vpop.permute.xlu0 %991
        %995 = vset.pattern.permute.xlu0 0
        %996 = vperm.xlu0 %995, %v958
        %v997 = vpop.permute.xlu0 %996
        %1000 = vset.pattern.permute.xlu0 0
        %1001 = vperm.xlu0 %1000, %v959
        %v1002 = vpop.permute.xlu0 %1001
        %1005 = vset.pattern.permute.xlu0 0
        %1006 = vperm.xlu0 %1005, %v960
        %v1007 = vpop.permute.xlu0 %1006
        %1010 = vset.pattern.permute.xlu0 0
        %1011 = vperm.xlu0 %1010, %v961
        %v1012 = vpop.permute.xlu0 %1011
        %1015 = vset.pattern.permute.xlu0 0
        %1016 = vperm.xlu0 %1015, %v962
        %v1017 = vpop.permute.xlu0 %1016
        %1020 = vset.pattern.permute.xlu0 0
        %1021 = vperm.xlu0 %1020, %v963
        %v1022 = vpop.permute.xlu0 %1021
        %1025 = vset.pattern.permute.xlu0 0
        %1026 = vperm.xlu0 %1025, %v964
        %v1027 = vpop.permute.xlu0 %1026
        %1030 = vset.pattern.permute.xlu0 0
        %1031 = vperm.xlu0 %1030, %v965
        %v1032 = vpop.permute.xlu0 %1031
        %1035 = vset.pattern.permute.xlu0 0
        %1036 = vperm.xlu0 %1035, %v966
        %v1037 = vpop.permute.xlu0 %1036
        %1040 = vset.pattern.permute.xlu0 0
        %1041 = vperm.xlu0 %1040, %v967
        %v1042 = vpop.permute.xlu0 %1041
        %1045 = vset.pattern.permute.xlu0 0
        %1046 = vperm.xlu0 %1045, %v968
        %v1047 = vpop.permute.xlu0 %1046
        %v1049 = vmul.f32 %v937, %v972
        %v1050 = vmul.f32 %v938, %v977
        %v1051 = vmul.f32 %v939, %v982
        %v1052 = vmul.f32 %v940, %v987
        %v1053 = vmul.f32 %v941, %v992
        %v1054 = vmul.f32 %v942, %v997
        %v1055 = vmul.f32 %v943, %v1002
        %v1056 = vmul.f32 %v944, %v1007
        %v1057 = vmul.f32 %v945, %v1012
        %v1058 = vmul.f32 %v946, %v1017
        %v1059 = vmul.f32 %v947, %v1022
        %v1060 = vmul.f32 %v948, %v1027
        %v1061 = vmul.f32 %v949, %v1032
        %v1062 = vmul.f32 %v950, %v1037
        %v1063 = vmul.f32 %v951, %v1042
        %v1064 = vmul.f32 %v952, %v1047
        %v1065 = vld [vmem:[#allocation3] sm:$0xff]
        %v1066 = vld [vmem:[#allocation3 + $0x8] sm:$0xff]
        %v1067 = vld [vmem:[#allocation3 + $0x10] sm:$0xff]
        %v1068 = vld [vmem:[#allocation3 + $0x18] sm:$0xff]
        %v1069 = vld [vmem:[#allocation3 + $0x20] sm:$0xff]
        %v1070 = vld [vmem:[#allocation3 + $0x28] sm:$0xff]
        %v1071 = vld [vmem:[#allocation3 + $0x30] sm:$0xff]
        %v1072 = vld [vmem:[#allocation3 + $0x38] sm:$0xff]
        %v1073 = vld [vmem:[#allocation3 + $0x40] sm:$0xff]
        %v1074 = vld [vmem:[#allocation3 + $0x48] sm:$0xff]
        %v1075 = vld [vmem:[#allocation3 + $0x50] sm:$0xff]
        %v1076 = vld [vmem:[#allocation3 + $0x58] sm:$0xff]
        %v1077 = vld [vmem:[#allocation3 + $0x60] sm:$0xff]
        %v1078 = vld [vmem:[#allocation3 + $0x68] sm:$0xff]
        %v1079 = vld [vmem:[#allocation3 + $0x70] sm:$0xff]
        %v1080 = vld [vmem:[#allocation3 + $0x78] sm:$0xff]
        %v1081 = vadd.f32 %v1049, %v1065
        %v1082 = vadd.f32 %v1050, %v1066
        %v1083 = vadd.f32 %v1051, %v1067
        %v1084 = vadd.f32 %v1052, %v1068
        %v1085 = vadd.f32 %v1053, %v1069
        %v1086 = vadd.f32 %v1054, %v1070
        %v1087 = vadd.f32 %v1055, %v1071
        %v1088 = vadd.f32 %v1056, %v1072
        %v1089 = vadd.f32 %v1057, %v1073
        %v1090 = vadd.f32 %v1058, %v1074
        %v1091 = vadd.f32 %v1059, %v1075
        %v1092 = vadd.f32 %v1060, %v1076
        %v1093 = vadd.f32 %v1061, %v1077
        %v1094 = vadd.f32 %v1062, %v1078
        %v1095 = vadd.f32 %v1063, %v1079
        %v1096 = vadd.f32 %v1064, %v1080
        %v1097 = vmul.f32 %v1081, %v1081
        %v1098 = vmul.f32 %v1082, %v1082
        %v1099 = vmul.f32 %v1083, %v1083
        %v1100 = vmul.f32 %v1084, %v1084
        %v1101 = vmul.f32 %v1085, %v1085
        %v1102 = vmul.f32 %v1086, %v1086
        %v1103 = vmul.f32 %v1087, %v1087
        %v1104 = vmul.f32 %v1088, %v1088
        %v1105 = vmul.f32 %v1089, %v1089
        %v1106 = vmul.f32 %v1090, %v1090
        %v1107 = vmul.f32 %v1091, %v1091
        %v1108 = vmul.f32 %v1092, %v1092
        %v1109 = vmul.f32 %v1093, %v1093
        %v1110 = vmul.f32 %v1094, %v1094
        %v1111 = vmul.f32 %v1095, %v1095
        %v1112 = vmul.f32 %v1096, %v1096
        %1113 = vadd.xlane.f32.xlu0 %v1097
        %v1114 = vpop.xlane.xlu0 %1113
        %1115 = vadd.xlane.f32.xlu0 %v1098
        %v1116 = vpop.xlane.xlu0 %1115
        %1117 = vadd.xlane.f32.xlu0 %v1099
        %v1118 = vpop.xlane.xlu0 %1117
        %1119 = vadd.xlane.f32.xlu0 %v1100
        %v1120 = vpop.xlane.xlu0 %1119
        %1121 = vadd.xlane.f32.xlu0 %v1101
        %v1122 = vpop.xlane.xlu0 %1121
        %1123 = vadd.xlane.f32.xlu0 %v1102
        %v1124 = vpop.xlane.xlu0 %1123
        %1125 = vadd.xlane.f32.xlu0 %v1103
        %v1126 = vpop.xlane.xlu0 %1125
        %1127 = vadd.xlane.f32.xlu0 %v1104
        %v1128 = vpop.xlane.xlu0 %1127
        %1129 = vadd.xlane.f32.xlu0 %v1105
        %v1130 = vpop.xlane.xlu0 %1129
        %1131 = vadd.xlane.f32.xlu0 %v1106
        %v1132 = vpop.xlane.xlu0 %1131
        %1133 = vadd.xlane.f32.xlu0 %v1107
        %v1134 = vpop.xlane.xlu0 %1133
        %1135 = vadd.xlane.f32.xlu0 %v1108
        %v1136 = vpop.xlane.xlu0 %1135
        %1137 = vadd.xlane.f32.xlu0 %v1109
        %v1138 = vpop.xlane.xlu0 %1137
        %1139 = vadd.xlane.f32.xlu0 %v1110
        %v1140 = vpop.xlane.xlu0 %1139
        %1141 = vadd.xlane.f32.xlu0 %v1111
        %v1142 = vpop.xlane.xlu0 %1141
        %1143 = vadd.xlane.f32.xlu0 %v1112
        %v1144 = vpop.xlane.xlu0 %1143
        %v1145 = vmax.f32 %v1114, 1e-24
        %v1146 = vmax.f32 %v1116, 1e-24
        %v1147 = vmax.f32 %v1118, 1e-24
        %v1148 = vmax.f32 %v1120, 1e-24
        %v1149 = vmax.f32 %v1122, 1e-24
        %v1150 = vmax.f32 %v1124, 1e-24
        %v1151 = vmax.f32 %v1126, 1e-24
        %v1152 = vmax.f32 %v1128, 1e-24
        %v1153 = vmax.f32 %v1130, 1e-24
        %v1154 = vmax.f32 %v1132, 1e-24
        %v1155 = vmax.f32 %v1134, 1e-24
        %v1156 = vmax.f32 %v1136, 1e-24
        %v1157 = vmax.f32 %v1138, 1e-24
        %v1158 = vmax.f32 %v1140, 1e-24
        %v1159 = vmax.f32 %v1142, 1e-24
        %v1160 = vmax.f32 %v1144, 1e-24
        %v1161 = vrsqrt.pop %v1145
        %v1162 = vrsqrt.pop %v1146
        %v1163 = vrsqrt.pop %v1147
        %v1164 = vrsqrt.pop %v1148
        %v1165 = vrsqrt.pop %v1149
        %v1166 = vrsqrt.pop %v1150
        %v1167 = vrsqrt.pop %v1151
        %v1168 = vrsqrt.pop %v1152
        %v1169 = vrsqrt.pop %v1153
        %v1170 = vrsqrt.pop %v1154
        %v1171 = vrsqrt.pop %v1155
        %v1172 = vrsqrt.pop %v1156
        %v1173 = vrsqrt.pop %v1157
        %v1174 = vrsqrt.pop %v1158
        %v1175 = vrsqrt.pop %v1159
        %v1176 = vrsqrt.pop %v1160
        %v1177 = vmul.f32 %v1081, %v1161
        %v1178 = vmul.f32 %v1082, %v1162
        %v1179 = vmul.f32 %v1083, %v1163
        %v1180 = vmul.f32 %v1084, %v1164
        %v1181 = vmul.f32 %v1085, %v1165
        %v1182 = vmul.f32 %v1086, %v1166
        %v1183 = vmul.f32 %v1087, %v1167
        %v1184 = vmul.f32 %v1088, %v1168
        %v1185 = vmul.f32 %v1089, %v1169
        %v1186 = vmul.f32 %v1090, %v1170
        %v1187 = vmul.f32 %v1091, %v1171
        %v1188 = vmul.f32 %v1092, %v1172
        %v1189 = vmul.f32 %v1093, %v1173
        %v1190 = vmul.f32 %v1094, %v1174
        %v1191 = vmul.f32 %v1095, %v1175
        %v1192 = vmul.f32 %v1096, %v1176
        %1193 = vst [vmem:[%s350] sm:$0xff] %v1177
        %1194 = vst [vmem:[%s350 + $0x8] sm:$0xff] %v1178
        %1195 = vst [vmem:[%s350 + $0x10] sm:$0xff] %v1179
        %1196 = vst [vmem:[%s350 + $0x18] sm:$0xff] %v1180
        %1197 = vst [vmem:[%s350 + $0x20] sm:$0xff] %v1181
        %1198 = vst [vmem:[%s350 + $0x28] sm:$0xff] %v1182
        %1199 = vst [vmem:[%s350 + $0x30] sm:$0xff] %v1183
        %1200 = vst [vmem:[%s350 + $0x38] sm:$0xff] %v1184
        %1201 = vst [vmem:[%s350 + $0x40] sm:$0xff] %v1185
        %1202 = vst [vmem:[%s350 + $0x48] sm:$0xff] %v1186
        %1203 = vst [vmem:[%s350 + $0x50] sm:$0xff] %v1187
        %1204 = vst [vmem:[%s350 + $0x58] sm:$0xff] %v1188
        %1205 = vst [vmem:[%s350 + $0x60] sm:$0xff] %v1189
        %1206 = vst [vmem:[%s350 + $0x68] sm:$0xff] %v1190
        %1207 = vst [vmem:[%s350 + $0x70] sm:$0xff] %v1191
        %1208 = vst [vmem:[%s350 + $0x78] sm:$0xff] %v1192
      $region52: #{gnn_encoder_forward.7} parent=43 // pred_fallthru
        _
      %s1209 = smul.u32 16, %s21
      %p1210 = scmp.lt.s32.totalorder %s1209, 31
      %s1211 = scalar_select %p1210, %s1209, 31
      %s1212 = smul.addr %s1211, 8
      %s1213 = scalar_lea.vmem %s6, %s1212
      // Predicated region
      $region53: #{gnn_encoder_forward.7} parent=43 // pred_check
        %p1214 = pneg %p195
      $region54: #{gnn_encoder_forward.7} parent=43 // pred_check_branch
        %1216 = sbr.rel (%p1214) target = $region56
      $region55: #{gnn_encoder_forward.7} parent=43 // pred_region
        %s1217 = smul.u32 16, %s21
      $region56: #{gnn_encoder_forward.7} parent=43 // pred_fallthru
        _
    $region44: #{gnn_encoder_forward.7} parent=5 // pred_fallthru
      _
    %p1218 = scmp.le.s32.totalorder 2, %s12
    // Predicated region
    $region57: #{gnn_encoder_forward.7} parent=5 // pred_check
      %p1219 = pneg %p1218
    $region58: #{gnn_encoder_forward.7} parent=5 // pred_check_branch
      %1221 = sbr.rel (%p1219) target = $region60
    $region59: #{gnn_encoder_forward.7} parent=5 // pred_region
      %s1222 = ssub.s32 %s12, 2
      // Predicated region
      $region61: #{gnn_encoder_forward.7} parent=59 // pred_check
        %p1223 = pneg %p201
      $region62: #{gnn_encoder_forward.7} parent=59 // pred_check_branch
        %1225 = sbr.rel (%p1223) target = $region64
      $region63: #{gnn_encoder_forward.7} parent=59 // pred_region
        %s1226 = smul.u32 16, %s23
        %p1227 = scmp.lt.s32.totalorder %s1226, 31
        %s1228 = scalar_select %p1227, %s1226, 31
        %s1229 = smul.addr %s1228, 8
        %s1230 = scalar_lea.vmem %s6, %s1229
      $region64: #{gnn_encoder_forward.7} parent=59 // pred_fallthru
        _
    $region60: #{gnn_encoder_forward.7} parent=5 // pred_fallthru
      _
  $region6: #{gnn_encoder_forward.7} parent=0 // loop_footer
    %s16 = sadd.s32 1, %s12
  $region7: #{gnn_encoder_forward.7} parent=0 // loop_footer_branch
    %11 = sbr.rel target = $region3
  $region8: #{gnn_encoder_forward.7} parent=0 // loop_exit
    _

</llo_original>
